<compile_context>
chip_gen: v5e
topology: v5e:2x2
jax: 0.10.0
libtpu: 0.0.40
codegen_flags: <defaults>
</compile_context>

<pallas_src>
import functools

import jax
import jax.numpy as jnp
from jax.experimental import pallas as pl
from jax.experimental.pallas import tpu as pltpu


# ---------------------------- in-kernel building blocks ----------------------------

def _layer_norm(x, w, b, eps=1e-5):
    # f32 statistics, biased variance, eps=1e-5 (PyTorch defaults).
    mu = jnp.mean(x, axis=-1, keepdims=True)
    var = jnp.mean((x - mu) ** 2, axis=-1, keepdims=True)
    return (x - mu) * jax.lax.rsqrt(var + eps) * w + b


def _encoder_layer(x, wqkv, bqkv, wo, bo, w1, b1, w2, b2,
                   ln1w, ln1b, ln2w, ln2b, *, num_heads):
    """One TransformerEncoderLayer (post-norm, ReLU FFN) on a (S, D) slice."""
    S, D = x.shape
    dh = D // num_heads
    scale = 1.0 / float(dh) ** 0.5

    # Fused QKV projection: one bf16 MXU GEMM with f32 accumulation.
    qkv = (jnp.dot(x.astype(jnp.bfloat16), wqkv,
                   preferred_element_type=jnp.float32) + bqkv)          # (S, 3D)
    q = qkv[:, 0:D] * scale
    k = qkv[:, D:2 * D]
    v = qkv[:, 2 * D:3 * D]

    # Heads on a leading (untiled) batch axis via lane slices + stack, then two
    # batched dot_generals instead of per-head tiny matmuls.
    qh = jnp.stack([q[:, h * dh:(h + 1) * dh] for h in range(num_heads)], axis=0)
    kh = jnp.stack([k[:, h * dh:(h + 1) * dh] for h in range(num_heads)], axis=0)
    vh = jnp.stack([v[:, h * dh:(h + 1) * dh] for h in range(num_heads)], axis=0)

    scores = jax.lax.dot_general(                                        # (nh, S, S)
        qh.astype(jnp.bfloat16), kh.astype(jnp.bfloat16),
        (((2,), (2,)), ((0,), (0,))), preferred_element_type=jnp.float32)
    scores = scores - jnp.max(scores, axis=-1, keepdims=True)
    p = jnp.exp(scores)                                                  # f32 softmax
    p = p / jnp.sum(p, axis=-1, keepdims=True)                           # exact divide

    ctx = jax.lax.dot_general(                                           # (nh, S, dh)
        p.astype(jnp.bfloat16), vh.astype(jnp.bfloat16),
        (((2,), (1,)), ((0,), (0,))), preferred_element_type=jnp.float32)
    attn = jnp.concatenate([ctx[h] for h in range(num_heads)], axis=-1)  # (S, D)
    attn = (jnp.dot(attn.astype(jnp.bfloat16), wo,
                    preferred_element_type=jnp.float32) + bo)

    # Post-norm (PyTorch default norm_first=False); dropout == identity.
    y = _layer_norm(x + attn, ln1w, ln1b)
    h1 = jnp.maximum(
        jnp.dot(y.astype(jnp.bfloat16), w1,
                preferred_element_type=jnp.float32) + b1, 0.0)           # ReLU
    ff = (jnp.dot(h1.astype(jnp.bfloat16), w2,
                  preferred_element_type=jnp.float32) + b2)
    return _layer_norm(y + ff, ln2w, ln2b)


def _lstm_layer(x, wih, whh, b, hseq_ref):
    """One LSTM layer on a (S, Din) slice; h/c start at zero (PyTorch default)."""
    S = x.shape[0]
    H = whh.shape[0]

    # Hoisted input projection: one (S,Din)@(Din,4H) GEMM, bias (b_ih+b_hh)
    # folded in once.
    gx = (jnp.dot(x.astype(jnp.bfloat16), wih,
                  preferred_element_type=jnp.float32) + b)               # (S, 4H)

    h = jnp.zeros((1, H), jnp.float32)
    c = jnp.zeros((1, H), jnp.float32)                                   # cell in f32
    # Statically unrolled recurrence (S is a small compile-time constant) so the
    # scheduler sees across timesteps; only the tiny recurrent matmul and gate
    # nonlinearities remain on the serial critical path.
    for t in range(S):
        gates = gx[t:t + 1, :] + jnp.dot(h.astype(jnp.bfloat16), whh,
                                         preferred_element_type=jnp.float32)
        # Gate layout is [i, f, o, g] (reordered host-side from PyTorch's
        # [i, f, g, o]): one sigmoid over a contiguous (1,3H) slab + one tanh.
        ifo = jax.nn.sigmoid(gates[:, 0:3 * H])
        g = jnp.tanh(gates[:, 3 * H:4 * H])
        i = ifo[:, 0:H]
        f = ifo[:, H:2 * H]
        o = ifo[:, 2 * H:3 * H]
        c = f * c + i * g
        h = o * jnp.tanh(c)
        hseq_ref[pl.ds(t, 1), :] = h          # write into VMEM scratch, no concat
    return hseq_ref[...]                       # (S, H)


# --------------------------------- fused kernel ---------------------------------

def fused_forward_kernel(x_ref, *refs, num_heads, n_tlayers, n_llayers):
    n_w = 12 * n_tlayers + 3 * n_llayers + 2
    w_refs = refs[:n_w]
    out_ref = refs[n_w]
    hseq_ref = refs[n_w + 1]

    act = x_ref[0]                                       # (S, D) f32, one batch row
    idx = 0
    for _ in range(n_tlayers):
        lw = [r[...] for r in w_refs[idx:idx + 12]]
        idx += 12
        act = _encoder_layer(act, *lw, num_heads=num_heads)

    for _ in range(n_llayers):
        wih, whh, b = (r[...] for r in w_refs[idx:idx + 3])
        idx += 3
        # TODO(synk): if >1 batch row were resident per core, batch the
        # recurrent matmul over rows and/or hold Whh in MXU weight registers
        # via pltpu.matmul_push_rhs across the unrolled recurrence.
        act = _lstm_layer(act, wih, whh, b, hseq_ref)

    wfc = w_refs[idx][...]
    bfc = w_refs[idx + 1][...]
    out = (jnp.dot(act.astype(jnp.bfloat16), wfc,
                   preferred_element_type=jnp.float32) + bfc)            # (S, O)
    out_ref[0] = out.astype(out_ref.dtype)


_TPARAM_ORDER = ("wqkv", "bqkv", "wo", "bo", "w1", "b1", "w2", "b2",
                 "ln1w", "ln1b", "ln2w", "ln2b")
_LPARAM_ORDER = ("wih_t", "whh_t", "b")


def transformer_lstm_forward(x, params, num_heads):
    B, S, D = x.shape
    tls = params["transformer"]
    lls = params["lstm"]
    H = lls[0]["whh_t"].shape[0]
    O = params["fc_w_t"].shape[1]
    assert D % num_heads == 0, "d_model must be divisible by num_heads"

    flat = []
    in_specs = [pl.BlockSpec((1, S, D), lambda bb: (bb, 0, 0))]          # x

    def add_resident(arr):
        # Resident weight: full-array block, same block index at every grid step.
        flat.append(arr)
        in_specs.append(pl.BlockSpec(arr.shape, lambda bb, _nd=arr.ndim: (0,) * _nd))

    for lp in tls:
        for name in _TPARAM_ORDER:
            add_resident(lp[name])
    for lp in lls:
        for name in _LPARAM_ORDER:
            add_resident(lp[name])
    add_resident(params["fc_w_t"])
    add_resident(params["fc_b"])

    kern = functools.partial(fused_forward_kernel, num_heads=num_heads,
                             n_tlayers=len(tls), n_llayers=len(lls))

    return pl.pallas_call(
        kern,
        out_shape=jax.ShapeDtypeStruct((B, S, O), jnp.float32),
        grid=(B,),
        in_specs=in_specs,
        out_specs=pl.BlockSpec((1, S, O), lambda bb: (bb, 0, 0)),
        scratch_shapes=[pltpu.VMEM((S, H), jnp.float32)],                # hseq scratch
        compiler_params=pltpu.CompilerParams(
            dimension_semantics=("parallel",),       # keeps both v7x TCs busy at B=2
            vmem_limit_bytes=32 * 1024 * 1024),
    )(x, *flat)


# ------------------------------ Parameter init --------------------------------

def init_params(key, input_size, hidden_size, num_layers, output_size):
    D, Hd = input_size, hidden_size
    F = 2 * hidden_size
    keys = iter(jax.random.split(key, 64))

    def w(shape, dtype=jnp.bfloat16, scale=0.1):
        # Matmul weights stored bf16 (MXU-native); accumulation is f32.
        return (scale * jax.random.normal(next(keys), shape,
                                          dtype=jnp.float32)).astype(dtype)

    def bias(shape):
        return w(shape, dtype=jnp.float32)

    tlayers = []
    for _ in range(num_layers):
        tlayers.append(dict(
            wqkv=w((D, 3 * D)), bqkv=bias((1, 3 * D)),
            wo=w((D, D)), bo=bias((1, D)),
            w1=w((D, F)), b1=bias((1, F)),
            w2=w((F, D)), b2=bias((1, D)),
            ln1w=jnp.ones((1, D), jnp.float32), ln1b=jnp.zeros((1, D), jnp.float32),
            ln2w=jnp.ones((1, D), jnp.float32), ln2b=jnp.zeros((1, D), jnp.float32),
        ))

    llayers = []
    for li in range(num_layers):
        din = D if li == 0 else Hd
        # Gate columns laid out [i, f, o, g]; when importing PyTorch weights,
        # permute its [i, f, g, o] row-blocks accordingly and fold b_ih + b_hh.
        llayers.append(dict(
            wih_t=w((din, 4 * Hd)),
            whh_t=w((Hd, 4 * Hd)),
            b=bias((1, 4 * Hd)),
        ))

    return dict(transformer=tlayers, lstm=llayers,
                fc_w_t=w((Hd, output_size)), fc_b=bias((1, output_size)))


# ------------------------------------ Main ------------------------------------

if __name__ == "__main__":
    input_size, hidden_size, num_layers = 16, 32, 2
    output_size, num_heads = 4, 4
    batch, seq = 2, 8

    key = jax.random.PRNGKey(0)
    kx, kp = jax.random.split(key)
    x = jax.random.normal(kx, (batch, seq, input_size), dtype=jnp.float32)
    params = init_params(kp, input_size, hidden_size, num_layers, output_size)

    fwd = jax.jit(functools.partial(transformer_lstm_forward, num_heads=num_heads))
    out = jax.block_until_ready(fwd(x, params))
    assert out.shape == (batch, seq, output_size), out.shape
    print("KERNEL_OK")
</pallas_src>

<mosaic_0001>
module attributes {stable_mosaic.version = 11 : i64} {
  func.func @fused_forward_kernel(%arg0: i32, %arg1: memref<1x8x16xf32, #tpu.memory_space<vmem>>, %arg2: memref<16x48xbf16, #tpu.memory_space<vmem>>, %arg3: memref<1x48xf32, #tpu.memory_space<vmem>>, %arg4: memref<16x16xbf16, #tpu.memory_space<vmem>>, %arg5: memref<1x16xf32, #tpu.memory_space<vmem>>, %arg6: memref<16x64xbf16, #tpu.memory_space<vmem>>, %arg7: memref<1x64xf32, #tpu.memory_space<vmem>>, %arg8: memref<64x16xbf16, #tpu.memory_space<vmem>>, %arg9: memref<1x16xf32, #tpu.memory_space<vmem>>, %arg10: memref<1x16xf32, #tpu.memory_space<vmem>>, %arg11: memref<1x16xf32, #tpu.memory_space<vmem>>, %arg12: memref<1x16xf32, #tpu.memory_space<vmem>>, %arg13: memref<1x16xf32, #tpu.memory_space<vmem>>, %arg14: memref<16x48xbf16, #tpu.memory_space<vmem>>, %arg15: memref<1x48xf32, #tpu.memory_space<vmem>>, %arg16: memref<16x16xbf16, #tpu.memory_space<vmem>>, %arg17: memref<1x16xf32, #tpu.memory_space<vmem>>, %arg18: memref<16x64xbf16, #tpu.memory_space<vmem>>, %arg19: memref<1x64xf32, #tpu.memory_space<vmem>>, %arg20: memref<64x16xbf16, #tpu.memory_space<vmem>>, %arg21: memref<1x16xf32, #tpu.memory_space<vmem>>, %arg22: memref<1x16xf32, #tpu.memory_space<vmem>>, %arg23: memref<1x16xf32, #tpu.memory_space<vmem>>, %arg24: memref<1x16xf32, #tpu.memory_space<vmem>>, %arg25: memref<1x16xf32, #tpu.memory_space<vmem>>, %arg26: memref<16x128xbf16, #tpu.memory_space<vmem>>, %arg27: memref<32x128xbf16, #tpu.memory_space<vmem>>, %arg28: memref<1x128xf32, #tpu.memory_space<vmem>>, %arg29: memref<32x128xbf16, #tpu.memory_space<vmem>>, %arg30: memref<32x128xbf16, #tpu.memory_space<vmem>>, %arg31: memref<1x128xf32, #tpu.memory_space<vmem>>, %arg32: memref<32x4xbf16, #tpu.memory_space<vmem>>, %arg33: memref<1x4xf32, #tpu.memory_space<vmem>>, %arg34: memref<1x8x4xf32, #tpu.memory_space<vmem>>, %arg35: memref<8x32xf32, #tpu.memory_space<vmem>>) attributes {dimension_semantics = [#tpu.dimension_semantics<parallel>], iteration_bounds = array<i64: 2>, scalar_prefetch = 0 : i64, scratch_operands = 1 : i64, tpu.core_type = #tpu.core_type<tc>, window_params = [{transform_indices = @transform_0, window_bounds = array<i64: 1, 8, 16>}, {pipeline_mode = #tpu.pipeline_mode<synchronous>, transform_indices = @transform_1, window_bounds = array<i64: 16, 48>}, {pipeline_mode = #tpu.pipeline_mode<synchronous>, transform_indices = @transform_2, window_bounds = array<i64: 1, 48>}, {pipeline_mode = #tpu.pipeline_mode<synchronous>, transform_indices = @transform_3, window_bounds = array<i64: 16, 16>}, {pipeline_mode = #tpu.pipeline_mode<synchronous>, transform_indices = @transform_4, window_bounds = array<i64: 1, 16>}, {pipeline_mode = #tpu.pipeline_mode<synchronous>, transform_indices = @transform_5, window_bounds = array<i64: 16, 64>}, {pipeline_mode = #tpu.pipeline_mode<synchronous>, transform_indices = @transform_6, window_bounds = array<i64: 1, 64>}, {pipeline_mode = #tpu.pipeline_mode<synchronous>, transform_indices = @transform_7, window_bounds = array<i64: 64, 16>}, {pipeline_mode = #tpu.pipeline_mode<synchronous>, transform_indices = @transform_8, window_bounds = array<i64: 1, 16>}, {pipeline_mode = #tpu.pipeline_mode<synchronous>, transform_indices = @transform_9, window_bounds = array<i64: 1, 16>}, {pipeline_mode = #tpu.pipeline_mode<synchronous>, transform_indices = @transform_10, window_bounds = array<i64: 1, 16>}, {pipeline_mode = #tpu.pipeline_mode<synchronous>, transform_indices = @transform_11, window_bounds = array<i64: 1, 16>}, {pipeline_mode = #tpu.pipeline_mode<synchronous>, transform_indices = @transform_12, window_bounds = array<i64: 1, 16>}, {pipeline_mode = #tpu.pipeline_mode<synchronous>, transform_indices = @transform_13, window_bounds = array<i64: 16, 48>}, {pipeline_mode = #tpu.pipeline_mode<synchronous>, transform_indices = @transform_14, window_bounds = array<i64: 1, 48>}, {pipeline_mode = #tpu.pipeline_mode<synchronous>, transform_indices = @transform_15, window_bounds = array<i64: 16, 16>}, {pipeline_mode = #tpu.pipeline_mode<synchronous>, transform_indices = @transform_16, window_bounds = array<i64: 1, 16>}, {pipeline_mode = #tpu.pipeline_mode<synchronous>, transform_indices = @transform_17, window_bounds = array<i64: 16, 64>}, {pipeline_mode = #tpu.pipeline_mode<synchronous>, transform_indices = @transform_18, window_bounds = array<i64: 1, 64>}, {pipeline_mode = #tpu.pipeline_mode<synchronous>, transform_indices = @transform_19, window_bounds = array<i64: 64, 16>}, {pipeline_mode = #tpu.pipeline_mode<synchronous>, transform_indices = @transform_20, window_bounds = array<i64: 1, 16>}, {pipeline_mode = #tpu.pipeline_mode<synchronous>, transform_indices = @transform_21, window_bounds = array<i64: 1, 16>}, {pipeline_mode = #tpu.pipeline_mode<synchronous>, transform_indices = @transform_22, window_bounds = array<i64: 1, 16>}, {pipeline_mode = #tpu.pipeline_mode<synchronous>, transform_indices = @transform_23, window_bounds = array<i64: 1, 16>}, {pipeline_mode = #tpu.pipeline_mode<synchronous>, transform_indices = @transform_24, window_bounds = array<i64: 1, 16>}, {pipeline_mode = #tpu.pipeline_mode<synchronous>, transform_indices = @transform_25, window_bounds = array<i64: 16, 128>}, {pipeline_mode = #tpu.pipeline_mode<synchronous>, transform_indices = @transform_26, window_bounds = array<i64: 32, 128>}, {pipeline_mode = #tpu.pipeline_mode<synchronous>, transform_indices = @transform_27, window_bounds = array<i64: 1, 128>}, {pipeline_mode = #tpu.pipeline_mode<synchronous>, transform_indices = @transform_28, window_bounds = array<i64: 32, 128>}, {pipeline_mode = #tpu.pipeline_mode<synchronous>, transform_indices = @transform_29, window_bounds = array<i64: 32, 128>}, {pipeline_mode = #tpu.pipeline_mode<synchronous>, transform_indices = @transform_30, window_bounds = array<i64: 1, 128>}, {pipeline_mode = #tpu.pipeline_mode<synchronous>, transform_indices = @transform_31, window_bounds = array<i64: 32, 4>}, {pipeline_mode = #tpu.pipeline_mode<synchronous>, transform_indices = @transform_32, window_bounds = array<i64: 1, 4>}, {transform_indices = @transform_33, window_bounds = array<i64: 1, 8, 4>}]} {
    %c0 = arith.constant 0 : index
    %c0_0 = arith.constant 0 : index
    %c0_1 = arith.constant 0 : index
    %0 = vector.load %arg1[%c0, %c0_0, %c0_1] : memref<1x8x16xf32, #tpu.memory_space<vmem>>, vector<1x8x16xf32>
    %1 = vector.shape_cast %0 : vector<1x8x16xf32> to vector<8x16xf32>
    %c0_2 = arith.constant 0 : index
    %c0_3 = arith.constant 0 : index
    %2 = vector.load %arg2[%c0_2, %c0_3] : memref<16x48xbf16, #tpu.memory_space<vmem>>, vector<16x48xbf16>
    %c0_4 = arith.constant 0 : index
    %c0_5 = arith.constant 0 : index
    %3 = vector.load %arg3[%c0_4, %c0_5] : memref<1x48xf32, #tpu.memory_space<vmem>>, vector<1x48xf32>
    %c0_6 = arith.constant 0 : index
    %c0_7 = arith.constant 0 : index
    %4 = vector.load %arg4[%c0_6, %c0_7] : memref<16x16xbf16, #tpu.memory_space<vmem>>, vector<16x16xbf16>
    %c0_8 = arith.constant 0 : index
    %c0_9 = arith.constant 0 : index
    %5 = vector.load %arg5[%c0_8, %c0_9] : memref<1x16xf32, #tpu.memory_space<vmem>>, vector<1x16xf32>
    %c0_10 = arith.constant 0 : index
    %c0_11 = arith.constant 0 : index
    %6 = vector.load %arg6[%c0_10, %c0_11] : memref<16x64xbf16, #tpu.memory_space<vmem>>, vector<16x64xbf16>
    %c0_12 = arith.constant 0 : index
    %c0_13 = arith.constant 0 : index
    %7 = vector.load %arg7[%c0_12, %c0_13] : memref<1x64xf32, #tpu.memory_space<vmem>>, vector<1x64xf32>
    %c0_14 = arith.constant 0 : index
    %c0_15 = arith.constant 0 : index
    %8 = vector.load %arg8[%c0_14, %c0_15] : memref<64x16xbf16, #tpu.memory_space<vmem>>, vector<64x16xbf16>
    %c0_16 = arith.constant 0 : index
    %c0_17 = arith.constant 0 : index
    %9 = vector.load %arg9[%c0_16, %c0_17] : memref<1x16xf32, #tpu.memory_space<vmem>>, vector<1x16xf32>
    %c0_18 = arith.constant 0 : index
    %c0_19 = arith.constant 0 : index
    %10 = vector.load %arg10[%c0_18, %c0_19] : memref<1x16xf32, #tpu.memory_space<vmem>>, vector<1x16xf32>
    %c0_20 = arith.constant 0 : index
    %c0_21 = arith.constant 0 : index
    %11 = vector.load %arg11[%c0_20, %c0_21] : memref<1x16xf32, #tpu.memory_space<vmem>>, vector<1x16xf32>
    %c0_22 = arith.constant 0 : index
    %c0_23 = arith.constant 0 : index
    %12 = vector.load %arg12[%c0_22, %c0_23] : memref<1x16xf32, #tpu.memory_space<vmem>>, vector<1x16xf32>
    %c0_24 = arith.constant 0 : index
    %c0_25 = arith.constant 0 : index
    %13 = vector.load %arg13[%c0_24, %c0_25] : memref<1x16xf32, #tpu.memory_space<vmem>>, vector<1x16xf32>
    %14 = arith.truncf %1 : vector<8x16xf32> to vector<8x16xbf16>
    %cst = arith.constant dense<0.000000e+00> : vector<8x48xf32>
    %15 = tpu.matmul %14, %2, %cst {dimension_numbers = #tpu.dot_dimension_numbers<[1], [0], [0], [1], [0, 0, 1, 1], [], []>} : vector<8x16xbf16>, vector<16x48xbf16>, vector<8x48xf32> -> vector<8x48xf32>
    %16 = vector.broadcast %3 : vector<1x48xf32> to vector<8x48xf32>
    %17 = arith.addf %15, %16 : vector<8x48xf32>
    %18 = vector.extract_strided_slice %17 {offsets = [0, 0], sizes = [8, 16], strides = [1, 1]} : vector<8x48xf32> to vector<8x16xf32>
    %cst_26 = arith.constant 5.000000e-01 : f32
    %19 = vector.broadcast %cst_26 : f32 to vector<8x16xf32>
    %20 = arith.mulf %18, %19 : vector<8x16xf32>
    %21 = vector.extract_strided_slice %17 {offsets = [0, 16], sizes = [8, 16], strides = [1, 1]} : vector<8x48xf32> to vector<8x16xf32>
    %22 = vector.extract_strided_slice %17 {offsets = [0, 32], sizes = [8, 16], strides = [1, 1]} : vector<8x48xf32> to vector<8x16xf32>
    %23 = vector.extract_strided_slice %20 {offsets = [0, 0], sizes = [8, 4], strides = [1, 1]} : vector<8x16xf32> to vector<8x4xf32>
    %24 = vector.extract_strided_slice %20 {offsets = [0, 4], sizes = [8, 4], strides = [1, 1]} : vector<8x16xf32> to vector<8x4xf32>
    %25 = vector.extract_strided_slice %20 {offsets = [0, 8], sizes = [8, 4], strides = [1, 1]} : vector<8x16xf32> to vector<8x4xf32>
    %26 = vector.extract_strided_slice %20 {offsets = [0, 12], sizes = [8, 4], strides = [1, 1]} : vector<8x16xf32> to vector<8x4xf32>
    %27 = vector.shape_cast %23 : vector<8x4xf32> to vector<1x8x4xf32>
    %28 = vector.shape_cast %24 : vector<8x4xf32> to vector<1x8x4xf32>
    %29 = vector.shape_cast %25 : vector<8x4xf32> to vector<1x8x4xf32>
    %30 = vector.shape_cast %26 : vector<8x4xf32> to vector<1x8x4xf32>
    %31 = tpu.concatenate %27, %28, %29, %30 in 0 : vector<1x8x4xf32>, vector<1x8x4xf32>, vector<1x8x4xf32>, vector<1x8x4xf32> -> vector<4x8x4xf32>
    %32 = vector.extract_strided_slice %21 {offsets = [0, 0], sizes = [8, 4], strides = [1, 1]} : vector<8x16xf32> to vector<8x4xf32>
    %33 = vector.extract_strided_slice %21 {offsets = [0, 4], sizes = [8, 4], strides = [1, 1]} : vector<8x16xf32> to vector<8x4xf32>
    %34 = vector.extract_strided_slice %21 {offsets = [0, 8], sizes = [8, 4], strides = [1, 1]} : vector<8x16xf32> to vector<8x4xf32>
    %35 = vector.extract_strided_slice %21 {offsets = [0, 12], sizes = [8, 4], strides = [1, 1]} : vector<8x16xf32> to vector<8x4xf32>
    %36 = vector.shape_cast %32 : vector<8x4xf32> to vector<1x8x4xf32>
    %37 = vector.shape_cast %33 : vector<8x4xf32> to vector<1x8x4xf32>
    %38 = vector.shape_cast %34 : vector<8x4xf32> to vector<1x8x4xf32>
    %39 = vector.shape_cast %35 : vector<8x4xf32> to vector<1x8x4xf32>
    %40 = tpu.concatenate %36, %37, %38, %39 in 0 : vector<1x8x4xf32>, vector<1x8x4xf32>, vector<1x8x4xf32>, vector<1x8x4xf32> -> vector<4x8x4xf32>
    %41 = vector.extract_strided_slice %22 {offsets = [0, 0], sizes = [8, 4], strides = [1, 1]} : vector<8x16xf32> to vector<8x4xf32>
    %42 = vector.extract_strided_slice %22 {offsets = [0, 4], sizes = [8, 4], strides = [1, 1]} : vector<8x16xf32> to vector<8x4xf32>
    %43 = vector.extract_strided_slice %22 {offsets = [0, 8], sizes = [8, 4], strides = [1, 1]} : vector<8x16xf32> to vector<8x4xf32>
    %44 = vector.extract_strided_slice %22 {offsets = [0, 12], sizes = [8, 4], strides = [1, 1]} : vector<8x16xf32> to vector<8x4xf32>
    %45 = vector.shape_cast %41 : vector<8x4xf32> to vector<1x8x4xf32>
    %46 = vector.shape_cast %42 : vector<8x4xf32> to vector<1x8x4xf32>
    %47 = vector.shape_cast %43 : vector<8x4xf32> to vector<1x8x4xf32>
    %48 = vector.shape_cast %44 : vector<8x4xf32> to vector<1x8x4xf32>
    %49 = tpu.concatenate %45, %46, %47, %48 in 0 : vector<1x8x4xf32>, vector<1x8x4xf32>, vector<1x8x4xf32>, vector<1x8x4xf32> -> vector<4x8x4xf32>
    %50 = arith.truncf %31 : vector<4x8x4xf32> to vector<4x8x4xbf16>
    %51 = arith.truncf %40 : vector<4x8x4xf32> to vector<4x8x4xbf16>
    %cst_27 = arith.constant dense<0.000000e+00> : vector<4x8x8xf32>
    %52 = tpu.matmul %50, %51, %cst_27 {dimension_numbers = #tpu.dot_dimension_numbers<[2], [2], [1], [1], [0, 0, 0, 1, 1, 1], [0], [0]>} : vector<4x8x4xbf16>, vector<4x8x4xbf16>, vector<4x8x8xf32> -> vector<4x8x8xf32>
    %cst_28 = arith.constant dense<0xFF800000> : vector<4x8xf32>
    %53 = vector.multi_reduction <maximumf>, %52, %cst_28 [2] : vector<4x8x8xf32> to vector<4x8xf32>
    %54 = vector.shape_cast %53 : vector<4x8xf32> to vector<4x8x1xf32>
    %55 = vector.broadcast %54 : vector<4x8x1xf32> to vector<4x8x8xf32>
    %56 = arith.subf %52, %55 : vector<4x8x8xf32>
    %57 = math.exp %56 : vector<4x8x8xf32>
    %cst_29 = arith.constant dense<0.000000e+00> : vector<4x8xf32>
    %58 = vector.multi_reduction <add>, %57, %cst_29 [2] : vector<4x8x8xf32> to vector<4x8xf32>
    %59 = vector.shape_cast %58 : vector<4x8xf32> to vector<4x8x1xf32>
    %60 = vector.broadcast %59 : vector<4x8x1xf32> to vector<4x8x8xf32>
    %61 = arith.divf %57, %60 : vector<4x8x8xf32>
    %62 = arith.truncf %61 : vector<4x8x8xf32> to vector<4x8x8xbf16>
    %63 = arith.truncf %49 : vector<4x8x4xf32> to vector<4x8x4xbf16>
    %cst_30 = arith.constant dense<0.000000e+00> : vector<4x8x4xf32>
    %64 = tpu.matmul %62, %63, %cst_30 {dimension_numbers = #tpu.dot_dimension_numbers<[2], [1], [1], [2], [0, 0, 0, 1, 1, 2], [0], [0]>} : vector<4x8x8xbf16>, vector<4x8x4xbf16>, vector<4x8x4xf32> -> vector<4x8x4xf32>
    %65 = vector.extract_strided_slice %64 {offsets = [0, 0, 0], sizes = [1, 8, 4], strides = [1, 1, 1]} : vector<4x8x4xf32> to vector<1x8x4xf32>
    %66 = vector.shape_cast %65 : vector<1x8x4xf32> to vector<8x4xf32>
    %67 = vector.extract_strided_slice %64 {offsets = [1, 0, 0], sizes = [1, 8, 4], strides = [1, 1, 1]} : vector<4x8x4xf32> to vector<1x8x4xf32>
    %68 = vector.shape_cast %67 : vector<1x8x4xf32> to vector<8x4xf32>
    %69 = vector.extract_strided_slice %64 {offsets = [2, 0, 0], sizes = [1, 8, 4], strides = [1, 1, 1]} : vector<4x8x4xf32> to vector<1x8x4xf32>
    %70 = vector.shape_cast %69 : vector<1x8x4xf32> to vector<8x4xf32>
    %71 = vector.extract_strided_slice %64 {offsets = [3, 0, 0], sizes = [1, 8, 4], strides = [1, 1, 1]} : vector<4x8x4xf32> to vector<1x8x4xf32>
    %72 = vector.shape_cast %71 : vector<1x8x4xf32> to vector<8x4xf32>
    %73 = tpu.concatenate %66, %68, %70, %72 in 1 : vector<8x4xf32>, vector<8x4xf32>, vector<8x4xf32>, vector<8x4xf32> -> vector<8x16xf32>
    %74 = arith.truncf %73 : vector<8x16xf32> to vector<8x16xbf16>
    %cst_31 = arith.constant dense<0.000000e+00> : vector<8x16xf32>
    %75 = tpu.matmul %74, %4, %cst_31 {dimension_numbers = #tpu.dot_dimension_numbers<[1], [0], [0], [1], [0, 0, 1, 1], [], []>} : vector<8x16xbf16>, vector<16x16xbf16>, vector<8x16xf32> -> vector<8x16xf32>
    %76 = vector.broadcast %5 : vector<1x16xf32> to vector<8x16xf32>
    %77 = arith.addf %75, %76 : vector<8x16xf32>
    %78 = arith.addf %1, %77 : vector<8x16xf32>
    %cst_32 = arith.constant dense<0.000000e+00> : vector<8xf32>
    %79 = vector.multi_reduction <add>, %78, %cst_32 [1] : vector<8x16xf32> to vector<8xf32>
    %80 = vector.shape_cast %79 : vector<8xf32> to vector<8x1xf32>
    %cst_33 = arith.constant 1.600000e+01 : f32
    %81 = vector.broadcast %cst_33 : f32 to vector<8x1xf32>
    %82 = arith.divf %80, %81 : vector<8x1xf32>
    %83 = vector.broadcast %82 : vector<8x1xf32> to vector<8x16xf32>
    %84 = arith.subf %78, %83 : vector<8x16xf32>
    %85 = arith.mulf %84, %84 : vector<8x16xf32>
    %cst_34 = arith.constant dense<0.000000e+00> : vector<8xf32>
    %86 = vector.multi_reduction <add>, %85, %cst_34 [1] : vector<8x16xf32> to vector<8xf32>
    %87 = vector.shape_cast %86 : vector<8xf32> to vector<8x1xf32>
    %cst_35 = arith.constant 1.600000e+01 : f32
    %88 = vector.broadcast %cst_35 : f32 to vector<8x1xf32>
    %89 = arith.divf %87, %88 : vector<8x1xf32>
    %90 = vector.broadcast %82 : vector<8x1xf32> to vector<8x16xf32>
    %91 = arith.subf %78, %90 : vector<8x16xf32>
    %cst_36 = arith.constant 9.99999974E-6 : f32
    %92 = vector.broadcast %cst_36 : f32 to vector<8x1xf32>
    %93 = arith.addf %89, %92 : vector<8x1xf32>
    %94 = math.rsqrt %93 : vector<8x1xf32>
    %95 = vector.broadcast %94 : vector<8x1xf32> to vector<8x16xf32>
    %96 = arith.mulf %91, %95 : vector<8x16xf32>
    %97 = vector.broadcast %10 : vector<1x16xf32> to vector<8x16xf32>
    %98 = arith.mulf %96, %97 : vector<8x16xf32>
    %99 = vector.broadcast %11 : vector<1x16xf32> to vector<8x16xf32>
    %100 = arith.addf %98, %99 : vector<8x16xf32>
    %101 = arith.truncf %100 : vector<8x16xf32> to vector<8x16xbf16>
    %cst_37 = arith.constant dense<0.000000e+00> : vector<8x64xf32>
    %102 = tpu.matmul %101, %6, %cst_37 {dimension_numbers = #tpu.dot_dimension_numbers<[1], [0], [0], [1], [0, 0, 1, 1], [], []>} : vector<8x16xbf16>, vector<16x64xbf16>, vector<8x64xf32> -> vector<8x64xf32>
    %103 = vector.broadcast %7 : vector<1x64xf32> to vector<8x64xf32>
    %104 = arith.addf %102, %103 : vector<8x64xf32>
    %cst_38 = arith.constant 0.000000e+00 : f32
    %105 = vector.broadcast %cst_38 : f32 to vector<8x64xf32>
    %106 = arith.maximumf %104, %105 : vector<8x64xf32>
    %107 = arith.truncf %106 : vector<8x64xf32> to vector<8x64xbf16>
    %cst_39 = arith.constant dense<0.000000e+00> : vector<8x16xf32>
    %108 = tpu.matmul %107, %8, %cst_39 {dimension_numbers = #tpu.dot_dimension_numbers<[1], [0], [0], [1], [0, 0, 1, 1], [], []>} : vector<8x64xbf16>, vector<64x16xbf16>, vector<8x16xf32> -> vector<8x16xf32>
    %109 = vector.broadcast %9 : vector<1x16xf32> to vector<8x16xf32>
    %110 = arith.addf %108, %109 : vector<8x16xf32>
    %111 = arith.addf %100, %110 : vector<8x16xf32>
    %cst_40 = arith.constant dense<0.000000e+00> : vector<8xf32>
    %112 = vector.multi_reduction <add>, %111, %cst_40 [1] : vector<8x16xf32> to vector<8xf32>
    %113 = vector.shape_cast %112 : vector<8xf32> to vector<8x1xf32>
    %cst_41 = arith.constant 1.600000e+01 : f32
    %114 = vector.broadcast %cst_41 : f32 to vector<8x1xf32>
    %115 = arith.divf %113, %114 : vector<8x1xf32>
    %116 = vector.broadcast %115 : vector<8x1xf32> to vector<8x16xf32>
    %117 = arith.subf %111, %116 : vector<8x16xf32>
    %118 = arith.mulf %117, %117 : vector<8x16xf32>
    %cst_42 = arith.constant dense<0.000000e+00> : vector<8xf32>
    %119 = vector.multi_reduction <add>, %118, %cst_42 [1] : vector<8x16xf32> to vector<8xf32>
    %120 = vector.shape_cast %119 : vector<8xf32> to vector<8x1xf32>
    %cst_43 = arith.constant 1.600000e+01 : f32
    %121 = vector.broadcast %cst_43 : f32 to vector<8x1xf32>
    %122 = arith.divf %120, %121 : vector<8x1xf32>
    %123 = vector.broadcast %115 : vector<8x1xf32> to vector<8x16xf32>
    %124 = arith.subf %111, %123 : vector<8x16xf32>
    %cst_44 = arith.constant 9.99999974E-6 : f32
    %125 = vector.broadcast %cst_44 : f32 to vector<8x1xf32>
    %126 = arith.addf %122, %125 : vector<8x1xf32>
    %127 = math.rsqrt %126 : vector<8x1xf32>
    %128 = vector.broadcast %127 : vector<8x1xf32> to vector<8x16xf32>
    %129 = arith.mulf %124, %128 : vector<8x16xf32>
    %130 = vector.broadcast %12 : vector<1x16xf32> to vector<8x16xf32>
    %131 = arith.mulf %129, %130 : vector<8x16xf32>
    %132 = vector.broadcast %13 : vector<1x16xf32> to vector<8x16xf32>
    %133 = arith.addf %131, %132 : vector<8x16xf32>
    %c0_45 = arith.constant 0 : index
    %c0_46 = arith.constant 0 : index
    %134 = vector.load %arg14[%c0_45, %c0_46] : memref<16x48xbf16, #tpu.memory_space<vmem>>, vector<16x48xbf16>
    %c0_47 = arith.constant 0 : index
    %c0_48 = arith.constant 0 : index
    %135 = vector.load %arg15[%c0_47, %c0_48] : memref<1x48xf32, #tpu.memory_space<vmem>>, vector<1x48xf32>
    %c0_49 = arith.constant 0 : index
    %c0_50 = arith.constant 0 : index
    %136 = vector.load %arg16[%c0_49, %c0_50] : memref<16x16xbf16, #tpu.memory_space<vmem>>, vector<16x16xbf16>
    %c0_51 = arith.constant 0 : index
    %c0_52 = arith.constant 0 : index
    %137 = vector.load %arg17[%c0_51, %c0_52] : memref<1x16xf32, #tpu.memory_space<vmem>>, vector<1x16xf32>
    %c0_53 = arith.constant 0 : index
    %c0_54 = arith.constant 0 : index
    %138 = vector.load %arg18[%c0_53, %c0_54] : memref<16x64xbf16, #tpu.memory_space<vmem>>, vector<16x64xbf16>
    %c0_55 = arith.constant 0 : index
    %c0_56 = arith.constant 0 : index
    %139 = vector.load %arg19[%c0_55, %c0_56] : memref<1x64xf32, #tpu.memory_space<vmem>>, vector<1x64xf32>
    %c0_57 = arith.constant 0 : index
    %c0_58 = arith.constant 0 : index
    %140 = vector.load %arg20[%c0_57, %c0_58] : memref<64x16xbf16, #tpu.memory_space<vmem>>, vector<64x16xbf16>
    %c0_59 = arith.constant 0 : index
    %c0_60 = arith.constant 0 : index
    %141 = vector.load %arg21[%c0_59, %c0_60] : memref<1x16xf32, #tpu.memory_space<vmem>>, vector<1x16xf32>
    %c0_61 = arith.constant 0 : index
    %c0_62 = arith.constant 0 : index
    %142 = vector.load %arg22[%c0_61, %c0_62] : memref<1x16xf32, #tpu.memory_space<vmem>>, vector<1x16xf32>
    %c0_63 = arith.constant 0 : index
    %c0_64 = arith.constant 0 : index
    %143 = vector.load %arg23[%c0_63, %c0_64] : memref<1x16xf32, #tpu.memory_space<vmem>>, vector<1x16xf32>
    %c0_65 = arith.constant 0 : index
    %c0_66 = arith.constant 0 : index
    %144 = vector.load %arg24[%c0_65, %c0_66] : memref<1x16xf32, #tpu.memory_space<vmem>>, vector<1x16xf32>
    %c0_67 = arith.constant 0 : index
    %c0_68 = arith.constant 0 : index
    %145 = vector.load %arg25[%c0_67, %c0_68] : memref<1x16xf32, #tpu.memory_space<vmem>>, vector<1x16xf32>
    %146 = arith.truncf %133 : vector<8x16xf32> to vector<8x16xbf16>
    %cst_69 = arith.constant dense<0.000000e+00> : vector<8x48xf32>
    %147 = tpu.matmul %146, %134, %cst_69 {dimension_numbers = #tpu.dot_dimension_numbers<[1], [0], [0], [1], [0, 0, 1, 1], [], []>} : vector<8x16xbf16>, vector<16x48xbf16>, vector<8x48xf32> -> vector<8x48xf32>
    %148 = vector.broadcast %135 : vector<1x48xf32> to vector<8x48xf32>
    %149 = arith.addf %147, %148 : vector<8x48xf32>
    %150 = vector.extract_strided_slice %149 {offsets = [0, 0], sizes = [8, 16], strides = [1, 1]} : vector<8x48xf32> to vector<8x16xf32>
    %cst_70 = arith.constant 5.000000e-01 : f32
    %151 = vector.broadcast %cst_70 : f32 to vector<8x16xf32>
    %152 = arith.mulf %150, %151 : vector<8x16xf32>
    %153 = vector.extract_strided_slice %149 {offsets = [0, 16], sizes = [8, 16], strides = [1, 1]} : vector<8x48xf32> to vector<8x16xf32>
    %154 = vector.extract_strided_slice %149 {offsets = [0, 32], sizes = [8, 16], strides = [1, 1]} : vector<8x48xf32> to vector<8x16xf32>
    %155 = vector.extract_strided_slice %152 {offsets = [0, 0], sizes = [8, 4], strides = [1, 1]} : vector<8x16xf32> to vector<8x4xf32>
    %156 = vector.extract_strided_slice %152 {offsets = [0, 4], sizes = [8, 4], strides = [1, 1]} : vector<8x16xf32> to vector<8x4xf32>
    %157 = vector.extract_strided_slice %152 {offsets = [0, 8], sizes = [8, 4], strides = [1, 1]} : vector<8x16xf32> to vector<8x4xf32>
    %158 = vector.extract_strided_slice %152 {offsets = [0, 12], sizes = [8, 4], strides = [1, 1]} : vector<8x16xf32> to vector<8x4xf32>
    %159 = vector.shape_cast %155 : vector<8x4xf32> to vector<1x8x4xf32>
    %160 = vector.shape_cast %156 : vector<8x4xf32> to vector<1x8x4xf32>
    %161 = vector.shape_cast %157 : vector<8x4xf32> to vector<1x8x4xf32>
    %162 = vector.shape_cast %158 : vector<8x4xf32> to vector<1x8x4xf32>
    %163 = tpu.concatenate %159, %160, %161, %162 in 0 : vector<1x8x4xf32>, vector<1x8x4xf32>, vector<1x8x4xf32>, vector<1x8x4xf32> -> vector<4x8x4xf32>
    %164 = vector.extract_strided_slice %153 {offsets = [0, 0], sizes = [8, 4], strides = [1, 1]} : vector<8x16xf32> to vector<8x4xf32>
    %165 = vector.extract_strided_slice %153 {offsets = [0, 4], sizes = [8, 4], strides = [1, 1]} : vector<8x16xf32> to vector<8x4xf32>
    %166 = vector.extract_strided_slice %153 {offsets = [0, 8], sizes = [8, 4], strides = [1, 1]} : vector<8x16xf32> to vector<8x4xf32>
    %167 = vector.extract_strided_slice %153 {offsets = [0, 12], sizes = [8, 4], strides = [1, 1]} : vector<8x16xf32> to vector<8x4xf32>
    %168 = vector.shape_cast %164 : vector<8x4xf32> to vector<1x8x4xf32>
    %169 = vector.shape_cast %165 : vector<8x4xf32> to vector<1x8x4xf32>
    %170 = vector.shape_cast %166 : vector<8x4xf32> to vector<1x8x4xf32>
    %171 = vector.shape_cast %167 : vector<8x4xf32> to vector<1x8x4xf32>
    %172 = tpu.concatenate %168, %169, %170, %171 in 0 : vector<1x8x4xf32>, vector<1x8x4xf32>, vector<1x8x4xf32>, vector<1x8x4xf32> -> vector<4x8x4xf32>
    %173 = vector.extract_strided_slice %154 {offsets = [0, 0], sizes = [8, 4], strides = [1, 1]} : vector<8x16xf32> to vector<8x4xf32>
    %174 = vector.extract_strided_slice %154 {offsets = [0, 4], sizes = [8, 4], strides = [1, 1]} : vector<8x16xf32> to vector<8x4xf32>
    %175 = vector.extract_strided_slice %154 {offsets = [0, 8], sizes = [8, 4], strides = [1, 1]} : vector<8x16xf32> to vector<8x4xf32>
    %176 = vector.extract_strided_slice %154 {offsets = [0, 12], sizes = [8, 4], strides = [1, 1]} : vector<8x16xf32> to vector<8x4xf32>
    %177 = vector.shape_cast %173 : vector<8x4xf32> to vector<1x8x4xf32>
    %178 = vector.shape_cast %174 : vector<8x4xf32> to vector<1x8x4xf32>
    %179 = vector.shape_cast %175 : vector<8x4xf32> to vector<1x8x4xf32>
    %180 = vector.shape_cast %176 : vector<8x4xf32> to vector<1x8x4xf32>
    %181 = tpu.concatenate %177, %178, %179, %180 in 0 : vector<1x8x4xf32>, vector<1x8x4xf32>, vector<1x8x4xf32>, vector<1x8x4xf32> -> vector<4x8x4xf32>
    %182 = arith.truncf %163 : vector<4x8x4xf32> to vector<4x8x4xbf16>
    %183 = arith.truncf %172 : vector<4x8x4xf32> to vector<4x8x4xbf16>
    %cst_71 = arith.constant dense<0.000000e+00> : vector<4x8x8xf32>
    %184 = tpu.matmul %182, %183, %cst_71 {dimension_numbers = #tpu.dot_dimension_numbers<[2], [2], [1], [1], [0, 0, 0, 1, 1, 1], [0], [0]>} : vector<4x8x4xbf16>, vector<4x8x4xbf16>, vector<4x8x8xf32> -> vector<4x8x8xf32>
    %cst_72 = arith.constant dense<0xFF800000> : vector<4x8xf32>
    %185 = vector.multi_reduction <maximumf>, %184, %cst_72 [2] : vector<4x8x8xf32> to vector<4x8xf32>
    %186 = vector.shape_cast %185 : vector<4x8xf32> to vector<4x8x1xf32>
    %187 = vector.broadcast %186 : vector<4x8x1xf32> to vector<4x8x8xf32>
    %188 = arith.subf %184, %187 : vector<4x8x8xf32>
    %189 = math.exp %188 : vector<4x8x8xf32>
    %cst_73 = arith.constant dense<0.000000e+00> : vector<4x8xf32>
    %190 = vector.multi_reduction <add>, %189, %cst_73 [2] : vector<4x8x8xf32> to vector<4x8xf32>
    %191 = vector.shape_cast %190 : vector<4x8xf32> to vector<4x8x1xf32>
    %192 = vector.broadcast %191 : vector<4x8x1xf32> to vector<4x8x8xf32>
    %193 = arith.divf %189, %192 : vector<4x8x8xf32>
    %194 = arith.truncf %193 : vector<4x8x8xf32> to vector<4x8x8xbf16>
    %195 = arith.truncf %181 : vector<4x8x4xf32> to vector<4x8x4xbf16>
    %cst_74 = arith.constant dense<0.000000e+00> : vector<4x8x4xf32>
    %196 = tpu.matmul %194, %195, %cst_74 {dimension_numbers = #tpu.dot_dimension_numbers<[2], [1], [1], [2], [0, 0, 0, 1, 1, 2], [0], [0]>} : vector<4x8x8xbf16>, vector<4x8x4xbf16>, vector<4x8x4xf32> -> vector<4x8x4xf32>
    %197 = vector.extract_strided_slice %196 {offsets = [0, 0, 0], sizes = [1, 8, 4], strides = [1, 1, 1]} : vector<4x8x4xf32> to vector<1x8x4xf32>
    %198 = vector.shape_cast %197 : vector<1x8x4xf32> to vector<8x4xf32>
    %199 = vector.extract_strided_slice %196 {offsets = [1, 0, 0], sizes = [1, 8, 4], strides = [1, 1, 1]} : vector<4x8x4xf32> to vector<1x8x4xf32>
    %200 = vector.shape_cast %199 : vector<1x8x4xf32> to vector<8x4xf32>
    %201 = vector.extract_strided_slice %196 {offsets = [2, 0, 0], sizes = [1, 8, 4], strides = [1, 1, 1]} : vector<4x8x4xf32> to vector<1x8x4xf32>
    %202 = vector.shape_cast %201 : vector<1x8x4xf32> to vector<8x4xf32>
    %203 = vector.extract_strided_slice %196 {offsets = [3, 0, 0], sizes = [1, 8, 4], strides = [1, 1, 1]} : vector<4x8x4xf32> to vector<1x8x4xf32>
    %204 = vector.shape_cast %203 : vector<1x8x4xf32> to vector<8x4xf32>
    %205 = tpu.concatenate %198, %200, %202, %204 in 1 : vector<8x4xf32>, vector<8x4xf32>, vector<8x4xf32>, vector<8x4xf32> -> vector<8x16xf32>
    %206 = arith.truncf %205 : vector<8x16xf32> to vector<8x16xbf16>
    %cst_75 = arith.constant dense<0.000000e+00> : vector<8x16xf32>
    %207 = tpu.matmul %206, %136, %cst_75 {dimension_numbers = #tpu.dot_dimension_numbers<[1], [0], [0], [1], [0, 0, 1, 1], [], []>} : vector<8x16xbf16>, vector<16x16xbf16>, vector<8x16xf32> -> vector<8x16xf32>
    %208 = vector.broadcast %137 : vector<1x16xf32> to vector<8x16xf32>
    %209 = arith.addf %207, %208 : vector<8x16xf32>
    %210 = arith.addf %133, %209 : vector<8x16xf32>
    %cst_76 = arith.constant dense<0.000000e+00> : vector<8xf32>
    %211 = vector.multi_reduction <add>, %210, %cst_76 [1] : vector<8x16xf32> to vector<8xf32>
    %212 = vector.shape_cast %211 : vector<8xf32> to vector<8x1xf32>
    %cst_77 = arith.constant 1.600000e+01 : f32
    %213 = vector.broadcast %cst_77 : f32 to vector<8x1xf32>
    %214 = arith.divf %212, %213 : vector<8x1xf32>
    %215 = vector.broadcast %214 : vector<8x1xf32> to vector<8x16xf32>
    %216 = arith.subf %210, %215 : vector<8x16xf32>
    %217 = arith.mulf %216, %216 : vector<8x16xf32>
    %cst_78 = arith.constant dense<0.000000e+00> : vector<8xf32>
    %218 = vector.multi_reduction <add>, %217, %cst_78 [1] : vector<8x16xf32> to vector<8xf32>
    %219 = vector.shape_cast %218 : vector<8xf32> to vector<8x1xf32>
    %cst_79 = arith.constant 1.600000e+01 : f32
    %220 = vector.broadcast %cst_79 : f32 to vector<8x1xf32>
    %221 = arith.divf %219, %220 : vector<8x1xf32>
    %222 = vector.broadcast %214 : vector<8x1xf32> to vector<8x16xf32>
    %223 = arith.subf %210, %222 : vector<8x16xf32>
    %cst_80 = arith.constant 9.99999974E-6 : f32
    %224 = vector.broadcast %cst_80 : f32 to vector<8x1xf32>
    %225 = arith.addf %221, %224 : vector<8x1xf32>
    %226 = math.rsqrt %225 : vector<8x1xf32>
    %227 = vector.broadcast %226 : vector<8x1xf32> to vector<8x16xf32>
    %228 = arith.mulf %223, %227 : vector<8x16xf32>
    %229 = vector.broadcast %142 : vector<1x16xf32> to vector<8x16xf32>
    %230 = arith.mulf %228, %229 : vector<8x16xf32>
    %231 = vector.broadcast %143 : vector<1x16xf32> to vector<8x16xf32>
    %232 = arith.addf %230, %231 : vector<8x16xf32>
    %233 = arith.truncf %232 : vector<8x16xf32> to vector<8x16xbf16>
    %cst_81 = arith.constant dense<0.000000e+00> : vector<8x64xf32>
    %234 = tpu.matmul %233, %138, %cst_81 {dimension_numbers = #tpu.dot_dimension_numbers<[1], [0], [0], [1], [0, 0, 1, 1], [], []>} : vector<8x16xbf16>, vector<16x64xbf16>, vector<8x64xf32> -> vector<8x64xf32>
    %235 = vector.broadcast %139 : vector<1x64xf32> to vector<8x64xf32>
    %236 = arith.addf %234, %235 : vector<8x64xf32>
    %cst_82 = arith.constant 0.000000e+00 : f32
    %237 = vector.broadcast %cst_82 : f32 to vector<8x64xf32>
    %238 = arith.maximumf %236, %237 : vector<8x64xf32>
    %239 = arith.truncf %238 : vector<8x64xf32> to vector<8x64xbf16>
    %cst_83 = arith.constant dense<0.000000e+00> : vector<8x16xf32>
    %240 = tpu.matmul %239, %140, %cst_83 {dimension_numbers = #tpu.dot_dimension_numbers<[1], [0], [0], [1], [0, 0, 1, 1], [], []>} : vector<8x64xbf16>, vector<64x16xbf16>, vector<8x16xf32> -> vector<8x16xf32>
    %241 = vector.broadcast %141 : vector<1x16xf32> to vector<8x16xf32>
    %242 = arith.addf %240, %241 : vector<8x16xf32>
    %243 = arith.addf %232, %242 : vector<8x16xf32>
    %cst_84 = arith.constant dense<0.000000e+00> : vector<8xf32>
    %244 = vector.multi_reduction <add>, %243, %cst_84 [1] : vector<8x16xf32> to vector<8xf32>
    %245 = vector.shape_cast %244 : vector<8xf32> to vector<8x1xf32>
    %cst_85 = arith.constant 1.600000e+01 : f32
    %246 = vector.broadcast %cst_85 : f32 to vector<8x1xf32>
    %247 = arith.divf %245, %246 : vector<8x1xf32>
    %248 = vector.broadcast %247 : vector<8x1xf32> to vector<8x16xf32>
    %249 = arith.subf %243, %248 : vector<8x16xf32>
    %250 = arith.mulf %249, %249 : vector<8x16xf32>
    %cst_86 = arith.constant dense<0.000000e+00> : vector<8xf32>
    %251 = vector.multi_reduction <add>, %250, %cst_86 [1] : vector<8x16xf32> to vector<8xf32>
    %252 = vector.shape_cast %251 : vector<8xf32> to vector<8x1xf32>
    %cst_87 = arith.constant 1.600000e+01 : f32
    %253 = vector.broadcast %cst_87 : f32 to vector<8x1xf32>
    %254 = arith.divf %252, %253 : vector<8x1xf32>
    %255 = vector.broadcast %247 : vector<8x1xf32> to vector<8x16xf32>
    %256 = arith.subf %243, %255 : vector<8x16xf32>
    %cst_88 = arith.constant 9.99999974E-6 : f32
    %257 = vector.broadcast %cst_88 : f32 to vector<8x1xf32>
    %258 = arith.addf %254, %257 : vector<8x1xf32>
    %259 = math.rsqrt %258 : vector<8x1xf32>
    %260 = vector.broadcast %259 : vector<8x1xf32> to vector<8x16xf32>
    %261 = arith.mulf %256, %260 : vector<8x16xf32>
    %262 = vector.broadcast %144 : vector<1x16xf32> to vector<8x16xf32>
    %263 = arith.mulf %261, %262 : vector<8x16xf32>
    %264 = vector.broadcast %145 : vector<1x16xf32> to vector<8x16xf32>
    %265 = arith.addf %263, %264 : vector<8x16xf32>
    %c0_89 = arith.constant 0 : index
    %c0_90 = arith.constant 0 : index
    %266 = vector.load %arg26[%c0_89, %c0_90] : memref<16x128xbf16, #tpu.memory_space<vmem>>, vector<16x128xbf16>
    %c0_91 = arith.constant 0 : index
    %c0_92 = arith.constant 0 : index
    %267 = vector.load %arg27[%c0_91, %c0_92] : memref<32x128xbf16, #tpu.memory_space<vmem>>, vector<32x128xbf16>
    %c0_93 = arith.constant 0 : index
    %c0_94 = arith.constant 0 : index
    %268 = vector.load %arg28[%c0_93, %c0_94] : memref<1x128xf32, #tpu.memory_space<vmem>>, vector<1x128xf32>
    %269 = arith.truncf %265 : vector<8x16xf32> to vector<8x16xbf16>
    %cst_95 = arith.constant dense<0.000000e+00> : vector<8x128xf32>
    %270 = tpu.matmul %269, %266, %cst_95 {dimension_numbers = #tpu.dot_dimension_numbers<[1], [0], [0], [1], [0, 0, 1, 1], [], []>} : vector<8x16xbf16>, vector<16x128xbf16>, vector<8x128xf32> -> vector<8x128xf32>
    %271 = vector.broadcast %268 : vector<1x128xf32> to vector<8x128xf32>
    %272 = arith.addf %270, %271 : vector<8x128xf32>
    %cst_96 = arith.constant 0.000000e+00 : f32
    %273 = vector.broadcast %cst_96 : f32 to vector<1x32xf32>
    %cst_97 = arith.constant 0.000000e+00 : f32
    %274 = vector.broadcast %cst_97 : f32 to vector<1x32xf32>
    %275 = vector.extract_strided_slice %272 {offsets = [0, 0], sizes = [1, 128], strides = [1, 1]} : vector<8x128xf32> to vector<1x128xf32>
    %276 = arith.truncf %273 : vector<1x32xf32> to vector<1x32xbf16>
    %cst_98 = arith.constant dense<0.000000e+00> : vector<1x128xf32>
    %277 = tpu.matmul %276, %267, %cst_98 {dimension_numbers = #tpu.dot_dimension_numbers<[1], [0], [0], [1], [0, 0, 1, 1], [], []>} : vector<1x32xbf16>, vector<32x128xbf16>, vector<1x128xf32> -> vector<1x128xf32>
    %278 = arith.addf %275, %277 : vector<1x128xf32>
    %279 = vector.extract_strided_slice %278 {offsets = [0, 0], sizes = [1, 96], strides = [1, 1]} : vector<1x128xf32> to vector<1x96xf32>
    %280 = arith.negf %279 : vector<1x96xf32>
    %281 = math.exp %280 : vector<1x96xf32>
    %cst_99 = arith.constant 1.000000e+00 : f32
    %282 = vector.broadcast %cst_99 : f32 to vector<1x96xf32>
    %283 = arith.addf %282, %281 : vector<1x96xf32>
    %284 = arith.divf %282, %283 : vector<1x96xf32>
    %285 = vector.extract_strided_slice %278 {offsets = [0, 96], sizes = [1, 32], strides = [1, 1]} : vector<1x128xf32> to vector<1x32xf32>
    %286 = math.tanh %285 : vector<1x32xf32>
    %287 = vector.extract_strided_slice %284 {offsets = [0, 0], sizes = [1, 32], strides = [1, 1]} : vector<1x96xf32> to vector<1x32xf32>
    %288 = vector.extract_strided_slice %284 {offsets = [0, 32], sizes = [1, 32], strides = [1, 1]} : vector<1x96xf32> to vector<1x32xf32>
    %289 = vector.extract_strided_slice %284 {offsets = [0, 64], sizes = [1, 32], strides = [1, 1]} : vector<1x96xf32> to vector<1x32xf32>
    %290 = arith.mulf %288, %274 : vector<1x32xf32>
    %291 = arith.mulf %287, %286 : vector<1x32xf32>
    %292 = arith.addf %290, %291 : vector<1x32xf32>
    %293 = math.tanh %292 : vector<1x32xf32>
    %294 = arith.mulf %289, %293 : vector<1x32xf32>
    %c0_100 = arith.constant 0 : index
    %c0_101 = arith.constant 0 : index
    %295 = vector.load %arg35[%c0_100, %c0_101] : memref<8x32xf32, #tpu.memory_space<vmem>>, vector<1x32xf32>
    tpu.vector_store %arg35[%c0_100, %c0_101], %294 {strides = array<i32>} : memref<8x32xf32, #tpu.memory_space<vmem>>, vector<1x32xf32>,
    %296 = vector.extract_strided_slice %272 {offsets = [1, 0], sizes = [1, 128], strides = [1, 1]} : vector<8x128xf32> to vector<1x128xf32>
    %297 = arith.truncf %294 : vector<1x32xf32> to vector<1x32xbf16>
    %cst_102 = arith.constant dense<0.000000e+00> : vector<1x128xf32>
    %298 = tpu.matmul %297, %267, %cst_102 {dimension_numbers = #tpu.dot_dimension_numbers<[1], [0], [0], [1], [0, 0, 1, 1], [], []>} : vector<1x32xbf16>, vector<32x128xbf16>, vector<1x128xf32> -> vector<1x128xf32>
    %299 = arith.addf %296, %298 : vector<1x128xf32>
    %300 = vector.extract_strided_slice %299 {offsets = [0, 0], sizes = [1, 96], strides = [1, 1]} : vector<1x128xf32> to vector<1x96xf32>
    %301 = arith.negf %300 : vector<1x96xf32>
    %302 = math.exp %301 : vector<1x96xf32>
    %cst_103 = arith.constant 1.000000e+00 : f32
    %303 = vector.broadcast %cst_103 : f32 to vector<1x96xf32>
    %304 = arith.addf %303, %302 : vector<1x96xf32>
    %305 = arith.divf %303, %304 : vector<1x96xf32>
    %306 = vector.extract_strided_slice %299 {offsets = [0, 96], sizes = [1, 32], strides = [1, 1]} : vector<1x128xf32> to vector<1x32xf32>
    %307 = math.tanh %306 : vector<1x32xf32>
    %308 = vector.extract_strided_slice %305 {offsets = [0, 0], sizes = [1, 32], strides = [1, 1]} : vector<1x96xf32> to vector<1x32xf32>
    %309 = vector.extract_strided_slice %305 {offsets = [0, 32], sizes = [1, 32], strides = [1, 1]} : vector<1x96xf32> to vector<1x32xf32>
    %310 = vector.extract_strided_slice %305 {offsets = [0, 64], sizes = [1, 32], strides = [1, 1]} : vector<1x96xf32> to vector<1x32xf32>
    %311 = arith.mulf %309, %292 : vector<1x32xf32>
    %312 = arith.mulf %308, %307 : vector<1x32xf32>
    %313 = arith.addf %311, %312 : vector<1x32xf32>
    %314 = math.tanh %313 : vector<1x32xf32>
    %315 = arith.mulf %310, %314 : vector<1x32xf32>
    %c1 = arith.constant 1 : index
    %c0_104 = arith.constant 0 : index
    %316 = vector.load %arg35[%c1, %c0_104] : memref<8x32xf32, #tpu.memory_space<vmem>>, vector<1x32xf32>
    tpu.vector_store %arg35[%c1, %c0_104], %315 {strides = array<i32>} : memref<8x32xf32, #tpu.memory_space<vmem>>, vector<1x32xf32>,
    %317 = vector.extract_strided_slice %272 {offsets = [2, 0], sizes = [1, 128], strides = [1, 1]} : vector<8x128xf32> to vector<1x128xf32>
    %318 = arith.truncf %315 : vector<1x32xf32> to vector<1x32xbf16>
    %cst_105 = arith.constant dense<0.000000e+00> : vector<1x128xf32>
    %319 = tpu.matmul %318, %267, %cst_105 {dimension_numbers = #tpu.dot_dimension_numbers<[1], [0], [0], [1], [0, 0, 1, 1], [], []>} : vector<1x32xbf16>, vector<32x128xbf16>, vector<1x128xf32> -> vector<1x128xf32>
    %320 = arith.addf %317, %319 : vector<1x128xf32>
    %321 = vector.extract_strided_slice %320 {offsets = [0, 0], sizes = [1, 96], strides = [1, 1]} : vector<1x128xf32> to vector<1x96xf32>
    %322 = arith.negf %321 : vector<1x96xf32>
    %323 = math.exp %322 : vector<1x96xf32>
    %cst_106 = arith.constant 1.000000e+00 : f32
    %324 = vector.broadcast %cst_106 : f32 to vector<1x96xf32>
    %325 = arith.addf %324, %323 : vector<1x96xf32>
    %326 = arith.divf %324, %325 : vector<1x96xf32>
    %327 = vector.extract_strided_slice %320 {offsets = [0, 96], sizes = [1, 32], strides = [1, 1]} : vector<1x128xf32> to vector<1x32xf32>
    %328 = math.tanh %327 : vector<1x32xf32>
    %329 = vector.extract_strided_slice %326 {offsets = [0, 0], sizes = [1, 32], strides = [1, 1]} : vector<1x96xf32> to vector<1x32xf32>
    %330 = vector.extract_strided_slice %326 {offsets = [0, 32], sizes = [1, 32], strides = [1, 1]} : vector<1x96xf32> to vector<1x32xf32>
    %331 = vector.extract_strided_slice %326 {offsets = [0, 64], sizes = [1, 32], strides = [1, 1]} : vector<1x96xf32> to vector<1x32xf32>
    %332 = arith.mulf %330, %313 : vector<1x32xf32>
    %333 = arith.mulf %329, %328 : vector<1x32xf32>
    %334 = arith.addf %332, %333 : vector<1x32xf32>
    %335 = math.tanh %334 : vector<1x32xf32>
    %336 = arith.mulf %331, %335 : vector<1x32xf32>
    %c2 = arith.constant 2 : index
    %c0_107 = arith.constant 0 : index
    %337 = vector.load %arg35[%c2, %c0_107] : memref<8x32xf32, #tpu.memory_space<vmem>>, vector<1x32xf32>
    tpu.vector_store %arg35[%c2, %c0_107], %336 {strides = array<i32>} : memref<8x32xf32, #tpu.memory_space<vmem>>, vector<1x32xf32>,
    %338 = vector.extract_strided_slice %272 {offsets = [3, 0], sizes = [1, 128], strides = [1, 1]} : vector<8x128xf32> to vector<1x128xf32>
    %339 = arith.truncf %336 : vector<1x32xf32> to vector<1x32xbf16>
    %cst_108 = arith.constant dense<0.000000e+00> : vector<1x128xf32>
    %340 = tpu.matmul %339, %267, %cst_108 {dimension_numbers = #tpu.dot_dimension_numbers<[1], [0], [0], [1], [0, 0, 1, 1], [], []>} : vector<1x32xbf16>, vector<32x128xbf16>, vector<1x128xf32> -> vector<1x128xf32>
    %341 = arith.addf %338, %340 : vector<1x128xf32>
    %342 = vector.extract_strided_slice %341 {offsets = [0, 0], sizes = [1, 96], strides = [1, 1]} : vector<1x128xf32> to vector<1x96xf32>
    %343 = arith.negf %342 : vector<1x96xf32>
    %344 = math.exp %343 : vector<1x96xf32>
    %cst_109 = arith.constant 1.000000e+00 : f32
    %345 = vector.broadcast %cst_109 : f32 to vector<1x96xf32>
    %346 = arith.addf %345, %344 : vector<1x96xf32>
    %347 = arith.divf %345, %346 : vector<1x96xf32>
    %348 = vector.extract_strided_slice %341 {offsets = [0, 96], sizes = [1, 32], strides = [1, 1]} : vector<1x128xf32> to vector<1x32xf32>
    %349 = math.tanh %348 : vector<1x32xf32>
    %350 = vector.extract_strided_slice %347 {offsets = [0, 0], sizes = [1, 32], strides = [1, 1]} : vector<1x96xf32> to vector<1x32xf32>
    %351 = vector.extract_strided_slice %347 {offsets = [0, 32], sizes = [1, 32], strides = [1, 1]} : vector<1x96xf32> to vector<1x32xf32>
    %352 = vector.extract_strided_slice %347 {offsets = [0, 64], sizes = [1, 32], strides = [1, 1]} : vector<1x96xf32> to vector<1x32xf32>
    %353 = arith.mulf %351, %334 : vector<1x32xf32>
    %354 = arith.mulf %350, %349 : vector<1x32xf32>
    %355 = arith.addf %353, %354 : vector<1x32xf32>
    %356 = math.tanh %355 : vector<1x32xf32>
    %357 = arith.mulf %352, %356 : vector<1x32xf32>
    %c3 = arith.constant 3 : index
    %c0_110 = arith.constant 0 : index
    %358 = vector.load %arg35[%c3, %c0_110] : memref<8x32xf32, #tpu.memory_space<vmem>>, vector<1x32xf32>
    tpu.vector_store %arg35[%c3, %c0_110], %357 {strides = array<i32>} : memref<8x32xf32, #tpu.memory_space<vmem>>, vector<1x32xf32>,
    %359 = vector.extract_strided_slice %272 {offsets = [4, 0], sizes = [1, 128], strides = [1, 1]} : vector<8x128xf32> to vector<1x128xf32>
    %360 = arith.truncf %357 : vector<1x32xf32> to vector<1x32xbf16>
    %cst_111 = arith.constant dense<0.000000e+00> : vector<1x128xf32>
    %361 = tpu.matmul %360, %267, %cst_111 {dimension_numbers = #tpu.dot_dimension_numbers<[1], [0], [0], [1], [0, 0, 1, 1], [], []>} : vector<1x32xbf16>, vector<32x128xbf16>, vector<1x128xf32> -> vector<1x128xf32>
    %362 = arith.addf %359, %361 : vector<1x128xf32>
    %363 = vector.extract_strided_slice %362 {offsets = [0, 0], sizes = [1, 96], strides = [1, 1]} : vector<1x128xf32> to vector<1x96xf32>
    %364 = arith.negf %363 : vector<1x96xf32>
    %365 = math.exp %364 : vector<1x96xf32>
    %cst_112 = arith.constant 1.000000e+00 : f32
    %366 = vector.broadcast %cst_112 : f32 to vector<1x96xf32>
    %367 = arith.addf %366, %365 : vector<1x96xf32>
    %368 = arith.divf %366, %367 : vector<1x96xf32>
    %369 = vector.extract_strided_slice %362 {offsets = [0, 96], sizes = [1, 32], strides = [1, 1]} : vector<1x128xf32> to vector<1x32xf32>
    %370 = math.tanh %369 : vector<1x32xf32>
    %371 = vector.extract_strided_slice %368 {offsets = [0, 0], sizes = [1, 32], strides = [1, 1]} : vector<1x96xf32> to vector<1x32xf32>
    %372 = vector.extract_strided_slice %368 {offsets = [0, 32], sizes = [1, 32], strides = [1, 1]} : vector<1x96xf32> to vector<1x32xf32>
    %373 = vector.extract_strided_slice %368 {offsets = [0, 64], sizes = [1, 32], strides = [1, 1]} : vector<1x96xf32> to vector<1x32xf32>
    %374 = arith.mulf %372, %355 : vector<1x32xf32>
    %375 = arith.mulf %371, %370 : vector<1x32xf32>
    %376 = arith.addf %374, %375 : vector<1x32xf32>
    %377 = math.tanh %376 : vector<1x32xf32>
    %378 = arith.mulf %373, %377 : vector<1x32xf32>
    %c4 = arith.constant 4 : index
    %c0_113 = arith.constant 0 : index
    %379 = vector.load %arg35[%c4, %c0_113] : memref<8x32xf32, #tpu.memory_space<vmem>>, vector<1x32xf32>
    tpu.vector_store %arg35[%c4, %c0_113], %378 {strides = array<i32>} : memref<8x32xf32, #tpu.memory_space<vmem>>, vector<1x32xf32>,
    %380 = vector.extract_strided_slice %272 {offsets = [5, 0], sizes = [1, 128], strides = [1, 1]} : vector<8x128xf32> to vector<1x128xf32>
    %381 = arith.truncf %378 : vector<1x32xf32> to vector<1x32xbf16>
    %cst_114 = arith.constant dense<0.000000e+00> : vector<1x128xf32>
    %382 = tpu.matmul %381, %267, %cst_114 {dimension_numbers = #tpu.dot_dimension_numbers<[1], [0], [0], [1], [0, 0, 1, 1], [], []>} : vector<1x32xbf16>, vector<32x128xbf16>, vector<1x128xf32> -> vector<1x128xf32>
    %383 = arith.addf %380, %382 : vector<1x128xf32>
    %384 = vector.extract_strided_slice %383 {offsets = [0, 0], sizes = [1, 96], strides = [1, 1]} : vector<1x128xf32> to vector<1x96xf32>
    %385 = arith.negf %384 : vector<1x96xf32>
    %386 = math.exp %385 : vector<1x96xf32>
    %cst_115 = arith.constant 1.000000e+00 : f32
    %387 = vector.broadcast %cst_115 : f32 to vector<1x96xf32>
    %388 = arith.addf %387, %386 : vector<1x96xf32>
    %389 = arith.divf %387, %388 : vector<1x96xf32>
    %390 = vector.extract_strided_slice %383 {offsets = [0, 96], sizes = [1, 32], strides = [1, 1]} : vector<1x128xf32> to vector<1x32xf32>
    %391 = math.tanh %390 : vector<1x32xf32>
    %392 = vector.extract_strided_slice %389 {offsets = [0, 0], sizes = [1, 32], strides = [1, 1]} : vector<1x96xf32> to vector<1x32xf32>
    %393 = vector.extract_strided_slice %389 {offsets = [0, 32], sizes = [1, 32], strides = [1, 1]} : vector<1x96xf32> to vector<1x32xf32>
    %394 = vector.extract_strided_slice %389 {offsets = [0, 64], sizes = [1, 32], strides = [1, 1]} : vector<1x96xf32> to vector<1x32xf32>
    %395 = arith.mulf %393, %376 : vector<1x32xf32>
    %396 = arith.mulf %392, %391 : vector<1x32xf32>
    %397 = arith.addf %395, %396 : vector<1x32xf32>
    %398 = math.tanh %397 : vector<1x32xf32>
    %399 = arith.mulf %394, %398 : vector<1x32xf32>
    %c5 = arith.constant 5 : index
    %c0_116 = arith.constant 0 : index
    %400 = vector.load %arg35[%c5, %c0_116] : memref<8x32xf32, #tpu.memory_space<vmem>>, vector<1x32xf32>
    tpu.vector_store %arg35[%c5, %c0_116], %399 {strides = array<i32>} : memref<8x32xf32, #tpu.memory_space<vmem>>, vector<1x32xf32>,
    %401 = vector.extract_strided_slice %272 {offsets = [6, 0], sizes = [1, 128], strides = [1, 1]} : vector<8x128xf32> to vector<1x128xf32>
    %402 = arith.truncf %399 : vector<1x32xf32> to vector<1x32xbf16>
    %cst_117 = arith.constant dense<0.000000e+00> : vector<1x128xf32>
    %403 = tpu.matmul %402, %267, %cst_117 {dimension_numbers = #tpu.dot_dimension_numbers<[1], [0], [0], [1], [0, 0, 1, 1], [], []>} : vector<1x32xbf16>, vector<32x128xbf16>, vector<1x128xf32> -> vector<1x128xf32>
    %404 = arith.addf %401, %403 : vector<1x128xf32>
    %405 = vector.extract_strided_slice %404 {offsets = [0, 0], sizes = [1, 96], strides = [1, 1]} : vector<1x128xf32> to vector<1x96xf32>
    %406 = arith.negf %405 : vector<1x96xf32>
    %407 = math.exp %406 : vector<1x96xf32>
    %cst_118 = arith.constant 1.000000e+00 : f32
    %408 = vector.broadcast %cst_118 : f32 to vector<1x96xf32>
    %409 = arith.addf %408, %407 : vector<1x96xf32>
    %410 = arith.divf %408, %409 : vector<1x96xf32>
    %411 = vector.extract_strided_slice %404 {offsets = [0, 96], sizes = [1, 32], strides = [1, 1]} : vector<1x128xf32> to vector<1x32xf32>
    %412 = math.tanh %411 : vector<1x32xf32>
    %413 = vector.extract_strided_slice %410 {offsets = [0, 0], sizes = [1, 32], strides = [1, 1]} : vector<1x96xf32> to vector<1x32xf32>
    %414 = vector.extract_strided_slice %410 {offsets = [0, 32], sizes = [1, 32], strides = [1, 1]} : vector<1x96xf32> to vector<1x32xf32>
    %415 = vector.extract_strided_slice %410 {offsets = [0, 64], sizes = [1, 32], strides = [1, 1]} : vector<1x96xf32> to vector<1x32xf32>
    %416 = arith.mulf %414, %397 : vector<1x32xf32>
    %417 = arith.mulf %413, %412 : vector<1x32xf32>
    %418 = arith.addf %416, %417 : vector<1x32xf32>
    %419 = math.tanh %418 : vector<1x32xf32>
    %420 = arith.mulf %415, %419 : vector<1x32xf32>
    %c6 = arith.constant 6 : index
    %c0_119 = arith.constant 0 : index
    %421 = vector.load %arg35[%c6, %c0_119] : memref<8x32xf32, #tpu.memory_space<vmem>>, vector<1x32xf32>
    tpu.vector_store %arg35[%c6, %c0_119], %420 {strides = array<i32>} : memref<8x32xf32, #tpu.memory_space<vmem>>, vector<1x32xf32>,
    %422 = vector.extract_strided_slice %272 {offsets = [7, 0], sizes = [1, 128], strides = [1, 1]} : vector<8x128xf32> to vector<1x128xf32>
    %423 = arith.truncf %420 : vector<1x32xf32> to vector<1x32xbf16>
    %cst_120 = arith.constant dense<0.000000e+00> : vector<1x128xf32>
    %424 = tpu.matmul %423, %267, %cst_120 {dimension_numbers = #tpu.dot_dimension_numbers<[1], [0], [0], [1], [0, 0, 1, 1], [], []>} : vector<1x32xbf16>, vector<32x128xbf16>, vector<1x128xf32> -> vector<1x128xf32>
    %425 = arith.addf %422, %424 : vector<1x128xf32>
    %426 = vector.extract_strided_slice %425 {offsets = [0, 0], sizes = [1, 96], strides = [1, 1]} : vector<1x128xf32> to vector<1x96xf32>
    %427 = arith.negf %426 : vector<1x96xf32>
    %428 = math.exp %427 : vector<1x96xf32>
    %cst_121 = arith.constant 1.000000e+00 : f32
    %429 = vector.broadcast %cst_121 : f32 to vector<1x96xf32>
    %430 = arith.addf %429, %428 : vector<1x96xf32>
    %431 = arith.divf %429, %430 : vector<1x96xf32>
    %432 = vector.extract_strided_slice %425 {offsets = [0, 96], sizes = [1, 32], strides = [1, 1]} : vector<1x128xf32> to vector<1x32xf32>
    %433 = math.tanh %432 : vector<1x32xf32>
    %434 = vector.extract_strided_slice %431 {offsets = [0, 0], sizes = [1, 32], strides = [1, 1]} : vector<1x96xf32> to vector<1x32xf32>
    %435 = vector.extract_strided_slice %431 {offsets = [0, 32], sizes = [1, 32], strides = [1, 1]} : vector<1x96xf32> to vector<1x32xf32>
    %436 = vector.extract_strided_slice %431 {offsets = [0, 64], sizes = [1, 32], strides = [1, 1]} : vector<1x96xf32> to vector<1x32xf32>
    %437 = arith.mulf %435, %418 : vector<1x32xf32>
    %438 = arith.mulf %434, %433 : vector<1x32xf32>
    %439 = arith.addf %437, %438 : vector<1x32xf32>
    %440 = math.tanh %439 : vector<1x32xf32>
    %441 = arith.mulf %436, %440 : vector<1x32xf32>
    %c7 = arith.constant 7 : index
    %c0_122 = arith.constant 0 : index
    %442 = vector.load %arg35[%c7, %c0_122] : memref<8x32xf32, #tpu.memory_space<vmem>>, vector<1x32xf32>
    tpu.vector_store %arg35[%c7, %c0_122], %441 {strides = array<i32>} : memref<8x32xf32, #tpu.memory_space<vmem>>, vector<1x32xf32>,
    %c0_123 = arith.constant 0 : index
    %c0_124 = arith.constant 0 : index
    %443 = vector.load %arg35[%c0_123, %c0_124] : memref<8x32xf32, #tpu.memory_space<vmem>>, vector<8x32xf32>
    %c0_125 = arith.constant 0 : index
    %c0_126 = arith.constant 0 : index
    %444 = vector.load %arg29[%c0_125, %c0_126] : memref<32x128xbf16, #tpu.memory_space<vmem>>, vector<32x128xbf16>
    %c0_127 = arith.constant 0 : index
    %c0_128 = arith.constant 0 : index
    %445 = vector.load %arg30[%c0_127, %c0_128] : memref<32x128xbf16, #tpu.memory_space<vmem>>, vector<32x128xbf16>
    %c0_129 = arith.constant 0 : index
    %c0_130 = arith.constant 0 : index
    %446 = vector.load %arg31[%c0_129, %c0_130] : memref<1x128xf32, #tpu.memory_space<vmem>>, vector<1x128xf32>
    %447 = arith.truncf %443 : vector<8x32xf32> to vector<8x32xbf16>
    %cst_131 = arith.constant dense<0.000000e+00> : vector<8x128xf32>
    %448 = tpu.matmul %447, %444, %cst_131 {dimension_numbers = #tpu.dot_dimension_numbers<[1], [0], [0], [1], [0, 0, 1, 1], [], []>} : vector<8x32xbf16>, vector<32x128xbf16>, vector<8x128xf32> -> vector<8x128xf32>
    %449 = vector.broadcast %446 : vector<1x128xf32> to vector<8x128xf32>
    %450 = arith.addf %448, %449 : vector<8x128xf32>
    %cst_132 = arith.constant 0.000000e+00 : f32
    %451 = vector.broadcast %cst_132 : f32 to vector<1x32xf32>
    %cst_133 = arith.constant 0.000000e+00 : f32
    %452 = vector.broadcast %cst_133 : f32 to vector<1x32xf32>
    %453 = vector.extract_strided_slice %450 {offsets = [0, 0], sizes = [1, 128], strides = [1, 1]} : vector<8x128xf32> to vector<1x128xf32>
    %454 = arith.truncf %451 : vector<1x32xf32> to vector<1x32xbf16>
    %cst_134 = arith.constant dense<0.000000e+00> : vector<1x128xf32>
    %455 = tpu.matmul %454, %445, %cst_134 {dimension_numbers = #tpu.dot_dimension_numbers<[1], [0], [0], [1], [0, 0, 1, 1], [], []>} : vector<1x32xbf16>, vector<32x128xbf16>, vector<1x128xf32> -> vector<1x128xf32>
    %456 = arith.addf %453, %455 : vector<1x128xf32>
    %457 = vector.extract_strided_slice %456 {offsets = [0, 0], sizes = [1, 96], strides = [1, 1]} : vector<1x128xf32> to vector<1x96xf32>
    %458 = arith.negf %457 : vector<1x96xf32>
    %459 = math.exp %458 : vector<1x96xf32>
    %cst_135 = arith.constant 1.000000e+00 : f32
    %460 = vector.broadcast %cst_135 : f32 to vector<1x96xf32>
    %461 = arith.addf %460, %459 : vector<1x96xf32>
    %462 = arith.divf %460, %461 : vector<1x96xf32>
    %463 = vector.extract_strided_slice %456 {offsets = [0, 96], sizes = [1, 32], strides = [1, 1]} : vector<1x128xf32> to vector<1x32xf32>
    %464 = math.tanh %463 : vector<1x32xf32>
    %465 = vector.extract_strided_slice %462 {offsets = [0, 0], sizes = [1, 32], strides = [1, 1]} : vector<1x96xf32> to vector<1x32xf32>
    %466 = vector.extract_strided_slice %462 {offsets = [0, 32], sizes = [1, 32], strides = [1, 1]} : vector<1x96xf32> to vector<1x32xf32>
    %467 = vector.extract_strided_slice %462 {offsets = [0, 64], sizes = [1, 32], strides = [1, 1]} : vector<1x96xf32> to vector<1x32xf32>
    %468 = arith.mulf %466, %452 : vector<1x32xf32>
    %469 = arith.mulf %465, %464 : vector<1x32xf32>
    %470 = arith.addf %468, %469 : vector<1x32xf32>
    %471 = math.tanh %470 : vector<1x32xf32>
    %472 = arith.mulf %467, %471 : vector<1x32xf32>
    %c0_136 = arith.constant 0 : index
    %c0_137 = arith.constant 0 : index
    %473 = vector.load %arg35[%c0_136, %c0_137] : memref<8x32xf32, #tpu.memory_space<vmem>>, vector<1x32xf32>
    tpu.vector_store %arg35[%c0_136, %c0_137], %472 {strides = array<i32>} : memref<8x32xf32, #tpu.memory_space<vmem>>, vector<1x32xf32>,
    %474 = vector.extract_strided_slice %450 {offsets = [1, 0], sizes = [1, 128], strides = [1, 1]} : vector<8x128xf32> to vector<1x128xf32>
    %475 = arith.truncf %472 : vector<1x32xf32> to vector<1x32xbf16>
    %cst_138 = arith.constant dense<0.000000e+00> : vector<1x128xf32>
    %476 = tpu.matmul %475, %445, %cst_138 {dimension_numbers = #tpu.dot_dimension_numbers<[1], [0], [0], [1], [0, 0, 1, 1], [], []>} : vector<1x32xbf16>, vector<32x128xbf16>, vector<1x128xf32> -> vector<1x128xf32>
    %477 = arith.addf %474, %476 : vector<1x128xf32>
    %478 = vector.extract_strided_slice %477 {offsets = [0, 0], sizes = [1, 96], strides = [1, 1]} : vector<1x128xf32> to vector<1x96xf32>
    %479 = arith.negf %478 : vector<1x96xf32>
    %480 = math.exp %479 : vector<1x96xf32>
    %cst_139 = arith.constant 1.000000e+00 : f32
    %481 = vector.broadcast %cst_139 : f32 to vector<1x96xf32>
    %482 = arith.addf %481, %480 : vector<1x96xf32>
    %483 = arith.divf %481, %482 : vector<1x96xf32>
    %484 = vector.extract_strided_slice %477 {offsets = [0, 96], sizes = [1, 32], strides = [1, 1]} : vector<1x128xf32> to vector<1x32xf32>
    %485 = math.tanh %484 : vector<1x32xf32>
    %486 = vector.extract_strided_slice %483 {offsets = [0, 0], sizes = [1, 32], strides = [1, 1]} : vector<1x96xf32> to vector<1x32xf32>
    %487 = vector.extract_strided_slice %483 {offsets = [0, 32], sizes = [1, 32], strides = [1, 1]} : vector<1x96xf32> to vector<1x32xf32>
    %488 = vector.extract_strided_slice %483 {offsets = [0, 64], sizes = [1, 32], strides = [1, 1]} : vector<1x96xf32> to vector<1x32xf32>
    %489 = arith.mulf %487, %470 : vector<1x32xf32>
    %490 = arith.mulf %486, %485 : vector<1x32xf32>
    %491 = arith.addf %489, %490 : vector<1x32xf32>
    %492 = math.tanh %491 : vector<1x32xf32>
    %493 = arith.mulf %488, %492 : vector<1x32xf32>
    %c1_140 = arith.constant 1 : index
    %c0_141 = arith.constant 0 : index
    %494 = vector.load %arg35[%c1_140, %c0_141] : memref<8x32xf32, #tpu.memory_space<vmem>>, vector<1x32xf32>
    tpu.vector_store %arg35[%c1_140, %c0_141], %493 {strides = array<i32>} : memref<8x32xf32, #tpu.memory_space<vmem>>, vector<1x32xf32>,
    %495 = vector.extract_strided_slice %450 {offsets = [2, 0], sizes = [1, 128], strides = [1, 1]} : vector<8x128xf32> to vector<1x128xf32>
    %496 = arith.truncf %493 : vector<1x32xf32> to vector<1x32xbf16>
    %cst_142 = arith.constant dense<0.000000e+00> : vector<1x128xf32>
    %497 = tpu.matmul %496, %445, %cst_142 {dimension_numbers = #tpu.dot_dimension_numbers<[1], [0], [0], [1], [0, 0, 1, 1], [], []>} : vector<1x32xbf16>, vector<32x128xbf16>, vector<1x128xf32> -> vector<1x128xf32>
    %498 = arith.addf %495, %497 : vector<1x128xf32>
    %499 = vector.extract_strided_slice %498 {offsets = [0, 0], sizes = [1, 96], strides = [1, 1]} : vector<1x128xf32> to vector<1x96xf32>
    %500 = arith.negf %499 : vector<1x96xf32>
    %501 = math.exp %500 : vector<1x96xf32>
    %cst_143 = arith.constant 1.000000e+00 : f32
    %502 = vector.broadcast %cst_143 : f32 to vector<1x96xf32>
    %503 = arith.addf %502, %501 : vector<1x96xf32>
    %504 = arith.divf %502, %503 : vector<1x96xf32>
    %505 = vector.extract_strided_slice %498 {offsets = [0, 96], sizes = [1, 32], strides = [1, 1]} : vector<1x128xf32> to vector<1x32xf32>
    %506 = math.tanh %505 : vector<1x32xf32>
    %507 = vector.extract_strided_slice %504 {offsets = [0, 0], sizes = [1, 32], strides = [1, 1]} : vector<1x96xf32> to vector<1x32xf32>
    %508 = vector.extract_strided_slice %504 {offsets = [0, 32], sizes = [1, 32], strides = [1, 1]} : vector<1x96xf32> to vector<1x32xf32>
    %509 = vector.extract_strided_slice %504 {offsets = [0, 64], sizes = [1, 32], strides = [1, 1]} : vector<1x96xf32> to vector<1x32xf32>
    %510 = arith.mulf %508, %491 : vector<1x32xf32>
    %511 = arith.mulf %507, %506 : vector<1x32xf32>
    %512 = arith.addf %510, %511 : vector<1x32xf32>
    %513 = math.tanh %512 : vector<1x32xf32>
    %514 = arith.mulf %509, %513 : vector<1x32xf32>
    %c2_144 = arith.constant 2 : index
    %c0_145 = arith.constant 0 : index
    %515 = vector.load %arg35[%c2_144, %c0_145] : memref<8x32xf32, #tpu.memory_space<vmem>>, vector<1x32xf32>
    tpu.vector_store %arg35[%c2_144, %c0_145], %514 {strides = array<i32>} : memref<8x32xf32, #tpu.memory_space<vmem>>, vector<1x32xf32>,
    %516 = vector.extract_strided_slice %450 {offsets = [3, 0], sizes = [1, 128], strides = [1, 1]} : vector<8x128xf32> to vector<1x128xf32>
    %517 = arith.truncf %514 : vector<1x32xf32> to vector<1x32xbf16>
    %cst_146 = arith.constant dense<0.000000e+00> : vector<1x128xf32>
    %518 = tpu.matmul %517, %445, %cst_146 {dimension_numbers = #tpu.dot_dimension_numbers<[1], [0], [0], [1], [0, 0, 1, 1], [], []>} : vector<1x32xbf16>, vector<32x128xbf16>, vector<1x128xf32> -> vector<1x128xf32>
    %519 = arith.addf %516, %518 : vector<1x128xf32>
    %520 = vector.extract_strided_slice %519 {offsets = [0, 0], sizes = [1, 96], strides = [1, 1]} : vector<1x128xf32> to vector<1x96xf32>
    %521 = arith.negf %520 : vector<1x96xf32>
    %522 = math.exp %521 : vector<1x96xf32>
    %cst_147 = arith.constant 1.000000e+00 : f32
    %523 = vector.broadcast %cst_147 : f32 to vector<1x96xf32>
    %524 = arith.addf %523, %522 : vector<1x96xf32>
    %525 = arith.divf %523, %524 : vector<1x96xf32>
    %526 = vector.extract_strided_slice %519 {offsets = [0, 96], sizes = [1, 32], strides = [1, 1]} : vector<1x128xf32> to vector<1x32xf32>
    %527 = math.tanh %526 : vector<1x32xf32>
    %528 = vector.extract_strided_slice %525 {offsets = [0, 0], sizes = [1, 32], strides = [1, 1]} : vector<1x96xf32> to vector<1x32xf32>
    %529 = vector.extract_strided_slice %525 {offsets = [0, 32], sizes = [1, 32], strides = [1, 1]} : vector<1x96xf32> to vector<1x32xf32>
    %530 = vector.extract_strided_slice %525 {offsets = [0, 64], sizes = [1, 32], strides = [1, 1]} : vector<1x96xf32> to vector<1x32xf32>
    %531 = arith.mulf %529, %512 : vector<1x32xf32>
    %532 = arith.mulf %528, %527 : vector<1x32xf32>
    %533 = arith.addf %531, %532 : vector<1x32xf32>
    %534 = math.tanh %533 : vector<1x32xf32>
    %535 = arith.mulf %530, %534 : vector<1x32xf32>
    %c3_148 = arith.constant 3 : index
    %c0_149 = arith.constant 0 : index
    %536 = vector.load %arg35[%c3_148, %c0_149] : memref<8x32xf32, #tpu.memory_space<vmem>>, vector<1x32xf32>
    tpu.vector_store %arg35[%c3_148, %c0_149], %535 {strides = array<i32>} : memref<8x32xf32, #tpu.memory_space<vmem>>, vector<1x32xf32>,
    %537 = vector.extract_strided_slice %450 {offsets = [4, 0], sizes = [1, 128], strides = [1, 1]} : vector<8x128xf32> to vector<1x128xf32>
    %538 = arith.truncf %535 : vector<1x32xf32> to vector<1x32xbf16>
    %cst_150 = arith.constant dense<0.000000e+00> : vector<1x128xf32>
    %539 = tpu.matmul %538, %445, %cst_150 {dimension_numbers = #tpu.dot_dimension_numbers<[1], [0], [0], [1], [0, 0, 1, 1], [], []>} : vector<1x32xbf16>, vector<32x128xbf16>, vector<1x128xf32> -> vector<1x128xf32>
    %540 = arith.addf %537, %539 : vector<1x128xf32>
    %541 = vector.extract_strided_slice %540 {offsets = [0, 0], sizes = [1, 96], strides = [1, 1]} : vector<1x128xf32> to vector<1x96xf32>
    %542 = arith.negf %541 : vector<1x96xf32>
    %543 = math.exp %542 : vector<1x96xf32>
    %cst_151 = arith.constant 1.000000e+00 : f32
    %544 = vector.broadcast %cst_151 : f32 to vector<1x96xf32>
    %545 = arith.addf %544, %543 : vector<1x96xf32>
    %546 = arith.divf %544, %545 : vector<1x96xf32>
    %547 = vector.extract_strided_slice %540 {offsets = [0, 96], sizes = [1, 32], strides = [1, 1]} : vector<1x128xf32> to vector<1x32xf32>
    %548 = math.tanh %547 : vector<1x32xf32>
    %549 = vector.extract_strided_slice %546 {offsets = [0, 0], sizes = [1, 32], strides = [1, 1]} : vector<1x96xf32> to vector<1x32xf32>
    %550 = vector.extract_strided_slice %546 {offsets = [0, 32], sizes = [1, 32], strides = [1, 1]} : vector<1x96xf32> to vector<1x32xf32>
    %551 = vector.extract_strided_slice %546 {offsets = [0, 64], sizes = [1, 32], strides = [1, 1]} : vector<1x96xf32> to vector<1x32xf32>
    %552 = arith.mulf %550, %533 : vector<1x32xf32>
    %553 = arith.mulf %549, %548 : vector<1x32xf32>
    %554 = arith.addf %552, %553 : vector<1x32xf32>
    %555 = math.tanh %554 : vector<1x32xf32>
    %556 = arith.mulf %551, %555 : vector<1x32xf32>
    %c4_152 = arith.constant 4 : index
    %c0_153 = arith.constant 0 : index
    %557 = vector.load %arg35[%c4_152, %c0_153] : memref<8x32xf32, #tpu.memory_space<vmem>>, vector<1x32xf32>
    tpu.vector_store %arg35[%c4_152, %c0_153], %556 {strides = array<i32>} : memref<8x32xf32, #tpu.memory_space<vmem>>, vector<1x32xf32>,
    %558 = vector.extract_strided_slice %450 {offsets = [5, 0], sizes = [1, 128], strides = [1, 1]} : vector<8x128xf32> to vector<1x128xf32>
    %559 = arith.truncf %556 : vector<1x32xf32> to vector<1x32xbf16>
    %cst_154 = arith.constant dense<0.000000e+00> : vector<1x128xf32>
    %560 = tpu.matmul %559, %445, %cst_154 {dimension_numbers = #tpu.dot_dimension_numbers<[1], [0], [0], [1], [0, 0, 1, 1], [], []>} : vector<1x32xbf16>, vector<32x128xbf16>, vector<1x128xf32> -> vector<1x128xf32>
    %561 = arith.addf %558, %560 : vector<1x128xf32>
    %562 = vector.extract_strided_slice %561 {offsets = [0, 0], sizes = [1, 96], strides = [1, 1]} : vector<1x128xf32> to vector<1x96xf32>
    %563 = arith.negf %562 : vector<1x96xf32>
    %564 = math.exp %563 : vector<1x96xf32>
    %cst_155 = arith.constant 1.000000e+00 : f32
    %565 = vector.broadcast %cst_155 : f32 to vector<1x96xf32>
    %566 = arith.addf %565, %564 : vector<1x96xf32>
    %567 = arith.divf %565, %566 : vector<1x96xf32>
    %568 = vector.extract_strided_slice %561 {offsets = [0, 96], sizes = [1, 32], strides = [1, 1]} : vector<1x128xf32> to vector<1x32xf32>
    %569 = math.tanh %568 : vector<1x32xf32>
    %570 = vector.extract_strided_slice %567 {offsets = [0, 0], sizes = [1, 32], strides = [1, 1]} : vector<1x96xf32> to vector<1x32xf32>
    %571 = vector.extract_strided_slice %567 {offsets = [0, 32], sizes = [1, 32], strides = [1, 1]} : vector<1x96xf32> to vector<1x32xf32>
    %572 = vector.extract_strided_slice %567 {offsets = [0, 64], sizes = [1, 32], strides = [1, 1]} : vector<1x96xf32> to vector<1x32xf32>
    %573 = arith.mulf %571, %554 : vector<1x32xf32>
    %574 = arith.mulf %570, %569 : vector<1x32xf32>
    %575 = arith.addf %573, %574 : vector<1x32xf32>
    %576 = math.tanh %575 : vector<1x32xf32>
    %577 = arith.mulf %572, %576 : vector<1x32xf32>
    %c5_156 = arith.constant 5 : index
    %c0_157 = arith.constant 0 : index
    %578 = vector.load %arg35[%c5_156, %c0_157] : memref<8x32xf32, #tpu.memory_space<vmem>>, vector<1x32xf32>
    tpu.vector_store %arg35[%c5_156, %c0_157], %577 {strides = array<i32>} : memref<8x32xf32, #tpu.memory_space<vmem>>, vector<1x32xf32>,
    %579 = vector.extract_strided_slice %450 {offsets = [6, 0], sizes = [1, 128], strides = [1, 1]} : vector<8x128xf32> to vector<1x128xf32>
    %580 = arith.truncf %577 : vector<1x32xf32> to vector<1x32xbf16>
    %cst_158 = arith.constant dense<0.000000e+00> : vector<1x128xf32>
    %581 = tpu.matmul %580, %445, %cst_158 {dimension_numbers = #tpu.dot_dimension_numbers<[1], [0], [0], [1], [0, 0, 1, 1], [], []>} : vector<1x32xbf16>, vector<32x128xbf16>, vector<1x128xf32> -> vector<1x128xf32>
    %582 = arith.addf %579, %581 : vector<1x128xf32>
    %583 = vector.extract_strided_slice %582 {offsets = [0, 0], sizes = [1, 96], strides = [1, 1]} : vector<1x128xf32> to vector<1x96xf32>
    %584 = arith.negf %583 : vector<1x96xf32>
    %585 = math.exp %584 : vector<1x96xf32>
    %cst_159 = arith.constant 1.000000e+00 : f32
    %586 = vector.broadcast %cst_159 : f32 to vector<1x96xf32>
    %587 = arith.addf %586, %585 : vector<1x96xf32>
    %588 = arith.divf %586, %587 : vector<1x96xf32>
    %589 = vector.extract_strided_slice %582 {offsets = [0, 96], sizes = [1, 32], strides = [1, 1]} : vector<1x128xf32> to vector<1x32xf32>
    %590 = math.tanh %589 : vector<1x32xf32>
    %591 = vector.extract_strided_slice %588 {offsets = [0, 0], sizes = [1, 32], strides = [1, 1]} : vector<1x96xf32> to vector<1x32xf32>
    %592 = vector.extract_strided_slice %588 {offsets = [0, 32], sizes = [1, 32], strides = [1, 1]} : vector<1x96xf32> to vector<1x32xf32>
    %593 = vector.extract_strided_slice %588 {offsets = [0, 64], sizes = [1, 32], strides = [1, 1]} : vector<1x96xf32> to vector<1x32xf32>
    %594 = arith.mulf %592, %575 : vector<1x32xf32>
    %595 = arith.mulf %591, %590 : vector<1x32xf32>
    %596 = arith.addf %594, %595 : vector<1x32xf32>
    %597 = math.tanh %596 : vector<1x32xf32>
    %598 = arith.mulf %593, %597 : vector<1x32xf32>
    %c6_160 = arith.constant 6 : index
    %c0_161 = arith.constant 0 : index
    %599 = vector.load %arg35[%c6_160, %c0_161] : memref<8x32xf32, #tpu.memory_space<vmem>>, vector<1x32xf32>
    tpu.vector_store %arg35[%c6_160, %c0_161], %598 {strides = array<i32>} : memref<8x32xf32, #tpu.memory_space<vmem>>, vector<1x32xf32>,
    %600 = vector.extract_strided_slice %450 {offsets = [7, 0], sizes = [1, 128], strides = [1, 1]} : vector<8x128xf32> to vector<1x128xf32>
    %601 = arith.truncf %598 : vector<1x32xf32> to vector<1x32xbf16>
    %cst_162 = arith.constant dense<0.000000e+00> : vector<1x128xf32>
    %602 = tpu.matmul %601, %445, %cst_162 {dimension_numbers = #tpu.dot_dimension_numbers<[1], [0], [0], [1], [0, 0, 1, 1], [], []>} : vector<1x32xbf16>, vector<32x128xbf16>, vector<1x128xf32> -> vector<1x128xf32>
    %603 = arith.addf %600, %602 : vector<1x128xf32>
    %604 = vector.extract_strided_slice %603 {offsets = [0, 0], sizes = [1, 96], strides = [1, 1]} : vector<1x128xf32> to vector<1x96xf32>
    %605 = arith.negf %604 : vector<1x96xf32>
    %606 = math.exp %605 : vector<1x96xf32>
    %cst_163 = arith.constant 1.000000e+00 : f32
    %607 = vector.broadcast %cst_163 : f32 to vector<1x96xf32>
    %608 = arith.addf %607, %606 : vector<1x96xf32>
    %609 = arith.divf %607, %608 : vector<1x96xf32>
    %610 = vector.extract_strided_slice %603 {offsets = [0, 96], sizes = [1, 32], strides = [1, 1]} : vector<1x128xf32> to vector<1x32xf32>
    %611 = math.tanh %610 : vector<1x32xf32>
    %612 = vector.extract_strided_slice %609 {offsets = [0, 0], sizes = [1, 32], strides = [1, 1]} : vector<1x96xf32> to vector<1x32xf32>
    %613 = vector.extract_strided_slice %609 {offsets = [0, 32], sizes = [1, 32], strides = [1, 1]} : vector<1x96xf32> to vector<1x32xf32>
    %614 = vector.extract_strided_slice %609 {offsets = [0, 64], sizes = [1, 32], strides = [1, 1]} : vector<1x96xf32> to vector<1x32xf32>
    %615 = arith.mulf %613, %596 : vector<1x32xf32>
    %616 = arith.mulf %612, %611 : vector<1x32xf32>
    %617 = arith.addf %615, %616 : vector<1x32xf32>
    %618 = math.tanh %617 : vector<1x32xf32>
    %619 = arith.mulf %614, %618 : vector<1x32xf32>
    %c7_164 = arith.constant 7 : index
    %c0_165 = arith.constant 0 : index
    %620 = vector.load %arg35[%c7_164, %c0_165] : memref<8x32xf32, #tpu.memory_space<vmem>>, vector<1x32xf32>
    tpu.vector_store %arg35[%c7_164, %c0_165], %619 {strides = array<i32>} : memref<8x32xf32, #tpu.memory_space<vmem>>, vector<1x32xf32>,
    %c0_166 = arith.constant 0 : index
    %c0_167 = arith.constant 0 : index
    %621 = vector.load %arg35[%c0_166, %c0_167] : memref<8x32xf32, #tpu.memory_space<vmem>>, vector<8x32xf32>
    %c0_168 = arith.constant 0 : index
    %c0_169 = arith.constant 0 : index
    %622 = vector.load %arg32[%c0_168, %c0_169] : memref<32x4xbf16, #tpu.memory_space<vmem>>, vector<32x4xbf16>
    %c0_170 = arith.constant 0 : index
    %c0_171 = arith.constant 0 : index
    %623 = vector.load %arg33[%c0_170, %c0_171] : memref<1x4xf32, #tpu.memory_space<vmem>>, vector<1x4xf32>
    %624 = arith.truncf %621 : vector<8x32xf32> to vector<8x32xbf16>
    %cst_172 = arith.constant dense<0.000000e+00> : vector<8x4xf32>
    %625 = tpu.matmul %624, %622, %cst_172 {dimension_numbers = #tpu.dot_dimension_numbers<[1], [0], [0], [1], [0, 0, 1, 1], [], []>} : vector<8x32xbf16>, vector<32x4xbf16>, vector<8x4xf32> -> vector<8x4xf32>
    %626 = vector.broadcast %623 : vector<1x4xf32> to vector<8x4xf32>
    %627 = arith.addf %625, %626 : vector<8x4xf32>
    %c0_173 = arith.constant 0 : index
    %c0_174 = arith.constant 0 : index
    %c0_175 = arith.constant 0 : index
    %628 = vector.load %arg34[%c0_173, %c0_174, %c0_175] : memref<1x8x4xf32, #tpu.memory_space<vmem>>, vector<1x8x4xf32>
    %629 = vector.shape_cast %628 : vector<1x8x4xf32> to vector<8x4xf32>
    %630 = vector.shape_cast %627 : vector<8x4xf32> to vector<1x8x4xf32>
    tpu.vector_store %arg34[%c0_173, %c0_174, %c0_175], %630 {strides = array<i32>} : memref<1x8x4xf32, #tpu.memory_space<vmem>>, vector<1x8x4xf32>,
    return
  }
  func.func @transform_0(%arg0: i32) -> (i32, i32, i32) {
    %c0_i32 = arith.constant 0 : i32
    %c0_i32_0 = arith.constant 0 : i32
    %c0_i32_1 = arith.constant 0 : i32
    return %arg0, %c0_i32, %c0_i32_0 : i32, i32, i32
  }
  func.func @transform_1(%arg0: i32) -> (i32, i32) {
    %c0_i32 = arith.constant 0 : i32
    %c0_i32_0 = arith.constant 0 : i32
    %c0_i32_1 = arith.constant 0 : i32
    return %c0_i32, %c0_i32_0 : i32, i32
  }
  func.func @transform_2(%arg0: i32) -> (i32, i32) {
    %c0_i32 = arith.constant 0 : i32
    %c0_i32_0 = arith.constant 0 : i32
    %c0_i32_1 = arith.constant 0 : i32
    return %c0_i32, %c0_i32_0 : i32, i32
  }
  func.func @transform_3(%arg0: i32) -> (i32, i32) {
    %c0_i32 = arith.constant 0 : i32
    %c0_i32_0 = arith.constant 0 : i32
    %c0_i32_1 = arith.constant 0 : i32
    return %c0_i32, %c0_i32_0 : i32, i32
  }
  func.func @transform_4(%arg0: i32) -> (i32, i32) {
    %c0_i32 = arith.constant 0 : i32
    %c0_i32_0 = arith.constant 0 : i32
    %c0_i32_1 = arith.constant 0 : i32
    return %c0_i32, %c0_i32_0 : i32, i32
  }
  func.func @transform_5(%arg0: i32) -> (i32, i32) {
    %c0_i32 = arith.constant 0 : i32
    %c0_i32_0 = arith.constant 0 : i32
    %c0_i32_1 = arith.constant 0 : i32
    return %c0_i32, %c0_i32_0 : i32, i32
  }
  func.func @transform_6(%arg0: i32) -> (i32, i32) {
    %c0_i32 = arith.constant 0 : i32
    %c0_i32_0 = arith.constant 0 : i32
    %c0_i32_1 = arith.constant 0 : i32
    return %c0_i32, %c0_i32_0 : i32, i32
  }
  func.func @transform_7(%arg0: i32) -> (i32, i32) {
    %c0_i32 = arith.constant 0 : i32
    %c0_i32_0 = arith.constant 0 : i32
    %c0_i32_1 = arith.constant 0 : i32
    return %c0_i32, %c0_i32_0 : i32, i32
  }
  func.func @transform_8(%arg0: i32) -> (i32, i32) {
    %c0_i32 = arith.constant 0 : i32
    %c0_i32_0 = arith.constant 0 : i32
    %c0_i32_1 = arith.constant 0 : i32
    return %c0_i32, %c0_i32_0 : i32, i32
  }
  func.func @transform_9(%arg0: i32) -> (i32, i32) {
    %c0_i32 = arith.constant 0 : i32
    %c0_i32_0 = arith.constant 0 : i32
    %c0_i32_1 = arith.constant 0 : i32
    return %c0_i32, %c0_i32_0 : i32, i32
  }
  func.func @transform_10(%arg0: i32) -> (i32, i32) {
    %c0_i32 = arith.constant 0 : i32
    %c0_i32_0 = arith.constant 0 : i32
    %c0_i32_1 = arith.constant 0 : i32
    return %c0_i32, %c0_i32_0 : i32, i32
  }
  func.func @transform_11(%arg0: i32) -> (i32, i32) {
    %c0_i32 = arith.constant 0 : i32
    %c0_i32_0 = arith.constant 0 : i32
    %c0_i32_1 = arith.constant 0 : i32
    return %c0_i32, %c0_i32_0 : i32, i32
  }
  func.func @transform_12(%arg0: i32) -> (i32, i32) {
    %c0_i32 = arith.constant 0 : i32
    %c0_i32_0 = arith.constant 0 : i32
    %c0_i32_1 = arith.constant 0 : i32
    return %c0_i32, %c0_i32_0 : i32, i32
  }
  func.func @transform_13(%arg0: i32) -> (i32, i32) {
    %c0_i32 = arith.constant 0 : i32
    %c0_i32_0 = arith.constant 0 : i32
    %c0_i32_1 = arith.constant 0 : i32
    return %c0_i32, %c0_i32_0 : i32, i32
  }
  func.func @transform_14(%arg0: i32) -> (i32, i32) {
    %c0_i32 = arith.constant 0 : i32
    %c0_i32_0 = arith.constant 0 : i32
    %c0_i32_1 = arith.constant 0 : i32
    return %c0_i32, %c0_i32_0 : i32, i32
  }
  func.func @transform_15(%arg0: i32) -> (i32, i32) {
    %c0_i32 = arith.constant 0 : i32
    %c0_i32_0 = arith.constant 0 : i32
    %c0_i32_1 = arith.constant 0 : i32
    return %c0_i32, %c0_i32_0 : i32, i32
  }
  func.func @transform_16(%arg0: i32) -> (i32, i32) {
    %c0_i32 = arith.constant 0 : i32
    %c0_i32_0 = arith.constant 0 : i32
    %c0_i32_1 = arith.constant 0 : i32
    return %c0_i32, %c0_i32_0 : i32, i32
  }
  func.func @transform_17(%arg0: i32) -> (i32, i32) {
    %c0_i32 = arith.constant 0 : i32
    %c0_i32_0 = arith.constant 0 : i32
    %c0_i32_1 = arith.constant 0 : i32
    return %c0_i32, %c0_i32_0 : i32, i32
  }
  func.func @transform_18(%arg0: i32) -> (i32, i32) {
    %c0_i32 = arith.constant 0 : i32
    %c0_i32_0 = arith.constant 0 : i32
    %c0_i32_1 = arith.constant 0 : i32
    return %c0_i32, %c0_i32_0 : i32, i32
  }
  func.func @transform_19(%arg0: i32) -> (i32, i32) {
    %c0_i32 = arith.constant 0 : i32
    %c0_i32_0 = arith.constant 0 : i32
    %c0_i32_1 = arith.constant 0 : i32
    return %c0_i32, %c0_i32_0 : i32, i32
  }
  func.func @transform_20(%arg0: i32) -> (i32, i32) {
    %c0_i32 = arith.constant 0 : i32
    %c0_i32_0 = arith.constant 0 : i32
    %c0_i32_1 = arith.constant 0 : i32
    return %c0_i32, %c0_i32_0 : i32, i32
  }
  func.func @transform_21(%arg0: i32) -> (i32, i32) {
    %c0_i32 = arith.constant 0 : i32
    %c0_i32_0 = arith.constant 0 : i32
    %c0_i32_1 = arith.constant 0 : i32
    return %c0_i32, %c0_i32_0 : i32, i32
  }
  func.func @transform_22(%arg0: i32) -> (i32, i32) {
    %c0_i32 = arith.constant 0 : i32
    %c0_i32_0 = arith.constant 0 : i32
    %c0_i32_1 = arith.constant 0 : i32
    return %c0_i32, %c0_i32_0 : i32, i32
  }
  func.func @transform_23(%arg0: i32) -> (i32, i32) {
    %c0_i32 = arith.constant 0 : i32
    %c0_i32_0 = arith.constant 0 : i32
    %c0_i32_1 = arith.constant 0 : i32
    return %c0_i32, %c0_i32_0 : i32, i32
  }
  func.func @transform_24(%arg0: i32) -> (i32, i32) {
    %c0_i32 = arith.constant 0 : i32
    %c0_i32_0 = arith.constant 0 : i32
    %c0_i32_1 = arith.constant 0 : i32
    return %c0_i32, %c0_i32_0 : i32, i32
  }
  func.func @transform_25(%arg0: i32) -> (i32, i32) {
    %c0_i32 = arith.constant 0 : i32
    %c0_i32_0 = arith.constant 0 : i32
    %c0_i32_1 = arith.constant 0 : i32
    return %c0_i32, %c0_i32_0 : i32, i32
  }
  func.func @transform_26(%arg0: i32) -> (i32, i32) {
    %c0_i32 = arith.constant 0 : i32
    %c0_i32_0 = arith.constant 0 : i32
    %c0_i32_1 = arith.constant 0 : i32
    return %c0_i32, %c0_i32_0 : i32, i32
  }
  func.func @transform_27(%arg0: i32) -> (i32, i32) {
    %c0_i32 = arith.constant 0 : i32
    %c0_i32_0 = arith.constant 0 : i32
    %c0_i32_1 = arith.constant 0 : i32
    return %c0_i32, %c0_i32_0 : i32, i32
  }
  func.func @transform_28(%arg0: i32) -> (i32, i32) {
    %c0_i32 = arith.constant 0 : i32
    %c0_i32_0 = arith.constant 0 : i32
    %c0_i32_1 = arith.constant 0 : i32
    return %c0_i32, %c0_i32_0 : i32, i32
  }
  func.func @transform_29(%arg0: i32) -> (i32, i32) {
    %c0_i32 = arith.constant 0 : i32
    %c0_i32_0 = arith.constant 0 : i32
    %c0_i32_1 = arith.constant 0 : i32
    return %c0_i32, %c0_i32_0 : i32, i32
  }
  func.func @transform_30(%arg0: i32) -> (i32, i32) {
    %c0_i32 = arith.constant 0 : i32
    %c0_i32_0 = arith.constant 0 : i32
    %c0_i32_1 = arith.constant 0 : i32
    return %c0_i32, %c0_i32_0 : i32, i32
  }
  func.func @transform_31(%arg0: i32) -> (i32, i32) {
    %c0_i32 = arith.constant 0 : i32
    %c0_i32_0 = arith.constant 0 : i32
    %c0_i32_1 = arith.constant 0 : i32
    return %c0_i32, %c0_i32_0 : i32, i32
  }
  func.func @transform_32(%arg0: i32) -> (i32, i32) {
    %c0_i32 = arith.constant 0 : i32
    %c0_i32_0 = arith.constant 0 : i32
    %c0_i32_1 = arith.constant 0 : i32
    return %c0_i32, %c0_i32_0 : i32, i32
  }
  func.func @transform_33(%arg0: i32) -> (i32, i32, i32) {
    %c0_i32 = arith.constant 0 : i32
    %c0_i32_0 = arith.constant 0 : i32
    %c0_i32_1 = arith.constant 0 : i32
    return %arg0, %c0_i32, %c0_i32_0 : i32, i32, i32
  }
}

</mosaic_0001>

<llo_original>
// kernel: transformer_lstm_forward.1
$region0: #{transformer_lstm_forward.1}
  #allocation0 [shape = 'u32[]', space=smem, size = 0x4, offset = 0x4, fixed_abs, tag = 'smem constant byte address 0x4 - core index']
  #allocation1 [shape = 'u32[72,128]{1,0:T(1,128)}', space=vmem, size = 0x9000, scoped, tag = 'internal scratch']
  #allocation2 [shape = 'f32[8,32]{1,0:T(8,128)}', space=vmem, size = 0x1000, scoped, tag = 'scratch operand']
  %s0 = inlined_call_operand.smem [shape: u32[34], index: -1, kind: input, shape index: {}]
  %s1 = sld [smem:[%s0]]
  %s2 = scalar_lea.smem %s0, 1
  %s3 = sld [smem:[%s2]]
  %s4 = scalar_lea.smem %s0, 2
  %s5 = sld [smem:[%s4]]
  %s6 = scalar_lea.smem %s0, 3
  %s7 = sld [smem:[%s6]]
  %s8 = scalar_lea.smem %s0, 4
  %s9 = sld [smem:[%s8]]
  %s10 = scalar_lea.smem %s0, 5
  %s11 = sld [smem:[%s10]]
  %s12 = scalar_lea.smem %s0, 6
  %s13 = sld [smem:[%s12]]
  %s14 = scalar_lea.smem %s0, 7
  %s15 = sld [smem:[%s14]]
  %s16 = scalar_lea.smem %s0, 8
  %s17 = sld [smem:[%s16]]
  %s18 = scalar_lea.smem %s0, 9
  %s19 = sld [smem:[%s18]]
  %s20 = scalar_lea.smem %s0, 10
  %s21 = sld [smem:[%s20]]
  %s22 = scalar_lea.smem %s0, 11
  %s23 = sld [smem:[%s22]]
  %s24 = scalar_lea.smem %s0, 12
  %s25 = sld [smem:[%s24]]
  %s26 = scalar_lea.smem %s0, 13
  %s27 = sld [smem:[%s26]]
  %s28 = scalar_lea.smem %s0, 14
  %s29 = sld [smem:[%s28]]
  %s30 = scalar_lea.smem %s0, 15
  %s31 = sld [smem:[%s30]]
  %s32 = scalar_lea.smem %s0, 16
  %s33 = sld [smem:[%s32]]
  %s34 = scalar_lea.smem %s0, 17
  %s35 = sld [smem:[%s34]]
  %s36 = scalar_lea.smem %s0, 18
  %s37 = sld [smem:[%s36]]
  %s38 = scalar_lea.smem %s0, 19
  %s39 = sld [smem:[%s38]]
  %s40 = scalar_lea.smem %s0, 20
  %s41 = sld [smem:[%s40]]
  %s42 = scalar_lea.smem %s0, 21
  %s43 = sld [smem:[%s42]]
  %s44 = scalar_lea.smem %s0, 22
  %s45 = sld [smem:[%s44]]
  %s46 = scalar_lea.smem %s0, 23
  %s47 = sld [smem:[%s46]]
  %s48 = scalar_lea.smem %s0, 24
  %s49 = sld [smem:[%s48]]
  %s50 = scalar_lea.smem %s0, 25
  %s51 = sld [smem:[%s50]]
  %s52 = scalar_lea.smem %s0, 26
  %s53 = sld [smem:[%s52]]
  %s54 = scalar_lea.smem %s0, 27
  %s55 = sld [smem:[%s54]]
  %s56 = scalar_lea.smem %s0, 28
  %s57 = sld [smem:[%s56]]
  %s58 = scalar_lea.smem %s0, 29
  %s59 = sld [smem:[%s58]]
  %s60 = scalar_lea.smem %s0, 30
  %s61 = sld [smem:[%s60]]
  %s62 = scalar_lea.smem %s0, 31
  %s63 = sld [smem:[%s62]]
  %s64 = scalar_lea.smem %s0, 32
  %s65 = sld [smem:[%s64]]
  %s66 = scalar_lea.smem %s0, 33
  %s67 = sld [smem:[%s66]]
  %s68 = sld [smem:[#allocation0]]
  $region237: #{transformer_lstm_forward.1} parent=0
    _
  %s70 = ssub.s32 1, %s68
  %s71 = scalar_select 0, %s70, %s68
  $region1: #{transformer_lstm_forward.1} parent=0
    #allocation3 [shape = 'u8[512]{0}', space=vmem, size = 0x400, scoped, tag = 'input window, operand 4, single buffered']
    #allocation4 [shape = 's32[2]{0}', space=sflag, size = 0x8, scoped, tag = 'scoped memory for transformer_lstm_forward.1']
    #allocation5 [shape = 'u8[512]{0}', space=vmem, size = 0x400, scoped, tag = 'input window, operand 6, single buffered']
    #allocation6 [shape = 's32[1]{0}', space=sflag, size = 0x4, scoped, tag = 'scoped memory for transformer_lstm_forward.1']
    #allocation7 [shape = 'u8[512]{0}', space=vmem, size = 0x400, scoped, tag = 'input window, operand 8, single buffered']
    #allocation8 [shape = 'u8[512]{0}', space=vmem, size = 0x400, scoped, tag = 'input window, operand 9, single buffered']
    #allocation9 [shape = 's32[1]{0}', space=sflag, size = 0x4, scoped, tag = 'scoped memory for transformer_lstm_forward.1']
    #allocation10 [shape = 'u8[512]{0}', space=vmem, size = 0x400, scoped, tag = 'input window, operand 10, single buffered']
    #allocation11 [shape = 'u8[512]{0}', space=vmem, size = 0x400, scoped, tag = 'input window, operand 11, single buffered']
    #allocation12 [shape = 's32[1]{0}', space=sflag, size = 0x4, scoped, tag = 'scoped memory for transformer_lstm_forward.1']
    #allocation13 [shape = 'u8[512]{0}', space=vmem, size = 0x400, scoped, tag = 'input window, operand 12, single buffered']
    #allocation14 [shape = 'u8[512]{0}', space=vmem, size = 0x400, scoped, tag = 'input window, operand 14, single buffered']
    #allocation15 [shape = 's32[1]{0}', space=sflag, size = 0x4, scoped, tag = 'scoped memory for transformer_lstm_forward.1']
    #allocation16 [shape = 'u8[512]{0}', space=vmem, size = 0x400, scoped, tag = 'input window, operand 16, single buffered']
    #allocation17 [shape = 'u8[4096]{0}', space=vmem, size = 0x1000, scoped, tag = 'input window, operand 17, single buffered']
    #allocation18 [shape = 's32[1]{0}', space=sflag, size = 0x4, scoped, tag = 'scoped memory for transformer_lstm_forward.1']
    #allocation19 [shape = 'u8[512]{0}', space=vmem, size = 0x400, scoped, tag = 'input window, operand 18, single buffered']
    #allocation20 [shape = 'u8[512]{0}', space=vmem, size = 0x400, scoped, tag = 'input window, operand 20, single buffered']
    #allocation21 [shape = 's32[1]{0}', space=sflag, size = 0x4, scoped, tag = 'scoped memory for transformer_lstm_forward.1']
    #allocation22 [shape = 'u8[512]{0}', space=vmem, size = 0x400, scoped, tag = 'input window, operand 22, single buffered']
    #allocation23 [shape = 'u8[512]{0}', space=vmem, size = 0x400, scoped, tag = 'input window, operand 24, single buffered']
    #allocation24 [shape = 's32[1]{0}', space=sflag, size = 0x4, scoped, tag = 'scoped memory for transformer_lstm_forward.1']
    #allocation25 [shape = 'u8[4096]{0}', space=vmem, size = 0x1000, scoped, tag = 'input window, operand 25, single buffered']
    #allocation26 [shape = 'u8[512]{0}', space=vmem, size = 0x400, scoped, tag = 'input window, operand 27, single buffered']
    #allocation27 [shape = 's32[1]{0}', space=sflag, size = 0x4, scoped, tag = 'scoped memory for transformer_lstm_forward.1']
    #allocation28 [shape = 'u8[512]{0}', space=vmem, size = 0x400, scoped, tag = 'input window, operand 30, single buffered']
    #allocation29 [shape = 'u8[512]{0}', space=vmem, size = 0x400, scoped, tag = 'input window, operand 32, single buffered']
    #allocation30 [shape = 's32[1]{0}', space=sflag, size = 0x4, scoped, tag = 'scoped memory for transformer_lstm_forward.1']
    %72 = vsyncpa [#allocation4], 0
    %73 = vsyncpa [#allocation6], 0
    %74 = vsyncpa [#allocation9], 0
    %75 = vsyncpa [#allocation12], 0
    %76 = vsyncpa [#allocation15], 0
    %77 = vsyncpa [#allocation18], 0
    %78 = vsyncpa [#allocation21], 0
    %79 = vsyncpa [#allocation24], 0
    %80 = vsyncpa [#allocation27], 0
    %81 = vsyncpa [#allocation30], 0
    loop: start=0, step=1, limit=4
    $region2: #{transformer_lstm_forward.1} parent=1 // loop_pre_header
      _
    $region3: #{transformer_lstm_forward.1} parent=1 // loop_header
      %s83 = sphi 0, %s87
      %p84 = scmp.ge.s32.totalorder %s83, 4
      %s93 = sphi 0, %s95
      %s96 = sphi 0, %s93
      %s97 = sphi 0, %s96
      %s113 = sphi 0, %s97
      %s117 = sphi 0, %s117
      %s119 = sphi 0, %s117
      %s120 = sphi 0, %s119
      %s134 = sphi 0, %s120
      %s138 = sphi 0, %s138
      %s140 = sphi 0, %s138
      %s141 = sphi 0, %s140
      %s155 = sphi 0, %s141
      %s159 = sphi 0, %s159
      %s161 = sphi 0, %s159
      %s162 = sphi 0, %s161
      %s176 = sphi 0, %s162
      %s180 = sphi 0, %s180
      %s182 = sphi 0, %s180
      %s183 = sphi 0, %s182
      %s197 = sphi 0, %s183
      %s201 = sphi 0, %s201
      %s203 = sphi 0, %s201
      %s204 = sphi 0, %s203
      %s218 = sphi 0, %s204
      %s222 = sphi 0, %s222
      %s224 = sphi 0, %s222
      %s225 = sphi 0, %s224
      %s239 = sphi 0, %s225
      %s243 = sphi 0, %s243
      %s245 = sphi 0, %s243
      %s246 = sphi 0, %s245
      %s260 = sphi 0, %s246
      %s264 = sphi 0, %s264
      %s266 = sphi 0, %s264
      %s267 = sphi 0, %s266
      %s281 = sphi 0, %s267
      %s285 = sphi 0, %s285
      %s287 = sphi 0, %s285
      %s288 = sphi 0, %s287
      %s302 = sphi 0, %s288
      %s306 = sphi 0, %s306
      %s308 = sphi 0, %s306
      %s309 = sphi 0, %s308
      %s323 = sphi 0, %s309
      %s327 = sphi 0, %s327
      %s329 = sphi 0, %s327
      %s330 = sphi 0, %s329
      %s344 = sphi 0, %s330
      %s348 = sphi 0, %s348
      %s350 = sphi 0, %s348
      %s351 = sphi 0, %s350
      %s365 = sphi 0, %s351
      %s369 = sphi 0, %s369
      %s371 = sphi 0, %s369
      %s372 = sphi 0, %s371
      %s386 = sphi 0, %s372
      %s390 = sphi 0, %s390
      %s392 = sphi 0, %s390
      %s393 = sphi 0, %s392
      %s407 = sphi 0, %s393
      %s411 = sphi 0, %s411
      %s413 = sphi 0, %s411
      %s414 = sphi 0, %s413
      %s428 = sphi 0, %s414
      %s432 = sphi 0, %s432
      %s434 = sphi 0, %s432
      %s435 = sphi 0, %s434
      %s449 = sphi 0, %s435
      %s453 = sphi 0, %s453
      %s455 = sphi 0, %s453
      %s456 = sphi 0, %s455
      %s470 = sphi 0, %s456
      %s474 = sphi 0, %s474
      %s476 = sphi 0, %s474
      %s477 = sphi 0, %s476
      %s491 = sphi 0, %s477
      %s495 = sphi 0, %s495
      %s497 = sphi 0, %s495
      %s498 = sphi 0, %s497
      %s512 = sphi 0, %s498
      %s516 = sphi 0, %s516
      %s518 = sphi 0, %s516
      %s519 = sphi 0, %s518
      %s533 = sphi 0, %s519
      %s537 = sphi 0, %s537
      %s539 = sphi 0, %s537
      %s540 = sphi 0, %s539
      %s554 = sphi 0, %s540
      %s558 = sphi 0, %s558
      %s560 = sphi 0, %s558
      %s561 = sphi 0, %s560
      %s575 = sphi 0, %s561
      %s579 = sphi 0, %s579
      %s581 = sphi 0, %s579
      %s582 = sphi 0, %s581
      %s596 = sphi 0, %s582
      %s600 = sphi 0, %s600
      %s602 = sphi 0, %s600
      %s603 = sphi 0, %s602
      %s617 = sphi 0, %s603
      %s621 = sphi 0, %s621
      %s623 = sphi 0, %s621
      %s624 = sphi 0, %s623
      %s638 = sphi 0, %s624
      %s642 = sphi 0, %s642
      %s644 = sphi 0, %s642
      %s645 = sphi 0, %s644
      %s659 = sphi 0, %s645
      %s663 = sphi 0, %s663
      %s665 = sphi 0, %s663
      %s666 = sphi 0, %s665
      %s680 = sphi 0, %s666
      %s684 = sphi 0, %s684
      %s686 = sphi 0, %s684
      %s687 = sphi 0, %s686
      %s701 = sphi 0, %s687
      %s705 = sphi 0, %s705
      %s707 = sphi 0, %s705
      %s708 = sphi 0, %s707
      %s722 = sphi 0, %s708
      %s726 = sphi 0, %s726
      %s728 = sphi 0, %s726
      %s729 = sphi 0, %s728
      %s743 = sphi 0, %s729
      %s747 = sphi 0, %s747
      %s749 = sphi 0, %s747
      %s750 = sphi 0, %s749
      %s764 = sphi 0, %s750
      %s768 = sphi 0, %s768
      %s770 = sphi 0, %s768
      %s771 = sphi 0, %s770
      %s785 = sphi 0, %s771
      %s791 = sphi 0, %s793
      %s794 = sphi 0, %s791
      %s795 = sphi 0, %s794
      %s811 = sphi 0, %s795
    $region4: #{transformer_lstm_forward.1} parent=1 // loop_header_branch
      %86 = sbr.rel (%p84) target = $region8
    $region5: #{transformer_lstm_forward.1} parent=1 // loop_body
      %s88 = ssub.s32 %s83, 1
      %s89 = ssub.s32 %s83, 2
      %s90 = sadd.s32 %s83, 1
      %s91 = ssub.s32 %s83, %s90
      %p92 = scmp.eq.s32.totalorder %s91, 0
      %s94 = sadd.s32 %s93, 1
      %s95 = scalar_select %p92, %s93, %s94
      %p98 = pneg %p92
      %p99 = scmp.eq.s32.totalorder %s83, 1
      %p100 = por %p98, %p99
      %p101 = scmp.ne.s32.totalorder %s93, %s96
      %p102 = scmp.eq.s32.totalorder %s83, 0
      %p103 = por %p101, %p102
      %p104 = scmp.ne.s32.totalorder %s93, %s96
      %p105 = scmp.eq.s32.totalorder %s88, 1
      %p106 = por %p104, %p105
      %p107 = scmp.ne.s32.totalorder %s96, %s97
      %p108 = scmp.eq.s32.totalorder %s88, 0
      %p109 = por %p107, %p108
      %p110 = scmp.ne.s32.totalorder %s96, %s97
      %p111 = scmp.eq.s32.totalorder %s89, 1
      %p112 = por %p110, %p111
      %p114 = scmp.ne.s32.totalorder %s97, %s113
      %p115 = scmp.eq.s32.totalorder %s89, 0
      %p116 = por %p114, %p115
      %s118 = sadd.s32 %s117, 1
      %p121 = scmp.eq.s32.totalorder %s83, 1
      %p122 = scmp.ne.s32.totalorder %s117, %s119
      %p123 = scmp.eq.s32.totalorder %s83, 0
      %p124 = por %p122, %p123
      %p125 = scmp.ne.s32.totalorder %s117, %s119
      %p126 = scmp.eq.s32.totalorder %s88, 1
      %p127 = por %p125, %p126
      %p128 = scmp.ne.s32.totalorder %s119, %s120
      %p129 = scmp.eq.s32.totalorder %s88, 0
      %p130 = por %p128, %p129
      %p131 = scmp.ne.s32.totalorder %s119, %s120
      %p132 = scmp.eq.s32.totalorder %s89, 1
      %p133 = por %p131, %p132
      %p135 = scmp.ne.s32.totalorder %s120, %s134
      %p136 = scmp.eq.s32.totalorder %s89, 0
      %p137 = por %p135, %p136
      %s139 = sadd.s32 %s138, 1
      %p142 = scmp.eq.s32.totalorder %s83, 1
      %p143 = scmp.ne.s32.totalorder %s138, %s140
      %p144 = scmp.eq.s32.totalorder %s83, 0
      %p145 = por %p143, %p144
      %p146 = scmp.ne.s32.totalorder %s138, %s140
      %p147 = scmp.eq.s32.totalorder %s88, 1
      %p148 = por %p146, %p147
      %p149 = scmp.ne.s32.totalorder %s140, %s141
      %p150 = scmp.eq.s32.totalorder %s88, 0
      %p151 = por %p149, %p150
      %p152 = scmp.ne.s32.totalorder %s140, %s141
      %p153 = scmp.eq.s32.totalorder %s89, 1
      %p154 = por %p152, %p153
      %p156 = scmp.ne.s32.totalorder %s141, %s155
      %p157 = scmp.eq.s32.totalorder %s89, 0
      %p158 = por %p156, %p157
      %s160 = sadd.s32 %s159, 1
      %p163 = scmp.eq.s32.totalorder %s83, 1
      %p164 = scmp.ne.s32.totalorder %s159, %s161
      %p165 = scmp.eq.s32.totalorder %s83, 0
      %p166 = por %p164, %p165
      %p167 = scmp.ne.s32.totalorder %s159, %s161
      %p168 = scmp.eq.s32.totalorder %s88, 1
      %p169 = por %p167, %p168
      %p170 = scmp.ne.s32.totalorder %s161, %s162
      %p171 = scmp.eq.s32.totalorder %s88, 0
      %p172 = por %p170, %p171
      %p173 = scmp.ne.s32.totalorder %s161, %s162
      %p174 = scmp.eq.s32.totalorder %s89, 1
      %p175 = por %p173, %p174
      %p177 = scmp.ne.s32.totalorder %s162, %s176
      %p178 = scmp.eq.s32.totalorder %s89, 0
      %p179 = por %p177, %p178
      %s181 = sadd.s32 %s180, 1
      %p184 = scmp.eq.s32.totalorder %s83, 1
      %p185 = scmp.ne.s32.totalorder %s180, %s182
      %p186 = scmp.eq.s32.totalorder %s83, 0
      %p187 = por %p185, %p186
      %p188 = scmp.ne.s32.totalorder %s180, %s182
      %p189 = scmp.eq.s32.totalorder %s88, 1
      %p190 = por %p188, %p189
      %p191 = scmp.ne.s32.totalorder %s182, %s183
      %p192 = scmp.eq.s32.totalorder %s88, 0
      %p193 = por %p191, %p192
      %p194 = scmp.ne.s32.totalorder %s182, %s183
      %p195 = scmp.eq.s32.totalorder %s89, 1
      %p196 = por %p194, %p195
      %p198 = scmp.ne.s32.totalorder %s183, %s197
      %p199 = scmp.eq.s32.totalorder %s89, 0
      %p200 = por %p198, %p199
      %s202 = sadd.s32 %s201, 1
      %p205 = scmp.eq.s32.totalorder %s83, 1
      %p206 = scmp.ne.s32.totalorder %s201, %s203
      %p207 = scmp.eq.s32.totalorder %s83, 0
      %p208 = por %p206, %p207
      %p209 = scmp.ne.s32.totalorder %s201, %s203
      %p210 = scmp.eq.s32.totalorder %s88, 1
      %p211 = por %p209, %p210
      %p212 = scmp.ne.s32.totalorder %s203, %s204
      %p213 = scmp.eq.s32.totalorder %s88, 0
      %p214 = por %p212, %p213
      %p215 = scmp.ne.s32.totalorder %s203, %s204
      %p216 = scmp.eq.s32.totalorder %s89, 1
      %p217 = por %p215, %p216
      %p219 = scmp.ne.s32.totalorder %s204, %s218
      %p220 = scmp.eq.s32.totalorder %s89, 0
      %p221 = por %p219, %p220
      %s223 = sadd.s32 %s222, 1
      %p226 = scmp.eq.s32.totalorder %s83, 1
      %p227 = scmp.ne.s32.totalorder %s222, %s224
      %p228 = scmp.eq.s32.totalorder %s83, 0
      %p229 = por %p227, %p228
      %p230 = scmp.ne.s32.totalorder %s222, %s224
      %p231 = scmp.eq.s32.totalorder %s88, 1
      %p232 = por %p230, %p231
      %p233 = scmp.ne.s32.totalorder %s224, %s225
      %p234 = scmp.eq.s32.totalorder %s88, 0
      %p235 = por %p233, %p234
      %p236 = scmp.ne.s32.totalorder %s224, %s225
      %p237 = scmp.eq.s32.totalorder %s89, 1
      %p238 = por %p236, %p237
      %p240 = scmp.ne.s32.totalorder %s225, %s239
      %p241 = scmp.eq.s32.totalorder %s89, 0
      %p242 = por %p240, %p241
      %s244 = sadd.s32 %s243, 1
      %p247 = scmp.eq.s32.totalorder %s83, 1
      %p248 = scmp.ne.s32.totalorder %s243, %s245
      %p249 = scmp.eq.s32.totalorder %s83, 0
      %p250 = por %p248, %p249
      %p251 = scmp.ne.s32.totalorder %s243, %s245
      %p252 = scmp.eq.s32.totalorder %s88, 1
      %p253 = por %p251, %p252
      %p254 = scmp.ne.s32.totalorder %s245, %s246
      %p255 = scmp.eq.s32.totalorder %s88, 0
      %p256 = por %p254, %p255
      %p257 = scmp.ne.s32.totalorder %s245, %s246
      %p258 = scmp.eq.s32.totalorder %s89, 1
      %p259 = por %p257, %p258
      %p261 = scmp.ne.s32.totalorder %s246, %s260
      %p262 = scmp.eq.s32.totalorder %s89, 0
      %p263 = por %p261, %p262
      %s265 = sadd.s32 %s264, 1
      %p268 = scmp.eq.s32.totalorder %s83, 1
      %p269 = scmp.ne.s32.totalorder %s264, %s266
      %p270 = scmp.eq.s32.totalorder %s83, 0
      %p271 = por %p269, %p270
      %p272 = scmp.ne.s32.totalorder %s264, %s266
      %p273 = scmp.eq.s32.totalorder %s88, 1
      %p274 = por %p272, %p273
      %p275 = scmp.ne.s32.totalorder %s266, %s267
      %p276 = scmp.eq.s32.totalorder %s88, 0
      %p277 = por %p275, %p276
      %p278 = scmp.ne.s32.totalorder %s266, %s267
      %p279 = scmp.eq.s32.totalorder %s89, 1
      %p280 = por %p278, %p279
      %p282 = scmp.ne.s32.totalorder %s267, %s281
      %p283 = scmp.eq.s32.totalorder %s89, 0
      %p284 = por %p282, %p283
      %s286 = sadd.s32 %s285, 1
      %p289 = scmp.eq.s32.totalorder %s83, 1
      %p290 = scmp.ne.s32.totalorder %s285, %s287
      %p291 = scmp.eq.s32.totalorder %s83, 0
      %p292 = por %p290, %p291
      %p293 = scmp.ne.s32.totalorder %s285, %s287
      %p294 = scmp.eq.s32.totalorder %s88, 1
      %p295 = por %p293, %p294
      %p296 = scmp.ne.s32.totalorder %s287, %s288
      %p297 = scmp.eq.s32.totalorder %s88, 0
      %p298 = por %p296, %p297
      %p299 = scmp.ne.s32.totalorder %s287, %s288
      %p300 = scmp.eq.s32.totalorder %s89, 1
      %p301 = por %p299, %p300
      %p303 = scmp.ne.s32.totalorder %s288, %s302
      %p304 = scmp.eq.s32.totalorder %s89, 0
      %p305 = por %p303, %p304
      %s307 = sadd.s32 %s306, 1
      %p310 = scmp.eq.s32.totalorder %s83, 1
      %p311 = scmp.ne.s32.totalorder %s306, %s308
      %p312 = scmp.eq.s32.totalorder %s83, 0
      %p313 = por %p311, %p312
      %p314 = scmp.ne.s32.totalorder %s306, %s308
      %p315 = scmp.eq.s32.totalorder %s88, 1
      %p316 = por %p314, %p315
      %p317 = scmp.ne.s32.totalorder %s308, %s309
      %p318 = scmp.eq.s32.totalorder %s88, 0
      %p319 = por %p317, %p318
      %p320 = scmp.ne.s32.totalorder %s308, %s309
      %p321 = scmp.eq.s32.totalorder %s89, 1
      %p322 = por %p320, %p321
      %p324 = scmp.ne.s32.totalorder %s309, %s323
      %p325 = scmp.eq.s32.totalorder %s89, 0
      %p326 = por %p324, %p325
      %s328 = sadd.s32 %s327, 1
      %p331 = scmp.eq.s32.totalorder %s83, 1
      %p332 = scmp.ne.s32.totalorder %s327, %s329
      %p333 = scmp.eq.s32.totalorder %s83, 0
      %p334 = por %p332, %p333
      %p335 = scmp.ne.s32.totalorder %s327, %s329
      %p336 = scmp.eq.s32.totalorder %s88, 1
      %p337 = por %p335, %p336
      %p338 = scmp.ne.s32.totalorder %s329, %s330
      %p339 = scmp.eq.s32.totalorder %s88, 0
      %p340 = por %p338, %p339
      %p341 = scmp.ne.s32.totalorder %s329, %s330
      %p342 = scmp.eq.s32.totalorder %s89, 1
      %p343 = por %p341, %p342
      %p345 = scmp.ne.s32.totalorder %s330, %s344
      %p346 = scmp.eq.s32.totalorder %s89, 0
      %p347 = por %p345, %p346
      %s349 = sadd.s32 %s348, 1
      %p352 = scmp.eq.s32.totalorder %s83, 1
      %p353 = scmp.ne.s32.totalorder %s348, %s350
      %p354 = scmp.eq.s32.totalorder %s83, 0
      %p355 = por %p353, %p354
      %p356 = scmp.ne.s32.totalorder %s348, %s350
      %p357 = scmp.eq.s32.totalorder %s88, 1
      %p358 = por %p356, %p357
      %p359 = scmp.ne.s32.totalorder %s350, %s351
      %p360 = scmp.eq.s32.totalorder %s88, 0
      %p361 = por %p359, %p360
      %p362 = scmp.ne.s32.totalorder %s350, %s351
      %p363 = scmp.eq.s32.totalorder %s89, 1
      %p364 = por %p362, %p363
      %p366 = scmp.ne.s32.totalorder %s351, %s365
      %p367 = scmp.eq.s32.totalorder %s89, 0
      %p368 = por %p366, %p367
      %s370 = sadd.s32 %s369, 1
      %p373 = scmp.eq.s32.totalorder %s83, 1
      %p374 = scmp.ne.s32.totalorder %s369, %s371
      %p375 = scmp.eq.s32.totalorder %s83, 0
      %p376 = por %p374, %p375
      %p377 = scmp.ne.s32.totalorder %s369, %s371
      %p378 = scmp.eq.s32.totalorder %s88, 1
      %p379 = por %p377, %p378
      %p380 = scmp.ne.s32.totalorder %s371, %s372
      %p381 = scmp.eq.s32.totalorder %s88, 0
      %p382 = por %p380, %p381
      %p383 = scmp.ne.s32.totalorder %s371, %s372
      %p384 = scmp.eq.s32.totalorder %s89, 1
      %p385 = por %p383, %p384
      %p387 = scmp.ne.s32.totalorder %s372, %s386
      %p388 = scmp.eq.s32.totalorder %s89, 0
      %p389 = por %p387, %p388
      %s391 = sadd.s32 %s390, 1
      %p394 = scmp.eq.s32.totalorder %s83, 1
      %p395 = scmp.ne.s32.totalorder %s390, %s392
      %p396 = scmp.eq.s32.totalorder %s83, 0
      %p397 = por %p395, %p396
      %p398 = scmp.ne.s32.totalorder %s390, %s392
      %p399 = scmp.eq.s32.totalorder %s88, 1
      %p400 = por %p398, %p399
      %p401 = scmp.ne.s32.totalorder %s392, %s393
      %p402 = scmp.eq.s32.totalorder %s88, 0
      %p403 = por %p401, %p402
      %p404 = scmp.ne.s32.totalorder %s392, %s393
      %p405 = scmp.eq.s32.totalorder %s89, 1
      %p406 = por %p404, %p405
      %p408 = scmp.ne.s32.totalorder %s393, %s407
      %p409 = scmp.eq.s32.totalorder %s89, 0
      %p410 = por %p408, %p409
      %s412 = sadd.s32 %s411, 1
      %p415 = scmp.eq.s32.totalorder %s83, 1
      %p416 = scmp.ne.s32.totalorder %s411, %s413
      %p417 = scmp.eq.s32.totalorder %s83, 0
      %p418 = por %p416, %p417
      %p419 = scmp.ne.s32.totalorder %s411, %s413
      %p420 = scmp.eq.s32.totalorder %s88, 1
      %p421 = por %p419, %p420
      %p422 = scmp.ne.s32.totalorder %s413, %s414
      %p423 = scmp.eq.s32.totalorder %s88, 0
      %p424 = por %p422, %p423
      %p425 = scmp.ne.s32.totalorder %s413, %s414
      %p426 = scmp.eq.s32.totalorder %s89, 1
      %p427 = por %p425, %p426
      %p429 = scmp.ne.s32.totalorder %s414, %s428
      %p430 = scmp.eq.s32.totalorder %s89, 0
      %p431 = por %p429, %p430
      %s433 = sadd.s32 %s432, 1
      %p436 = scmp.eq.s32.totalorder %s83, 1
      %p437 = scmp.ne.s32.totalorder %s432, %s434
      %p438 = scmp.eq.s32.totalorder %s83, 0
      %p439 = por %p437, %p438
      %p440 = scmp.ne.s32.totalorder %s432, %s434
      %p441 = scmp.eq.s32.totalorder %s88, 1
      %p442 = por %p440, %p441
      %p443 = scmp.ne.s32.totalorder %s434, %s435
      %p444 = scmp.eq.s32.totalorder %s88, 0
      %p445 = por %p443, %p444
      %p446 = scmp.ne.s32.totalorder %s434, %s435
      %p447 = scmp.eq.s32.totalorder %s89, 1
      %p448 = por %p446, %p447
      %p450 = scmp.ne.s32.totalorder %s435, %s449
      %p451 = scmp.eq.s32.totalorder %s89, 0
      %p452 = por %p450, %p451
      %s454 = sadd.s32 %s453, 1
      %p457 = scmp.eq.s32.totalorder %s83, 1
      %p458 = scmp.ne.s32.totalorder %s453, %s455
      %p459 = scmp.eq.s32.totalorder %s83, 0
      %p460 = por %p458, %p459
      %p461 = scmp.ne.s32.totalorder %s453, %s455
      %p462 = scmp.eq.s32.totalorder %s88, 1
      %p463 = por %p461, %p462
      %p464 = scmp.ne.s32.totalorder %s455, %s456
      %p465 = scmp.eq.s32.totalorder %s88, 0
      %p466 = por %p464, %p465
      %p467 = scmp.ne.s32.totalorder %s455, %s456
      %p468 = scmp.eq.s32.totalorder %s89, 1
      %p469 = por %p467, %p468
      %p471 = scmp.ne.s32.totalorder %s456, %s470
      %p472 = scmp.eq.s32.totalorder %s89, 0
      %p473 = por %p471, %p472
      %s475 = sadd.s32 %s474, 1
      %p478 = scmp.eq.s32.totalorder %s83, 1
      %p479 = scmp.ne.s32.totalorder %s474, %s476
      %p480 = scmp.eq.s32.totalorder %s83, 0
      %p481 = por %p479, %p480
      %p482 = scmp.ne.s32.totalorder %s474, %s476
      %p483 = scmp.eq.s32.totalorder %s88, 1
      %p484 = por %p482, %p483
      %p485 = scmp.ne.s32.totalorder %s476, %s477
      %p486 = scmp.eq.s32.totalorder %s88, 0
      %p487 = por %p485, %p486
      %p488 = scmp.ne.s32.totalorder %s476, %s477
      %p489 = scmp.eq.s32.totalorder %s89, 1
      %p490 = por %p488, %p489
      %p492 = scmp.ne.s32.totalorder %s477, %s491
      %p493 = scmp.eq.s32.totalorder %s89, 0
      %p494 = por %p492, %p493
      %s496 = sadd.s32 %s495, 1
      %p499 = scmp.eq.s32.totalorder %s83, 1
      %p500 = scmp.ne.s32.totalorder %s495, %s497
      %p501 = scmp.eq.s32.totalorder %s83, 0
      %p502 = por %p500, %p501
      %p503 = scmp.ne.s32.totalorder %s495, %s497
      %p504 = scmp.eq.s32.totalorder %s88, 1
      %p505 = por %p503, %p504
      %p506 = scmp.ne.s32.totalorder %s497, %s498
      %p507 = scmp.eq.s32.totalorder %s88, 0
      %p508 = por %p506, %p507
      %p509 = scmp.ne.s32.totalorder %s497, %s498
      %p510 = scmp.eq.s32.totalorder %s89, 1
      %p511 = por %p509, %p510
      %p513 = scmp.ne.s32.totalorder %s498, %s512
      %p514 = scmp.eq.s32.totalorder %s89, 0
      %p515 = por %p513, %p514
      %s517 = sadd.s32 %s516, 1
      %p520 = scmp.eq.s32.totalorder %s83, 1
      %p521 = scmp.ne.s32.totalorder %s516, %s518
      %p522 = scmp.eq.s32.totalorder %s83, 0
      %p523 = por %p521, %p522
      %p524 = scmp.ne.s32.totalorder %s516, %s518
      %p525 = scmp.eq.s32.totalorder %s88, 1
      %p526 = por %p524, %p525
      %p527 = scmp.ne.s32.totalorder %s518, %s519
      %p528 = scmp.eq.s32.totalorder %s88, 0
      %p529 = por %p527, %p528
      %p530 = scmp.ne.s32.totalorder %s518, %s519
      %p531 = scmp.eq.s32.totalorder %s89, 1
      %p532 = por %p530, %p531
      %p534 = scmp.ne.s32.totalorder %s519, %s533
      %p535 = scmp.eq.s32.totalorder %s89, 0
      %p536 = por %p534, %p535
      %s538 = sadd.s32 %s537, 1
      %p541 = scmp.eq.s32.totalorder %s83, 1
      %p542 = scmp.ne.s32.totalorder %s537, %s539
      %p543 = scmp.eq.s32.totalorder %s83, 0
      %p544 = por %p542, %p543
      %p545 = scmp.ne.s32.totalorder %s537, %s539
      %p546 = scmp.eq.s32.totalorder %s88, 1
      %p547 = por %p545, %p546
      %p548 = scmp.ne.s32.totalorder %s539, %s540
      %p549 = scmp.eq.s32.totalorder %s88, 0
      %p550 = por %p548, %p549
      %p551 = scmp.ne.s32.totalorder %s539, %s540
      %p552 = scmp.eq.s32.totalorder %s89, 1
      %p553 = por %p551, %p552
      %p555 = scmp.ne.s32.totalorder %s540, %s554
      %p556 = scmp.eq.s32.totalorder %s89, 0
      %p557 = por %p555, %p556
      %s559 = sadd.s32 %s558, 1
      %p562 = scmp.eq.s32.totalorder %s83, 1
      %p563 = scmp.ne.s32.totalorder %s558, %s560
      %p564 = scmp.eq.s32.totalorder %s83, 0
      %p565 = por %p563, %p564
      %p566 = scmp.ne.s32.totalorder %s558, %s560
      %p567 = scmp.eq.s32.totalorder %s88, 1
      %p568 = por %p566, %p567
      %p569 = scmp.ne.s32.totalorder %s560, %s561
      %p570 = scmp.eq.s32.totalorder %s88, 0
      %p571 = por %p569, %p570
      %p572 = scmp.ne.s32.totalorder %s560, %s561
      %p573 = scmp.eq.s32.totalorder %s89, 1
      %p574 = por %p572, %p573
      %p576 = scmp.ne.s32.totalorder %s561, %s575
      %p577 = scmp.eq.s32.totalorder %s89, 0
      %p578 = por %p576, %p577
      %s580 = sadd.s32 %s579, 1
      %p583 = scmp.eq.s32.totalorder %s83, 1
      %p584 = scmp.ne.s32.totalorder %s579, %s581
      %p585 = scmp.eq.s32.totalorder %s83, 0
      %p586 = por %p584, %p585
      %p587 = scmp.ne.s32.totalorder %s579, %s581
      %p588 = scmp.eq.s32.totalorder %s88, 1
      %p589 = por %p587, %p588
      %p590 = scmp.ne.s32.totalorder %s581, %s582
      %p591 = scmp.eq.s32.totalorder %s88, 0
      %p592 = por %p590, %p591
      %p593 = scmp.ne.s32.totalorder %s581, %s582
      %p594 = scmp.eq.s32.totalorder %s89, 1
      %p595 = por %p593, %p594
      %p597 = scmp.ne.s32.totalorder %s582, %s596
      %p598 = scmp.eq.s32.totalorder %s89, 0
      %p599 = por %p597, %p598
      %s601 = sadd.s32 %s600, 1
      %p604 = scmp.eq.s32.totalorder %s83, 1
      %p605 = scmp.ne.s32.totalorder %s600, %s602
      %p606 = scmp.eq.s32.totalorder %s83, 0
      %p607 = por %p605, %p606
      %p608 = scmp.ne.s32.totalorder %s600, %s602
      %p609 = scmp.eq.s32.totalorder %s88, 1
      %p610 = por %p608, %p609
      %p611 = scmp.ne.s32.totalorder %s602, %s603
      %p612 = scmp.eq.s32.totalorder %s88, 0
      %p613 = por %p611, %p612
      %p614 = scmp.ne.s32.totalorder %s602, %s603
      %p615 = scmp.eq.s32.totalorder %s89, 1
      %p616 = por %p614, %p615
      %p618 = scmp.ne.s32.totalorder %s603, %s617
      %p619 = scmp.eq.s32.totalorder %s89, 0
      %p620 = por %p618, %p619
      %s622 = sadd.s32 %s621, 1
      %p625 = scmp.eq.s32.totalorder %s83, 1
      %p626 = scmp.ne.s32.totalorder %s621, %s623
      %p627 = scmp.eq.s32.totalorder %s83, 0
      %p628 = por %p626, %p627
      %p629 = scmp.ne.s32.totalorder %s621, %s623
      %p630 = scmp.eq.s32.totalorder %s88, 1
      %p631 = por %p629, %p630
      %p632 = scmp.ne.s32.totalorder %s623, %s624
      %p633 = scmp.eq.s32.totalorder %s88, 0
      %p634 = por %p632, %p633
      %p635 = scmp.ne.s32.totalorder %s623, %s624
      %p636 = scmp.eq.s32.totalorder %s89, 1
      %p637 = por %p635, %p636
      %p639 = scmp.ne.s32.totalorder %s624, %s638
      %p640 = scmp.eq.s32.totalorder %s89, 0
      %p641 = por %p639, %p640
      %s643 = sadd.s32 %s642, 1
      %p646 = scmp.eq.s32.totalorder %s83, 1
      %p647 = scmp.ne.s32.totalorder %s642, %s644
      %p648 = scmp.eq.s32.totalorder %s83, 0
      %p649 = por %p647, %p648
      %p650 = scmp.ne.s32.totalorder %s642, %s644
      %p651 = scmp.eq.s32.totalorder %s88, 1
      %p652 = por %p650, %p651
      %p653 = scmp.ne.s32.totalorder %s644, %s645
      %p654 = scmp.eq.s32.totalorder %s88, 0
      %p655 = por %p653, %p654
      %p656 = scmp.ne.s32.totalorder %s644, %s645
      %p657 = scmp.eq.s32.totalorder %s89, 1
      %p658 = por %p656, %p657
      %p660 = scmp.ne.s32.totalorder %s645, %s659
      %p661 = scmp.eq.s32.totalorder %s89, 0
      %p662 = por %p660, %p661
      %s664 = sadd.s32 %s663, 1
      %p667 = scmp.eq.s32.totalorder %s83, 1
      %p668 = scmp.ne.s32.totalorder %s663, %s665
      %p669 = scmp.eq.s32.totalorder %s83, 0
      %p670 = por %p668, %p669
      %p671 = scmp.ne.s32.totalorder %s663, %s665
      %p672 = scmp.eq.s32.totalorder %s88, 1
      %p673 = por %p671, %p672
      %p674 = scmp.ne.s32.totalorder %s665, %s666
      %p675 = scmp.eq.s32.totalorder %s88, 0
      %p676 = por %p674, %p675
      %p677 = scmp.ne.s32.totalorder %s665, %s666
      %p678 = scmp.eq.s32.totalorder %s89, 1
      %p679 = por %p677, %p678
      %p681 = scmp.ne.s32.totalorder %s666, %s680
      %p682 = scmp.eq.s32.totalorder %s89, 0
      %p683 = por %p681, %p682
      %s685 = sadd.s32 %s684, 1
      %p688 = scmp.eq.s32.totalorder %s83, 1
      %p689 = scmp.ne.s32.totalorder %s684, %s686
      %p690 = scmp.eq.s32.totalorder %s83, 0
      %p691 = por %p689, %p690
      %p692 = scmp.ne.s32.totalorder %s684, %s686
      %p693 = scmp.eq.s32.totalorder %s88, 1
      %p694 = por %p692, %p693
      %p695 = scmp.ne.s32.totalorder %s686, %s687
      %p696 = scmp.eq.s32.totalorder %s88, 0
      %p697 = por %p695, %p696
      %p698 = scmp.ne.s32.totalorder %s686, %s687
      %p699 = scmp.eq.s32.totalorder %s89, 1
      %p700 = por %p698, %p699
      %p702 = scmp.ne.s32.totalorder %s687, %s701
      %p703 = scmp.eq.s32.totalorder %s89, 0
      %p704 = por %p702, %p703
      %s706 = sadd.s32 %s705, 1
      %p709 = scmp.eq.s32.totalorder %s83, 1
      %p710 = scmp.ne.s32.totalorder %s705, %s707
      %p711 = scmp.eq.s32.totalorder %s83, 0
      %p712 = por %p710, %p711
      %p713 = scmp.ne.s32.totalorder %s705, %s707
      %p714 = scmp.eq.s32.totalorder %s88, 1
      %p715 = por %p713, %p714
      %p716 = scmp.ne.s32.totalorder %s707, %s708
      %p717 = scmp.eq.s32.totalorder %s88, 0
      %p718 = por %p716, %p717
      %p719 = scmp.ne.s32.totalorder %s707, %s708
      %p720 = scmp.eq.s32.totalorder %s89, 1
      %p721 = por %p719, %p720
      %p723 = scmp.ne.s32.totalorder %s708, %s722
      %p724 = scmp.eq.s32.totalorder %s89, 0
      %p725 = por %p723, %p724
      %s727 = sadd.s32 %s726, 1
      %p730 = scmp.eq.s32.totalorder %s83, 1
      %p731 = scmp.ne.s32.totalorder %s726, %s728
      %p732 = scmp.eq.s32.totalorder %s83, 0
      %p733 = por %p731, %p732
      %p734 = scmp.ne.s32.totalorder %s726, %s728
      %p735 = scmp.eq.s32.totalorder %s88, 1
      %p736 = por %p734, %p735
      %p737 = scmp.ne.s32.totalorder %s728, %s729
      %p738 = scmp.eq.s32.totalorder %s88, 0
      %p739 = por %p737, %p738
      %p740 = scmp.ne.s32.totalorder %s728, %s729
      %p741 = scmp.eq.s32.totalorder %s89, 1
      %p742 = por %p740, %p741
      %p744 = scmp.ne.s32.totalorder %s729, %s743
      %p745 = scmp.eq.s32.totalorder %s89, 0
      %p746 = por %p744, %p745
      %s748 = sadd.s32 %s747, 1
      %p751 = scmp.eq.s32.totalorder %s83, 1
      %p752 = scmp.ne.s32.totalorder %s747, %s749
      %p753 = scmp.eq.s32.totalorder %s83, 0
      %p754 = por %p752, %p753
      %p755 = scmp.ne.s32.totalorder %s747, %s749
      %p756 = scmp.eq.s32.totalorder %s88, 1
      %p757 = por %p755, %p756
      %p758 = scmp.ne.s32.totalorder %s749, %s750
      %p759 = scmp.eq.s32.totalorder %s88, 0
      %p760 = por %p758, %p759
      %p761 = scmp.ne.s32.totalorder %s749, %s750
      %p762 = scmp.eq.s32.totalorder %s89, 1
      %p763 = por %p761, %p762
      %p765 = scmp.ne.s32.totalorder %s750, %s764
      %p766 = scmp.eq.s32.totalorder %s89, 0
      %p767 = por %p765, %p766
      %s769 = sadd.s32 %s768, 1
      %p772 = scmp.eq.s32.totalorder %s83, 1
      %p773 = scmp.ne.s32.totalorder %s768, %s770
      %p774 = scmp.eq.s32.totalorder %s83, 0
      %p775 = por %p773, %p774
      %p776 = scmp.ne.s32.totalorder %s768, %s770
      %p777 = scmp.eq.s32.totalorder %s88, 1
      %p778 = por %p776, %p777
      %p779 = scmp.ne.s32.totalorder %s770, %s771
      %p780 = scmp.eq.s32.totalorder %s88, 0
      %p781 = por %p779, %p780
      %p782 = scmp.ne.s32.totalorder %s770, %s771
      %p783 = scmp.eq.s32.totalorder %s89, 1
      %p784 = por %p782, %p783
      %p786 = scmp.ne.s32.totalorder %s771, %s785
      %p787 = scmp.eq.s32.totalorder %s89, 0
      %p788 = por %p786, %p787
      %s789 = ssub.s32 %s83, %s90
      %p790 = scmp.eq.s32.totalorder %s789, 0
      %s792 = sadd.s32 %s791, 1
      %s793 = scalar_select %p790, %s791, %s792
      %p796 = pneg %p790
      %p797 = scmp.eq.s32.totalorder %s83, 1
      %p798 = por %p796, %p797
      %p799 = scmp.ne.s32.totalorder %s791, %s794
      %p800 = scmp.eq.s32.totalorder %s83, 0
      %p801 = por %p799, %p800
      %p802 = scmp.ne.s32.totalorder %s791, %s794
      %p803 = scmp.eq.s32.totalorder %s88, 1
      %p804 = por %p802, %p803
      %p805 = scmp.ne.s32.totalorder %s794, %s795
      %p806 = scmp.eq.s32.totalorder %s88, 0
      %p807 = por %p805, %p806
      %p808 = scmp.ne.s32.totalorder %s794, %s795
      %p809 = scmp.eq.s32.totalorder %s89, 1
      %p810 = por %p808, %p809
      %p812 = scmp.ne.s32.totalorder %s795, %s811
      %p813 = scmp.eq.s32.totalorder %s89, 0
      %p814 = por %p812, %p813
      %p815 = scmp.le.s32.totalorder 1, %s83
      %p816 = scmp.lt.s32.totalorder %s83, 3
      %p817 = pnand %p815, %p816
      %p818 = pneg %p817
      // Predicated region
      $region9: #{transformer_lstm_forward.1} parent=5 // pred_check
        _
      $region10: #{transformer_lstm_forward.1} parent=5 // pred_check_branch
        %820 = sbr.rel (%p817) target = $region12
      $region11: #{transformer_lstm_forward.1} parent=5 // pred_region
        %s821 = ssub.s32 %s83, 1
        // Predicated region
        $region13: #{transformer_lstm_forward.1} parent=11 // pred_check
          %p822 = pneg %p130
        $region14: #{transformer_lstm_forward.1} parent=11 // pred_check_branch
          %824 = sbr.rel (%p822) target = $region16
        $region15: #{transformer_lstm_forward.1} parent=11 // pred_region
          _
        $region16: #{transformer_lstm_forward.1} parent=11 // pred_fallthru
          _
        // Predicated region
        $region17: #{transformer_lstm_forward.1} parent=11 // pred_check
          %p825 = pneg %p151
        $region18: #{transformer_lstm_forward.1} parent=11 // pred_check_branch
          %827 = sbr.rel (%p825) target = $region20
        $region19: #{transformer_lstm_forward.1} parent=11 // pred_region
          _
        $region20: #{transformer_lstm_forward.1} parent=11 // pred_fallthru
          _
        // Predicated region
        $region21: #{transformer_lstm_forward.1} parent=11 // pred_check
          %p828 = pneg %p172
        $region22: #{transformer_lstm_forward.1} parent=11 // pred_check_branch
          %830 = sbr.rel (%p828) target = $region24
        $region23: #{transformer_lstm_forward.1} parent=11 // pred_region
          _
        $region24: #{transformer_lstm_forward.1} parent=11 // pred_fallthru
          _
        // Predicated region
        $region25: #{transformer_lstm_forward.1} parent=11 // pred_check
          %p831 = pneg %p193
        $region26: #{transformer_lstm_forward.1} parent=11 // pred_check_branch
          %833 = sbr.rel (%p831) target = $region28
        $region27: #{transformer_lstm_forward.1} parent=11 // pred_region
          %835 = vsyncadd [#allocation4], 0
          %s837 = sshll.u32 %s9, 4
          %s838 = int_to_ptr.hbm [resolvable:$true] %s837
          %s839 = sshll.u32 [#allocation3], 4
          %s840 = int_to_ptr.vmem [resolvable:$true] %s839
          %842 = dma.hbm_to_vmem [thread:$0]  %s838, 16, %s840, [#allocation4]
        $region28: #{transformer_lstm_forward.1} parent=11 // pred_fallthru
          _
        // Predicated region
        $region29: #{transformer_lstm_forward.1} parent=11 // pred_check
          %p843 = pneg %p214
        $region30: #{transformer_lstm_forward.1} parent=11 // pred_check_branch
          %845 = sbr.rel (%p843) target = $region32
        $region31: #{transformer_lstm_forward.1} parent=11 // pred_region
          _
        $region32: #{transformer_lstm_forward.1} parent=11 // pred_fallthru
          _
        // Predicated region
        $region33: #{transformer_lstm_forward.1} parent=11 // pred_check
          %p846 = pneg %p235
        $region34: #{transformer_lstm_forward.1} parent=11 // pred_check_branch
          %848 = sbr.rel (%p846) target = $region36
        $region35: #{transformer_lstm_forward.1} parent=11 // pred_region
          %850 = vsyncadd [#allocation6], 0
          %s852 = sshll.u32 %s13, 4
          %s853 = int_to_ptr.hbm [resolvable:$true] %s852
          %s854 = sshll.u32 [#allocation5], 4
          %s855 = int_to_ptr.vmem [resolvable:$true] %s854
          %857 = dma.hbm_to_vmem [thread:$0]  %s853, 16, %s855, [#allocation6]
        $region36: #{transformer_lstm_forward.1} parent=11 // pred_fallthru
          _
        // Predicated region
        $region37: #{transformer_lstm_forward.1} parent=11 // pred_check
          %p858 = pneg %p256
        $region38: #{transformer_lstm_forward.1} parent=11 // pred_check_branch
          %860 = sbr.rel (%p858) target = $region40
        $region39: #{transformer_lstm_forward.1} parent=11 // pred_region
          _
        $region40: #{transformer_lstm_forward.1} parent=11 // pred_fallthru
          _
        // Predicated region
        $region41: #{transformer_lstm_forward.1} parent=11 // pred_check
          %p861 = pneg %p277
        $region42: #{transformer_lstm_forward.1} parent=11 // pred_check_branch
          %863 = sbr.rel (%p861) target = $region44
        $region43: #{transformer_lstm_forward.1} parent=11 // pred_region
          %865 = vsyncadd [#allocation6], 0
          %s867 = sshll.u32 %s17, 4
          %s868 = int_to_ptr.hbm [resolvable:$true] %s867
          %s869 = sshll.u32 [#allocation7], 4
          %s870 = int_to_ptr.vmem [resolvable:$true] %s869
          %872 = dma.hbm_to_vmem [thread:$0]  %s868, 16, %s870, [#allocation6]
        $region44: #{transformer_lstm_forward.1} parent=11 // pred_fallthru
          _
        // Predicated region
        $region45: #{transformer_lstm_forward.1} parent=11 // pred_check
          %p873 = pneg %p298
        $region46: #{transformer_lstm_forward.1} parent=11 // pred_check_branch
          %875 = sbr.rel (%p873) target = $region48
        $region47: #{transformer_lstm_forward.1} parent=11 // pred_region
          %877 = vsyncadd [#allocation9], 0
          %s879 = sshll.u32 %s19, 4
          %s880 = int_to_ptr.hbm [resolvable:$true] %s879
          %s881 = sshll.u32 [#allocation8], 4
          %s882 = int_to_ptr.vmem [resolvable:$true] %s881
          %884 = dma.hbm_to_vmem [thread:$0]  %s880, 16, %s882, [#allocation9]
        $region48: #{transformer_lstm_forward.1} parent=11 // pred_fallthru
          _
        // Predicated region
        $region49: #{transformer_lstm_forward.1} parent=11 // pred_check
          %p885 = pneg %p319
        $region50: #{transformer_lstm_forward.1} parent=11 // pred_check_branch
          %887 = sbr.rel (%p885) target = $region52
        $region51: #{transformer_lstm_forward.1} parent=11 // pred_region
          %889 = vsyncadd [#allocation9], 0
          %s891 = sshll.u32 %s21, 4
          %s892 = int_to_ptr.hbm [resolvable:$true] %s891
          %s893 = sshll.u32 [#allocation10], 4
          %s894 = int_to_ptr.vmem [resolvable:$true] %s893
          %896 = dma.hbm_to_vmem [thread:$0]  %s892, 16, %s894, [#allocation9]
        $region52: #{transformer_lstm_forward.1} parent=11 // pred_fallthru
          _
        // Predicated region
        $region53: #{transformer_lstm_forward.1} parent=11 // pred_check
          %p897 = pneg %p340
        $region54: #{transformer_lstm_forward.1} parent=11 // pred_check_branch
          %899 = sbr.rel (%p897) target = $region56
        $region55: #{transformer_lstm_forward.1} parent=11 // pred_region
          %901 = vsyncadd [#allocation12], 0
          %s903 = sshll.u32 %s23, 4
          %s904 = int_to_ptr.hbm [resolvable:$true] %s903
          %s905 = sshll.u32 [#allocation11], 4
          %s906 = int_to_ptr.vmem [resolvable:$true] %s905
          %908 = dma.hbm_to_vmem [thread:$0]  %s904, 16, %s906, [#allocation12]
        $region56: #{transformer_lstm_forward.1} parent=11 // pred_fallthru
          _
        // Predicated region
        $region57: #{transformer_lstm_forward.1} parent=11 // pred_check
          %p909 = pneg %p361
        $region58: #{transformer_lstm_forward.1} parent=11 // pred_check_branch
          %911 = sbr.rel (%p909) target = $region60
        $region59: #{transformer_lstm_forward.1} parent=11 // pred_region
          %913 = vsyncadd [#allocation12], 0
          %s915 = sshll.u32 %s25, 4
          %s916 = int_to_ptr.hbm [resolvable:$true] %s915
          %s917 = sshll.u32 [#allocation13], 4
          %s918 = int_to_ptr.vmem [resolvable:$true] %s917
          %920 = dma.hbm_to_vmem [thread:$0]  %s916, 16, %s918, [#allocation12]
        $region60: #{transformer_lstm_forward.1} parent=11 // pred_fallthru
          _
        // Predicated region
        $region61: #{transformer_lstm_forward.1} parent=11 // pred_check
          %p921 = pneg %p382
        $region62: #{transformer_lstm_forward.1} parent=11 // pred_check_branch
          %923 = sbr.rel (%p921) target = $region64
        $region63: #{transformer_lstm_forward.1} parent=11 // pred_region
          _
        $region64: #{transformer_lstm_forward.1} parent=11 // pred_fallthru
          _
        // Predicated region
        $region65: #{transformer_lstm_forward.1} parent=11 // pred_check
          %p924 = pneg %p403
        $region66: #{transformer_lstm_forward.1} parent=11 // pred_check_branch
          %926 = sbr.rel (%p924) target = $region68
        $region67: #{transformer_lstm_forward.1} parent=11 // pred_region
          %928 = vsyncadd [#allocation15], 0
          %s930 = sshll.u32 %s29, 4
          %s931 = int_to_ptr.hbm [resolvable:$true] %s930
          %s932 = sshll.u32 [#allocation14], 4
          %s933 = int_to_ptr.vmem [resolvable:$true] %s932
          %935 = dma.hbm_to_vmem [thread:$0]  %s931, 16, %s933, [#allocation15]
        $region68: #{transformer_lstm_forward.1} parent=11 // pred_fallthru
          _
        // Predicated region
        $region69: #{transformer_lstm_forward.1} parent=11 // pred_check
          %p936 = pneg %p424
        $region70: #{transformer_lstm_forward.1} parent=11 // pred_check_branch
          %938 = sbr.rel (%p936) target = $region72
        $region71: #{transformer_lstm_forward.1} parent=11 // pred_region
          _
        $region72: #{transformer_lstm_forward.1} parent=11 // pred_fallthru
          _
        // Predicated region
        $region73: #{transformer_lstm_forward.1} parent=11 // pred_check
          %p939 = pneg %p445
        $region74: #{transformer_lstm_forward.1} parent=11 // pred_check_branch
          %941 = sbr.rel (%p939) target = $region76
        $region75: #{transformer_lstm_forward.1} parent=11 // pred_region
          %943 = vsyncadd [#allocation15], 0
          %s945 = sshll.u32 %s33, 4
          %s946 = int_to_ptr.hbm [resolvable:$true] %s945
          %s947 = sshll.u32 [#allocation16], 4
          %s948 = int_to_ptr.vmem [resolvable:$true] %s947
          %950 = dma.hbm_to_vmem [thread:$0]  %s946, 16, %s948, [#allocation15]
        $region76: #{transformer_lstm_forward.1} parent=11 // pred_fallthru
          _
        // Predicated region
        $region77: #{transformer_lstm_forward.1} parent=11 // pred_check
          %p951 = pneg %p466
        $region78: #{transformer_lstm_forward.1} parent=11 // pred_check_branch
          %953 = sbr.rel (%p951) target = $region80
        $region79: #{transformer_lstm_forward.1} parent=11 // pred_region
          %955 = vsyncadd [#allocation18], 0
          %s956 = sshll.u32 %s35, 4
          %s957 = int_to_ptr.hbm [resolvable:$true] %s956
          %s958 = sshll.u32 [#allocation17], 4
          %s959 = int_to_ptr.vmem [resolvable:$true] %s958
          %964 = dma.hbm_to_vmem [thread:$0]  %s957, 128, %s959, [#allocation18], 64, 64, 4
        $region80: #{transformer_lstm_forward.1} parent=11 // pred_fallthru
          _
        // Predicated region
        $region81: #{transformer_lstm_forward.1} parent=11 // pred_check
          %p965 = pneg %p487
        $region82: #{transformer_lstm_forward.1} parent=11 // pred_check_branch
          %967 = sbr.rel (%p965) target = $region84
        $region83: #{transformer_lstm_forward.1} parent=11 // pred_region
          %969 = vsyncadd [#allocation18], 0
          %s971 = sshll.u32 %s37, 4
          %s972 = int_to_ptr.hbm [resolvable:$true] %s971
          %s973 = sshll.u32 [#allocation19], 4
          %s974 = int_to_ptr.vmem [resolvable:$true] %s973
          %976 = dma.hbm_to_vmem [thread:$0]  %s972, 16, %s974, [#allocation18]
        $region84: #{transformer_lstm_forward.1} parent=11 // pred_fallthru
          _
        // Predicated region
        $region85: #{transformer_lstm_forward.1} parent=11 // pred_check
          %p977 = pneg %p508
        $region86: #{transformer_lstm_forward.1} parent=11 // pred_check_branch
          %979 = sbr.rel (%p977) target = $region88
        $region87: #{transformer_lstm_forward.1} parent=11 // pred_region
          _
        $region88: #{transformer_lstm_forward.1} parent=11 // pred_fallthru
          _
        // Predicated region
        $region89: #{transformer_lstm_forward.1} parent=11 // pred_check
          %p980 = pneg %p529
        $region90: #{transformer_lstm_forward.1} parent=11 // pred_check_branch
          %982 = sbr.rel (%p980) target = $region92
        $region91: #{transformer_lstm_forward.1} parent=11 // pred_region
          %984 = vsyncadd [#allocation21], 0
          %s986 = sshll.u32 %s41, 4
          %s987 = int_to_ptr.hbm [resolvable:$true] %s986
          %s988 = sshll.u32 [#allocation20], 4
          %s989 = int_to_ptr.vmem [resolvable:$true] %s988
          %991 = dma.hbm_to_vmem [thread:$0]  %s987, 16, %s989, [#allocation21]
        $region92: #{transformer_lstm_forward.1} parent=11 // pred_fallthru
          _
        // Predicated region
        $region93: #{transformer_lstm_forward.1} parent=11 // pred_check
          %p992 = pneg %p550
        $region94: #{transformer_lstm_forward.1} parent=11 // pred_check_branch
          %994 = sbr.rel (%p992) target = $region96
        $region95: #{transformer_lstm_forward.1} parent=11 // pred_region
          _
        $region96: #{transformer_lstm_forward.1} parent=11 // pred_fallthru
          _
        // Predicated region
        $region97: #{transformer_lstm_forward.1} parent=11 // pred_check
          %p995 = pneg %p571
        $region98: #{transformer_lstm_forward.1} parent=11 // pred_check_branch
          %997 = sbr.rel (%p995) target = $region100
        $region99: #{transformer_lstm_forward.1} parent=11 // pred_region
          %999 = vsyncadd [#allocation21], 0
          %s1001 = sshll.u32 %s45, 4
          %s1002 = int_to_ptr.hbm [resolvable:$true] %s1001
          %s1003 = sshll.u32 [#allocation22], 4
          %s1004 = int_to_ptr.vmem [resolvable:$true] %s1003
          %1006 = dma.hbm_to_vmem [thread:$0]  %s1002, 16, %s1004, [#allocation21]
        $region100: #{transformer_lstm_forward.1} parent=11 // pred_fallthru
          _
        // Predicated region
        $region101: #{transformer_lstm_forward.1} parent=11 // pred_check
          %p1007 = pneg %p592
        $region102: #{transformer_lstm_forward.1} parent=11 // pred_check_branch
          %1009 = sbr.rel (%p1007) target = $region104
        $region103: #{transformer_lstm_forward.1} parent=11 // pred_region
          _
        $region104: #{transformer_lstm_forward.1} parent=11 // pred_fallthru
          _
        // Predicated region
        $region105: #{transformer_lstm_forward.1} parent=11 // pred_check
          %p1010 = pneg %p613
        $region106: #{transformer_lstm_forward.1} parent=11 // pred_check_branch
          %1012 = sbr.rel (%p1010) target = $region108
        $region107: #{transformer_lstm_forward.1} parent=11 // pred_region
          %1014 = vsyncadd [#allocation24], 0
          %s1016 = sshll.u32 %s49, 4
          %s1017 = int_to_ptr.hbm [resolvable:$true] %s1016
          %s1018 = sshll.u32 [#allocation23], 4
          %s1019 = int_to_ptr.vmem [resolvable:$true] %s1018
          %1021 = dma.hbm_to_vmem [thread:$0]  %s1017, 16, %s1019, [#allocation24]
        $region108: #{transformer_lstm_forward.1} parent=11 // pred_fallthru
          _
        // Predicated region
        $region109: #{transformer_lstm_forward.1} parent=11 // pred_check
          %p1022 = pneg %p634
        $region110: #{transformer_lstm_forward.1} parent=11 // pred_check_branch
          %1024 = sbr.rel (%p1022) target = $region112
        $region111: #{transformer_lstm_forward.1} parent=11 // pred_region
          %1026 = vsyncadd [#allocation24], 0
          %s1027 = sshll.u32 %s51, 4
          %s1028 = int_to_ptr.hbm [resolvable:$true] %s1027
          %s1029 = sshll.u32 [#allocation25], 4
          %s1030 = int_to_ptr.vmem [resolvable:$true] %s1029
          %1035 = dma.hbm_to_vmem [thread:$0]  %s1028, 128, %s1030, [#allocation24], 64, 64, 4
        $region112: #{transformer_lstm_forward.1} parent=11 // pred_fallthru
          _
        // Predicated region
        $region113: #{transformer_lstm_forward.1} parent=11 // pred_check
          %p1036 = pneg %p655
        $region114: #{transformer_lstm_forward.1} parent=11 // pred_check_branch
          %1038 = sbr.rel (%p1036) target = $region116
        $region115: #{transformer_lstm_forward.1} parent=11 // pred_region
          _
        $region116: #{transformer_lstm_forward.1} parent=11 // pred_fallthru
          _
        // Predicated region
        $region117: #{transformer_lstm_forward.1} parent=11 // pred_check
          %p1039 = pneg %p676
        $region118: #{transformer_lstm_forward.1} parent=11 // pred_check_branch
          %1041 = sbr.rel (%p1039) target = $region120
        $region119: #{transformer_lstm_forward.1} parent=11 // pred_region
          %1043 = vsyncadd [#allocation27], 0
          %s1045 = sshll.u32 %s55, 4
          %s1046 = int_to_ptr.hbm [resolvable:$true] %s1045
          %s1047 = sshll.u32 [#allocation26], 4
          %s1048 = int_to_ptr.vmem [resolvable:$true] %s1047
          %1050 = dma.hbm_to_vmem [thread:$0]  %s1046, 16, %s1048, [#allocation27]
        $region120: #{transformer_lstm_forward.1} parent=11 // pred_fallthru
          _
        // Predicated region
        $region121: #{transformer_lstm_forward.1} parent=11 // pred_check
          %p1051 = pneg %p697
        $region122: #{transformer_lstm_forward.1} parent=11 // pred_check_branch
          %1053 = sbr.rel (%p1051) target = $region124
        $region123: #{transformer_lstm_forward.1} parent=11 // pred_region
          _
        $region124: #{transformer_lstm_forward.1} parent=11 // pred_fallthru
          _
        // Predicated region
        $region125: #{transformer_lstm_forward.1} parent=11 // pred_check
          %p1054 = pneg %p718
        $region126: #{transformer_lstm_forward.1} parent=11 // pred_check_branch
          %1056 = sbr.rel (%p1054) target = $region128
        $region127: #{transformer_lstm_forward.1} parent=11 // pred_region
          _
        $region128: #{transformer_lstm_forward.1} parent=11 // pred_fallthru
          _
        // Predicated region
        $region129: #{transformer_lstm_forward.1} parent=11 // pred_check
          %p1057 = pneg %p739
        $region130: #{transformer_lstm_forward.1} parent=11 // pred_check_branch
          %1059 = sbr.rel (%p1057) target = $region132
        $region131: #{transformer_lstm_forward.1} parent=11 // pred_region
          %1061 = vsyncadd [#allocation27], 0
          %s1063 = sshll.u32 %s61, 4
          %s1064 = int_to_ptr.hbm [resolvable:$true] %s1063
          %s1065 = sshll.u32 [#allocation28], 4
          %s1066 = int_to_ptr.vmem [resolvable:$true] %s1065
          %1068 = dma.hbm_to_vmem [thread:$0]  %s1064, 16, %s1066, [#allocation27]
        $region132: #{transformer_lstm_forward.1} parent=11 // pred_fallthru
          _
        // Predicated region
        $region133: #{transformer_lstm_forward.1} parent=11 // pred_check
          %p1069 = pneg %p760
        $region134: #{transformer_lstm_forward.1} parent=11 // pred_check_branch
          %1071 = sbr.rel (%p1069) target = $region136
        $region135: #{transformer_lstm_forward.1} parent=11 // pred_region
          _
        $region136: #{transformer_lstm_forward.1} parent=11 // pred_fallthru
          _
        // Predicated region
        $region137: #{transformer_lstm_forward.1} parent=11 // pred_check
          %p1072 = pneg %p781
        $region138: #{transformer_lstm_forward.1} parent=11 // pred_check_branch
          %1074 = sbr.rel (%p1072) target = $region140
        $region139: #{transformer_lstm_forward.1} parent=11 // pred_region
          %1076 = vsyncadd [#allocation30], 0
          %s1078 = sshll.u32 %s65, 4
          %s1079 = int_to_ptr.hbm [resolvable:$true] %s1078
          %s1080 = sshll.u32 [#allocation29], 4
          %s1081 = int_to_ptr.vmem [resolvable:$true] %s1080
          %1083 = dma.hbm_to_vmem [thread:$0]  %s1079, 16, %s1081, [#allocation30]
        $region140: #{transformer_lstm_forward.1} parent=11 // pred_fallthru
          _
      $region12: #{transformer_lstm_forward.1} parent=5 // pred_fallthru
        _
      %p1084 = scmp.lt.s32.totalorder %s83, 2
      // Predicated region
      $region141: #{transformer_lstm_forward.1} parent=5 // pred_check
        %p1085 = pneg %p1084
      $region142: #{transformer_lstm_forward.1} parent=5 // pred_check_branch
        %1087 = sbr.rel (%p1085) target = $region144
      $region143: #{transformer_lstm_forward.1} parent=5 // pred_region
        // Predicated region
        $region145: #{transformer_lstm_forward.1} parent=143 // pred_check
          %p1088 = pneg %p103
        $region146: #{transformer_lstm_forward.1} parent=143 // pred_check_branch
          %1090 = sbr.rel (%p1088) target = $region148
        $region147: #{transformer_lstm_forward.1} parent=143 // pred_region
          %p1091 = scmp.lt.s32.totalorder %s83, 1
          %s1092 = scalar_select %p1091, %s83, 1
          %s1093 = smul.addr %s1092, 8
          %s1094 = scalar_lea.vmem %s1, %s1093
        $region148: #{transformer_lstm_forward.1} parent=143 // pred_fallthru
          _
      $region144: #{transformer_lstm_forward.1} parent=5 // pred_fallthru
        _
      %p1095 = scmp.le.s32.totalorder 1, %s83
      %p1096 = scmp.lt.s32.totalorder %s83, 3
      %p1097 = pnand %p1095, %p1096
      %p1098 = pneg %p1097
      // Predicated region
      $region149: #{transformer_lstm_forward.1} parent=5 // pred_check
        _
      $region150: #{transformer_lstm_forward.1} parent=5 // pred_check_branch
        %1100 = sbr.rel (%p1097) target = $region152
      $region151: #{transformer_lstm_forward.1} parent=5 // pred_region
        %s1101 = ssub.s32 %s83, 1
        // Predicated region
        $region153: #{transformer_lstm_forward.1} parent=151 // pred_check
          %p1102 = pneg %p193
        $region154: #{transformer_lstm_forward.1} parent=151 // pred_check_branch
          %1104 = sbr.rel (%p1102) target = $region156
        $region155: #{transformer_lstm_forward.1} parent=151 // pred_region
          %1106 = dma.done [#allocation4], 16
        $region156: #{transformer_lstm_forward.1} parent=151 // pred_fallthru
          _
        // Predicated region
        $region157: #{transformer_lstm_forward.1} parent=151 // pred_check
          %p1107 = pneg %p235
        $region158: #{transformer_lstm_forward.1} parent=151 // pred_check_branch
          %1109 = sbr.rel (%p1107) target = $region160
        $region159: #{transformer_lstm_forward.1} parent=151 // pred_region
          %1111 = dma.done [#allocation6], 16
        $region160: #{transformer_lstm_forward.1} parent=151 // pred_fallthru
          _
        // Predicated region
        $region161: #{transformer_lstm_forward.1} parent=151 // pred_check
          %p1112 = pneg %p277
        $region162: #{transformer_lstm_forward.1} parent=151 // pred_check_branch
          %1114 = sbr.rel (%p1112) target = $region164
        $region163: #{transformer_lstm_forward.1} parent=151 // pred_region
          %1116 = dma.done [#allocation6], 16
        $region164: #{transformer_lstm_forward.1} parent=151 // pred_fallthru
          _
        // Predicated region
        $region165: #{transformer_lstm_forward.1} parent=151 // pred_check
          %p1117 = pneg %p298
        $region166: #{transformer_lstm_forward.1} parent=151 // pred_check_branch
          %1119 = sbr.rel (%p1117) target = $region168
        $region167: #{transformer_lstm_forward.1} parent=151 // pred_region
          %1121 = dma.done [#allocation9], 16
        $region168: #{transformer_lstm_forward.1} parent=151 // pred_fallthru
          _
        // Predicated region
        $region169: #{transformer_lstm_forward.1} parent=151 // pred_check
          %p1122 = pneg %p319
        $region170: #{transformer_lstm_forward.1} parent=151 // pred_check_branch
          %1124 = sbr.rel (%p1122) target = $region172
        $region171: #{transformer_lstm_forward.1} parent=151 // pred_region
          %1126 = dma.done [#allocation9], 16
        $region172: #{transformer_lstm_forward.1} parent=151 // pred_fallthru
          _
        // Predicated region
        $region173: #{transformer_lstm_forward.1} parent=151 // pred_check
          %p1127 = pneg %p340
        $region174: #{transformer_lstm_forward.1} parent=151 // pred_check_branch
          %1129 = sbr.rel (%p1127) target = $region176
        $region175: #{transformer_lstm_forward.1} parent=151 // pred_region
          %1131 = dma.done [#allocation12], 16
        $region176: #{transformer_lstm_forward.1} parent=151 // pred_fallthru
          _
        // Predicated region
        $region177: #{transformer_lstm_forward.1} parent=151 // pred_check
          %p1132 = pneg %p361
        $region178: #{transformer_lstm_forward.1} parent=151 // pred_check_branch
          %1134 = sbr.rel (%p1132) target = $region180
        $region179: #{transformer_lstm_forward.1} parent=151 // pred_region
          %1136 = dma.done [#allocation12], 16
        $region180: #{transformer_lstm_forward.1} parent=151 // pred_fallthru
          _
        // Predicated region
        $region181: #{transformer_lstm_forward.1} parent=151 // pred_check
          %p1137 = pneg %p403
        $region182: #{transformer_lstm_forward.1} parent=151 // pred_check_branch
          %1139 = sbr.rel (%p1137) target = $region184
        $region183: #{transformer_lstm_forward.1} parent=151 // pred_region
          %1141 = dma.done [#allocation15], 16
        $region184: #{transformer_lstm_forward.1} parent=151 // pred_fallthru
          _
        // Predicated region
        $region185: #{transformer_lstm_forward.1} parent=151 // pred_check
          %p1142 = pneg %p445
        $region186: #{transformer_lstm_forward.1} parent=151 // pred_check_branch
          %1144 = sbr.rel (%p1142) target = $region188
        $region187: #{transformer_lstm_forward.1} parent=151 // pred_region
          %1146 = dma.done [#allocation15], 16
        $region188: #{transformer_lstm_forward.1} parent=151 // pred_fallthru
          _
        // Predicated region
        $region189: #{transformer_lstm_forward.1} parent=151 // pred_check
          %p1147 = pneg %p466
        $region190: #{transformer_lstm_forward.1} parent=151 // pred_check_branch
          %1149 = sbr.rel (%p1147) target = $region192
        $region191: #{transformer_lstm_forward.1} parent=151 // pred_region
          %1151 = dma.done [#allocation18], 128
        $region192: #{transformer_lstm_forward.1} parent=151 // pred_fallthru
          _
        // Predicated region
        $region193: #{transformer_lstm_forward.1} parent=151 // pred_check
          %p1152 = pneg %p487
        $region194: #{transformer_lstm_forward.1} parent=151 // pred_check_branch
          %1154 = sbr.rel (%p1152) target = $region196
        $region195: #{transformer_lstm_forward.1} parent=151 // pred_region
          %1156 = dma.done [#allocation18], 16
        $region196: #{transformer_lstm_forward.1} parent=151 // pred_fallthru
          _
        // Predicated region
        $region197: #{transformer_lstm_forward.1} parent=151 // pred_check
          %p1157 = pneg %p529
        $region198: #{transformer_lstm_forward.1} parent=151 // pred_check_branch
          %1159 = sbr.rel (%p1157) target = $region200
        $region199: #{transformer_lstm_forward.1} parent=151 // pred_region
          %1161 = dma.done [#allocation21], 16
        $region200: #{transformer_lstm_forward.1} parent=151 // pred_fallthru
          _
        // Predicated region
        $region201: #{transformer_lstm_forward.1} parent=151 // pred_check
          %p1162 = pneg %p571
        $region202: #{transformer_lstm_forward.1} parent=151 // pred_check_branch
          %1164 = sbr.rel (%p1162) target = $region204
        $region203: #{transformer_lstm_forward.1} parent=151 // pred_region
          %1166 = dma.done [#allocation21], 16
        $region204: #{transformer_lstm_forward.1} parent=151 // pred_fallthru
          _
        // Predicated region
        $region205: #{transformer_lstm_forward.1} parent=151 // pred_check
          %p1167 = pneg %p613
        $region206: #{transformer_lstm_forward.1} parent=151 // pred_check_branch
          %1169 = sbr.rel (%p1167) target = $region208
        $region207: #{transformer_lstm_forward.1} parent=151 // pred_region
          %1171 = dma.done [#allocation24], 16
        $region208: #{transformer_lstm_forward.1} parent=151 // pred_fallthru
          _
        // Predicated region
        $region209: #{transformer_lstm_forward.1} parent=151 // pred_check
          %p1172 = pneg %p634
        $region210: #{transformer_lstm_forward.1} parent=151 // pred_check_branch
          %1174 = sbr.rel (%p1172) target = $region212
        $region211: #{transformer_lstm_forward.1} parent=151 // pred_region
          %1176 = dma.done [#allocation24], 128
        $region212: #{transformer_lstm_forward.1} parent=151 // pred_fallthru
          _
        // Predicated region
        $region213: #{transformer_lstm_forward.1} parent=151 // pred_check
          %p1177 = pneg %p676
        $region214: #{transformer_lstm_forward.1} parent=151 // pred_check_branch
          %1179 = sbr.rel (%p1177) target = $region216
        $region215: #{transformer_lstm_forward.1} parent=151 // pred_region
          %1181 = dma.done [#allocation27], 16
        $region216: #{transformer_lstm_forward.1} parent=151 // pred_fallthru
          _
        // Predicated region
        $region217: #{transformer_lstm_forward.1} parent=151 // pred_check
          %p1182 = pneg %p739
        $region218: #{transformer_lstm_forward.1} parent=151 // pred_check_branch
          %1184 = sbr.rel (%p1182) target = $region220
        $region219: #{transformer_lstm_forward.1} parent=151 // pred_region
          %1186 = dma.done [#allocation27], 16
        $region220: #{transformer_lstm_forward.1} parent=151 // pred_fallthru
          _
        // Predicated region
        $region221: #{transformer_lstm_forward.1} parent=151 // pred_check
          %p1187 = pneg %p781
        $region222: #{transformer_lstm_forward.1} parent=151 // pred_check_branch
          %1189 = sbr.rel (%p1187) target = $region224
        $region223: #{transformer_lstm_forward.1} parent=151 // pred_region
          %1191 = dma.done [#allocation30], 16
        $region224: #{transformer_lstm_forward.1} parent=151 // pred_fallthru
          _
        %p1192 = scmp.lt.s32.totalorder %s88, 1
        %s1193 = scalar_select %p1192, %s88, 1
        %s1194 = smul.addr %s1193, 8
        %s1195 = scalar_lea.vmem %s1, %s1194
        %p1196 = pneg %p109
        %p1197 = pneg %p106
        %p1198 = pneg %p130
        %p1199 = pneg %p127
        %p1200 = pneg %p151
        %p1201 = pneg %p148
        %p1202 = pneg %p172
        %p1203 = pneg %p169
        %p1204 = pneg %p193
        %p1205 = pneg %p190
        %p1206 = pneg %p214
        %p1207 = pneg %p211
        %p1208 = pneg %p235
        %p1209 = pneg %p232
        %p1210 = pneg %p256
        %p1211 = pneg %p253
        %p1212 = pneg %p277
        %p1213 = pneg %p274
        %p1214 = pneg %p298
        %p1215 = pneg %p295
        %p1216 = pneg %p319
        %p1217 = pneg %p316
        %p1218 = pneg %p340
        %p1219 = pneg %p337
        %p1220 = pneg %p361
        %p1221 = pneg %p358
        %p1222 = pneg %p382
        %p1223 = pneg %p379
        %p1224 = pneg %p403
        %p1225 = pneg %p400
        %p1226 = pneg %p424
        %p1227 = pneg %p421
        %p1228 = pneg %p445
        %p1229 = pneg %p442
        %p1230 = pneg %p466
        %p1231 = pneg %p463
        %p1232 = pneg %p487
        %p1233 = pneg %p484
        %p1234 = pneg %p508
        %p1235 = pneg %p505
        %p1236 = pneg %p529
        %p1237 = pneg %p526
        %p1238 = pneg %p550
        %p1239 = pneg %p547
        %p1240 = pneg %p571
        %p1241 = pneg %p568
        %p1242 = pneg %p592
        %p1243 = pneg %p589
        %p1244 = pneg %p613
        %p1245 = pneg %p610
        %p1246 = pneg %p634
        %p1247 = pneg %p631
        %p1248 = pneg %p655
        %p1249 = pneg %p652
        %p1250 = pneg %p676
        %p1251 = pneg %p673
        %p1252 = pneg %p697
        %p1253 = pneg %p694
        %p1254 = pneg %p718
        %p1255 = pneg %p715
        %p1256 = pneg %p739
        %p1257 = pneg %p736
        %p1258 = pneg %p760
        %p1259 = pneg %p757
        %p1260 = pneg %p781
        %p1261 = pneg %p778
        %p1262 = pneg %p807
        %p1263 = pneg %p804
        %p1264 = scmp.lt.s32.totalorder %s88, 1
        %s1265 = scalar_select %p1264, %s88, 1
        %s1266 = smul.addr %s1265, 8
        %s1267 = scalar_lea.vmem %s67, %s1266
        %p1268 = scmp.lt.s32.totalorder %s88, 1
        %s1269 = scalar_select %p1268, %s88, 1
        %s1270 = smul.addr %s1269, 8
        %s1271 = scalar_lea.vmem %s1, %s1270
        %p1272 = scmp.lt.s32.totalorder %s88, 1
        %s1273 = scalar_select %p1272, %s88, 1
        %s1274 = smul.addr %s1273, 8
        %s1275 = scalar_lea.vmem %s67, %s1274
        %v1277 = vld [vmem:[%s1271] sm:$0xff]
        %v1278 = vld [vmem:[%s3] sm:$0xf]
        %v1279 = vld [vmem:[%s3 + $0x4] sm:$0xf]
        %v1280 = vld [vmem:[%s5] sm:$0x1]
        %v1281 = vld [vmem:[%s7] sm:$0xf]
        %v1282 = vld [vmem:[%s7 + $0x4] sm:$0xf]
        %v1283 = vld [vmem:[#allocation3] sm:$0x1]
        %v1284 = vld [vmem:[%s11] sm:$0xf]
        %v1285 = vld [vmem:[%s11 + $0x4] sm:$0xf]
        %v1286 = vld [vmem:[#allocation5] sm:$0x1]
        %v1287 = vld [vmem:[%s15] sm:$0xf]
        %v1288 = vld [vmem:[%s15 + $0x4] sm:$0xf]
        %v1289 = vld [vmem:[%s15 + $0x8] sm:$0xf]
        %v1290 = vld [vmem:[%s15 + $0xc] sm:$0xf]
        %v1291 = vld [vmem:[%s15 + $0x10] sm:$0xf]
        %v1292 = vld [vmem:[%s15 + $0x14] sm:$0xf]
        %v1293 = vld [vmem:[%s15 + $0x18] sm:$0xf]
        %v1294 = vld [vmem:[%s15 + $0x1c] sm:$0xf]
        %v1295 = vld [vmem:[#allocation7] sm:$0x1]
        %v1296 = vld [vmem:[#allocation8] sm:$0x1]
        %v1297 = vld [vmem:[#allocation10] sm:$0x1]
        %v1298 = vld [vmem:[#allocation11] sm:$0x1]
        %v1299 = vld [vmem:[#allocation13] sm:$0x1]
        %v1300 = vpack.c.bf16 %v1277, %v1277
        %v1302 = vperm.slane %v1280, 0
        %v1306 = vunpack.c.l.b16 %v1278
        %v1307 = vunpack.c.l.b16 %v1279
        %v1308 = vpack.c.b16 %v1307, %v1306
        %vm1310 = vcmask 130048
        %v1312 = vsel %vm1310, %v1300, 0
        %1314 = vmatpush.bf16.msra.mxu0 0
        %1315 = vmatpush.bf16.msra.mxu0 0
        %1316 = vmatpush.bf16.msra.mxu0 0
        %1317 = vmatpush.bf16.msra.mxu0 0
        %1318 = vmatpush.bf16.msra.mxu0 0
        %1319 = vmatpush.bf16.msra.mxu0 0
        %1320 = vmatpush.bf16.msra.mxu0 0
        %1321 = vmatpush.bf16.msra.mxu0 %v1308
        %1322 = vmatmul.bf16.gmra.mxu0 %v1312
        %v1323 = vpop.f32.mrf.mxu0
        %v1324 = vadd.f32 %v1302, %v1323
        %v1325 = vpop.f32.mrf.mxu0
        %1326 = vdwg.mxu0
        %v1327 = vmul.f32 %v1324, 0.5
        %1329 = vrot.lane.b32.xlu0 %v1327, 124
        %v1330 = vpop.permute.xlu0 %1329
        %1332 = vrot.lane.b32.xlu0 %v1327, 120
        %v1333 = vpop.permute.xlu0 %1332
        %1335 = vrot.lane.b32.xlu0 %v1327, 116
        %v1336 = vpop.permute.xlu0 %1335
        %1339 = vrot.lane.b32.xlu0 %v1324, 124
        %v1340 = vpop.permute.xlu0 %1339
        %1342 = vrot.lane.b32.xlu0 %v1324, 120
        %v1343 = vpop.permute.xlu0 %1342
        %1345 = vrot.lane.b32.xlu0 %v1324, 116
        %v1346 = vpop.permute.xlu0 %1345
        %v1348 = vpack.c.bf16 %v1327, %v1327
        %v1349 = vpack.c.bf16 %v1330, %v1330
        %v1350 = vpack.c.bf16 %v1333, %v1333
        %v1351 = vpack.c.bf16 %v1336, %v1336
        %v1352 = vpack.c.bf16 %v1324, %v1324
        %v1353 = vpack.c.bf16 %v1340, %v1340
        %v1354 = vpack.c.bf16 %v1343, %v1343
        %v1355 = vpack.c.bf16 %v1346, %v1346
        %v1357 = vunpack.c.l.b16 %v1352
        %v1358 = vpack.c.b16 %v1357, %v1357
        %1359 = vrot.lane.b32.xlu0 %v1358, 112
        %v1360 = vpop.permute.xlu0 %1359
        %vm1361 = vcmask 31744
        %v1363 = vsel %vm1361, %v1348, 0
        %v1366 = vsel %vm1361, %v1360, 0
        %1368 = vmatpush.bf16.xpose.msra.mxu0 0
        %1369 = vmatpush.bf16.xpose.msra.mxu0 0
        %1370 = vmatpush.bf16.xpose.msra.mxu0 0
        %1371 = vmatpush.bf16.xpose.msra.mxu0 0
        %1372 = vmatpush.bf16.xpose.msra.mxu0 0
        %1373 = vmatpush.bf16.xpose.msra.mxu0 0
        %1374 = vmatpush.bf16.xpose.msra.mxu0 0
        %1375 = vmatpush.bf16.xpose.msra.mxu0 %v1366
        %1376 = vmatmul.bf16.gmra.mxu0 %v1363
        %v1377 = vpop.f32.mrf.mxu0
        %v1378 = vadd.f32 0.0, %v1377
        %v1379 = vpop.f32.mrf.mxu0
        %1380 = vdwg.mxu0
        %v1382 = vunpack.c.l.b16 %v1353
        %v1383 = vpack.c.b16 %v1382, %v1382
        %1384 = vrot.lane.b32.xlu0 %v1383, 112
        %v1385 = vpop.permute.xlu0 %1384
        %v1387 = vsel %vm1361, %v1349, 0
        %v1390 = vsel %vm1361, %v1385, 0
        %1392 = vmatpush.bf16.xpose.msra.mxu0 0
        %1393 = vmatpush.bf16.xpose.msra.mxu0 0
        %1394 = vmatpush.bf16.xpose.msra.mxu0 0
        %1395 = vmatpush.bf16.xpose.msra.mxu0 0
        %1396 = vmatpush.bf16.xpose.msra.mxu0 0
        %1397 = vmatpush.bf16.xpose.msra.mxu0 0
        %1398 = vmatpush.bf16.xpose.msra.mxu0 0
        %1399 = vmatpush.bf16.xpose.msra.mxu0 %v1390
        %1400 = vmatmul.bf16.gmra.mxu0 %v1387
        %v1401 = vpop.f32.mrf.mxu0
        %v1402 = vadd.f32 0.0, %v1401
        %v1403 = vpop.f32.mrf.mxu0
        %1404 = vdwg.mxu0
        %v1406 = vunpack.c.l.b16 %v1354
        %v1407 = vpack.c.b16 %v1406, %v1406
        %1408 = vrot.lane.b32.xlu0 %v1407, 112
        %v1409 = vpop.permute.xlu0 %1408
        %v1411 = vsel %vm1361, %v1350, 0
        %v1414 = vsel %vm1361, %v1409, 0
        %1416 = vmatpush.bf16.xpose.msra.mxu0 0
        %1417 = vmatpush.bf16.xpose.msra.mxu0 0
        %1418 = vmatpush.bf16.xpose.msra.mxu0 0
        %1419 = vmatpush.bf16.xpose.msra.mxu0 0
        %1420 = vmatpush.bf16.xpose.msra.mxu0 0
        %1421 = vmatpush.bf16.xpose.msra.mxu0 0
        %1422 = vmatpush.bf16.xpose.msra.mxu0 0
        %1423 = vmatpush.bf16.xpose.msra.mxu0 %v1414
        %1424 = vmatmul.bf16.gmra.mxu0 %v1411
        %v1425 = vpop.f32.mrf.mxu0
        %v1426 = vadd.f32 0.0, %v1425
        %v1427 = vpop.f32.mrf.mxu0
        %1428 = vdwg.mxu0
        %v1430 = vunpack.c.l.b16 %v1355
        %v1431 = vpack.c.b16 %v1430, %v1430
        %1432 = vrot.lane.b32.xlu0 %v1431, 112
        %v1433 = vpop.permute.xlu0 %1432
        %v1435 = vsel %vm1361, %v1351, 0
        %v1438 = vsel %vm1361, %v1433, 0
        %1440 = vmatpush.bf16.xpose.msra.mxu0 0
        %1441 = vmatpush.bf16.xpose.msra.mxu0 0
        %1442 = vmatpush.bf16.xpose.msra.mxu0 0
        %1443 = vmatpush.bf16.xpose.msra.mxu0 0
        %1444 = vmatpush.bf16.xpose.msra.mxu0 0
        %1445 = vmatpush.bf16.xpose.msra.mxu0 0
        %1446 = vmatpush.bf16.xpose.msra.mxu0 0
        %1447 = vmatpush.bf16.xpose.msra.mxu0 %v1438
        %1448 = vmatmul.bf16.gmra.mxu0 %v1435
        %v1449 = vpop.f32.mrf.mxu0
        %v1450 = vadd.f32 0.0, %v1449
        %v1451 = vpop.f32.mrf.mxu0
        %1452 = vdwg.mxu0
        %vm1453 = vcmask 64512
        %v1454 = vsel %vm1453, %v1378, -inf
        %1455 = vmax.xlane.f32.xlu0 %v1454
        %v1456 = vpop.xlane.xlu0 %1455
        %v1457 = vsel %vm1453, %v1402, -inf
        %1458 = vmax.xlane.f32.xlu0 %v1457
        %v1459 = vpop.xlane.xlu0 %1458
        %v1460 = vsel %vm1453, %v1426, -inf
        %1461 = vmax.xlane.f32.xlu0 %v1460
        %v1462 = vpop.xlane.xlu0 %1461
        %v1463 = vsel %vm1453, %v1450, -inf
        %1464 = vmax.xlane.f32.xlu0 %v1463
        %v1465 = vpop.xlane.xlu0 %1464
        %v1466 = vsub.f32 %v1378, %v1456
        %v1467 = vsub.f32 %v1402, %v1459
        %v1468 = vsub.f32 %v1426, %v1462
        %v1469 = vsub.f32 %v1450, %v1465
        %v1470 = vmul.f32 %v1466, 1.442695
        %v1471 = vpow.pop %v1470
        %v1472 = vmul.f32 %v1467, 1.442695
        %v1473 = vpow.pop %v1472
        %v1474 = vmul.f32 %v1468, 1.442695
        %v1475 = vpow.pop %v1474
        %v1476 = vmul.f32 %v1469, 1.442695
        %v1477 = vpow.pop %v1476
        %v1478 = vsel %vm1453, %v1471, 0.0
        %1479 = vadd.xlane.f32.xlu0 %v1478
        %v1480 = vpop.xlane.xlu0 %1479
        %v1481 = vsel %vm1453, %v1473, 0.0
        %1482 = vadd.xlane.f32.xlu0 %v1481
        %v1483 = vpop.xlane.xlu0 %1482
        %v1484 = vsel %vm1453, %v1475, 0.0
        %1485 = vadd.xlane.f32.xlu0 %v1484
        %v1486 = vpop.xlane.xlu0 %1485
        %v1487 = vsel %vm1453, %v1477, 0.0
        %1488 = vadd.xlane.f32.xlu0 %v1487
        %v1489 = vpop.xlane.xlu0 %1488
        %v1490 = vrcp.pop %v1480
        %v1491 = vmul.f32 %v1480, %v1490
        %v1492 = vsub.f32 1.0, %v1491
        %v1493 = vmul.f32 %v1490, %v1492
        %v1494 = vadd.f32 %v1490, %v1493
        %vm1495 = vweird.f32 %v1480
        %vm1496 = vweird.f32 %v1490
        %vm1497 = vmor %vm1495, %vm1496
        %v1498 = vsel %vm1497, %v1490, %v1494
        %v1499 = vand.u32 2147483647, %v1480
        %vm1500 = vcmp.eq.f32.partialorder %v1499, 8.507059e+37
        %v1501 = vand.u32 %v1480, 2147483648
        %v1502 = vor.u32 1.1754944e-38, %v1501
        %v1503 = vsel %vm1500, %v1502, %v1498
        %v1504 = vmul.f32 %v1471, %v1503
        %v1505 = vrcp.pop %v1483
        %v1506 = vmul.f32 %v1483, %v1505
        %v1507 = vsub.f32 1.0, %v1506
        %v1508 = vmul.f32 %v1505, %v1507
        %v1509 = vadd.f32 %v1505, %v1508
        %vm1510 = vweird.f32 %v1483
        %vm1511 = vweird.f32 %v1505
        %vm1512 = vmor %vm1510, %vm1511
        %v1513 = vsel %vm1512, %v1505, %v1509
        %v1514 = vand.u32 2147483647, %v1483
        %vm1515 = vcmp.eq.f32.partialorder %v1514, 8.507059e+37
        %v1516 = vand.u32 %v1483, 2147483648
        %v1517 = vor.u32 1.1754944e-38, %v1516
        %v1518 = vsel %vm1515, %v1517, %v1513
        %v1519 = vmul.f32 %v1473, %v1518
        %v1520 = vrcp.pop %v1486
        %v1521 = vmul.f32 %v1486, %v1520
        %v1522 = vsub.f32 1.0, %v1521
        %v1523 = vmul.f32 %v1520, %v1522
        %v1524 = vadd.f32 %v1520, %v1523
        %vm1525 = vweird.f32 %v1486
        %vm1526 = vweird.f32 %v1520
        %vm1527 = vmor %vm1525, %vm1526
        %v1528 = vsel %vm1527, %v1520, %v1524
        %v1529 = vand.u32 2147483647, %v1486
        %vm1530 = vcmp.eq.f32.partialorder %v1529, 8.507059e+37
        %v1531 = vand.u32 %v1486, 2147483648
        %v1532 = vor.u32 1.1754944e-38, %v1531
        %v1533 = vsel %vm1530, %v1532, %v1528
        %v1534 = vmul.f32 %v1475, %v1533
        %v1535 = vrcp.pop %v1489
        %v1536 = vmul.f32 %v1489, %v1535
        %v1537 = vsub.f32 1.0, %v1536
        %v1538 = vmul.f32 %v1535, %v1537
        %v1539 = vadd.f32 %v1535, %v1538
        %vm1540 = vweird.f32 %v1489
        %vm1541 = vweird.f32 %v1535
        %vm1542 = vmor %vm1540, %vm1541
        %v1543 = vsel %vm1542, %v1535, %v1539
        %v1544 = vand.u32 2147483647, %v1489
        %vm1545 = vcmp.eq.f32.partialorder %v1544, 8.507059e+37
        %v1546 = vand.u32 %v1489, 2147483648
        %v1547 = vor.u32 1.1754944e-38, %v1546
        %v1548 = vsel %vm1545, %v1547, %v1543
        %v1549 = vmul.f32 %v1477, %v1548
        %v1550 = vpack.c.bf16 %v1504, %v1504
        %v1551 = vpack.c.bf16 %v1519, %v1519
        %v1552 = vpack.c.bf16 %v1534, %v1534
        %v1553 = vpack.c.bf16 %v1549, %v1549
        %1554 = vrot.lane.b32.xlu0 %v1358, 96
        %v1555 = vpop.permute.xlu0 %1554
        %v1557 = vsel %vm1453, %v1550, 0
        %vm1559 = vcmask 1043456
        %v1561 = vsel %vm1559, %v1555, 0
        %1563 = vmatpush.bf16.msra.mxu0 0
        %1564 = vmatpush.bf16.msra.mxu0 0
        %1565 = vmatpush.bf16.msra.mxu0 0
        %1566 = vmatpush.bf16.msra.mxu0 0
        %1567 = vmatpush.bf16.msra.mxu0 0
        %1568 = vmatpush.bf16.msra.mxu0 0
        %1569 = vmatpush.bf16.msra.mxu0 0
        %1570 = vmatpush.bf16.msra.mxu0 %v1561
        %1571 = vmatmul.bf16.gmra.mxu0 %v1557
        %v1572 = vpop.f32.mrf.mxu0
        %v1573 = vadd.f32 0.0, %v1572
        %v1574 = vpop.f32.mrf.mxu0
        %1575 = vdwg.mxu0
        %1576 = vrot.lane.b32.xlu0 %v1383, 96
        %v1577 = vpop.permute.xlu0 %1576
        %v1579 = vsel %vm1453, %v1551, 0
        %v1582 = vsel %vm1559, %v1577, 0
        %1584 = vmatpush.bf16.msra.mxu0 0
        %1585 = vmatpush.bf16.msra.mxu0 0
        %1586 = vmatpush.bf16.msra.mxu0 0
        %1587 = vmatpush.bf16.msra.mxu0 0
        %1588 = vmatpush.bf16.msra.mxu0 0
        %1589 = vmatpush.bf16.msra.mxu0 0
        %1590 = vmatpush.bf16.msra.mxu0 0
        %1591 = vmatpush.bf16.msra.mxu0 %v1582
        %1592 = vmatmul.bf16.gmra.mxu0 %v1579
        %v1593 = vpop.f32.mrf.mxu0
        %v1594 = vadd.f32 0.0, %v1593
        %v1595 = vpop.f32.mrf.mxu0
        %1596 = vdwg.mxu0
        %1597 = vrot.lane.b32.xlu0 %v1407, 96
        %v1598 = vpop.permute.xlu0 %1597
        %v1600 = vsel %vm1453, %v1552, 0
        %v1603 = vsel %vm1559, %v1598, 0
        %1605 = vmatpush.bf16.msra.mxu0 0
        %1606 = vmatpush.bf16.msra.mxu0 0
        %1607 = vmatpush.bf16.msra.mxu0 0
        %1608 = vmatpush.bf16.msra.mxu0 0
        %1609 = vmatpush.bf16.msra.mxu0 0
        %1610 = vmatpush.bf16.msra.mxu0 0
        %1611 = vmatpush.bf16.msra.mxu0 0
        %1612 = vmatpush.bf16.msra.mxu0 %v1603
        %1613 = vmatmul.bf16.gmra.mxu0 %v1600
        %v1614 = vpop.f32.mrf.mxu0
        %v1615 = vadd.f32 0.0, %v1614
        %v1616 = vpop.f32.mrf.mxu0
        %1617 = vdwg.mxu0
        %1618 = vrot.lane.b32.xlu0 %v1431, 96
        %v1619 = vpop.permute.xlu0 %1618
        %v1621 = vsel %vm1453, %v1553, 0
        %v1624 = vsel %vm1559, %v1619, 0
        %1626 = vmatpush.bf16.msra.mxu0 0
        %1627 = vmatpush.bf16.msra.mxu0 0
        %1628 = vmatpush.bf16.msra.mxu0 0
        %1629 = vmatpush.bf16.msra.mxu0 0
        %1630 = vmatpush.bf16.msra.mxu0 0
        %1631 = vmatpush.bf16.msra.mxu0 0
        %1632 = vmatpush.bf16.msra.mxu0 0
        %1633 = vmatpush.bf16.msra.mxu0 %v1624
        %1634 = vmatmul.bf16.gmra.mxu0 %v1621
        %v1635 = vpop.f32.mrf.mxu0
        %v1636 = vadd.f32 0.0, %v1635
        %v1637 = vpop.f32.mrf.mxu0
        %1638 = vdwg.mxu0
        %1640 = vrot.lane.b32.xlu0 %v1594, 4
        %v1641 = vpop.permute.xlu0 %1640
        %1644 = vrot.lane.b32.xlu0 %v1615, 8
        %v1645 = vpop.permute.xlu0 %1644
        %1648 = vrot.lane.b32.xlu0 %v1636, 12
        %v1649 = vpop.permute.xlu0 %1648
        %v1651 = vsel %vm1361, %v1573, %v1641
        %v1652 = vsel %vm1453, %v1651, %v1645
        %vm1653 = vcmask 97280
        %v1654 = vsel %vm1653, %v1652, %v1649
        %v1655 = vpack.c.bf16 %v1654, %v1654
        %v1657 = vperm.slane %v1283, 0
        %v1661 = vunpack.c.l.b16 %v1281
        %v1662 = vunpack.c.l.b16 %v1282
        %v1663 = vpack.c.b16 %v1662, %v1661
        %v1666 = vsel %vm1310, %v1655, 0
        %1668 = vmatpush.bf16.msra.mxu0 0
        %1669 = vmatpush.bf16.msra.mxu0 0
        %1670 = vmatpush.bf16.msra.mxu0 0
        %1671 = vmatpush.bf16.msra.mxu0 0
        %1672 = vmatpush.bf16.msra.mxu0 0
        %1673 = vmatpush.bf16.msra.mxu0 0
        %1674 = vmatpush.bf16.msra.mxu0 0
        %1675 = vmatpush.bf16.msra.mxu0 %v1663
        %1676 = vmatmul.bf16.gmra.mxu0 %v1666
        %v1677 = vpop.f32.mrf.mxu0
        %v1678 = vadd.f32 %v1657, %v1677
        %v1679 = vpop.f32.mrf.mxu0
        %1680 = vdwg.mxu0
        %v1681 = vadd.f32 %v1277, %v1678
        %v1682 = vsel %vm1310, %v1681, 0.0
        %1683 = vadd.xlane.f32.xlu0 %v1682
        %v1684 = vpop.xlane.xlu0 %1683
        %v1685 = vrcp.pop 16.0
        %v1686 = vmul.f32 16.0, %v1685
        %v1687 = vsub.f32 1.0, %v1686
        %v1688 = vmul.f32 %v1685, %v1687
        %v1689 = vadd.f32 %v1685, %v1688
        %vm1690 = vweird.f32 %v1685
        %v1691 = vsel %vm1690, %v1685, %v1689
        %v1692 = vmul.f32 %v1684, %v1691
        %v1693 = vsub.f32 %v1681, %v1692
        %v1694 = vmul.f32 %v1693, %v1693
        %v1695 = vsel %vm1310, %v1694, 0.0
        %1696 = vadd.xlane.f32.xlu0 %v1695
        %v1697 = vpop.xlane.xlu0 %1696
        %v1698 = vmul.f32 %v1697, %v1691
        %v1699 = vadd.f32 %v1698, 1e-05
        %v1700 = vrsqrt.pop %v1699
        %v1701 = vmul.f32 %v1700, %v1699
        %v1702 = vmul.f32 %v1701, %v1700
        %v1703 = vmul.f32 0.5, %v1702
        %v1704 = vsub.f32 1.5, %v1703
        %v1705 = vmul.f32 %v1700, %v1704
        %vm1706 = vweird.f32 %v1699
        %vm1707 = vweird.f32 %v1700
        %vm1708 = vmor %vm1706, %vm1707
        %v1709 = vsel %vm1708, %v1700, %v1705
        %v1710 = vmul.f32 %v1693, %v1709
        %v1712 = vperm.slane %v1296, 0
        %v1714 = vmul.f32 %v1710, %v1712
        %v1716 = vperm.slane %v1297, 0
        %v1718 = vadd.f32 %v1714, %v1716
        %v1719 = vpack.c.bf16 %v1718, %v1718
        %v1721 = vperm.slane %v1286, 0
        %v1725 = vunpack.c.l.b16 %v1284
        %v1726 = vunpack.c.l.b16 %v1285
        %v1727 = vpack.c.b16 %v1726, %v1725
        %v1730 = vsel %vm1310, %v1719, 0
        %1732 = vmatpush.bf16.msra.mxu0 0
        %1733 = vmatpush.bf16.msra.mxu0 0
        %1734 = vmatpush.bf16.msra.mxu0 0
        %1735 = vmatpush.bf16.msra.mxu0 0
        %1736 = vmatpush.bf16.msra.mxu0 0
        %1737 = vmatpush.bf16.msra.mxu0 0
        %1738 = vmatpush.bf16.msra.mxu0 0
        %1739 = vmatpush.bf16.msra.mxu0 %v1727
        %1740 = vmatmul.bf16.gmra.mxu0 %v1730
        %v1741 = vpop.f32.mrf.mxu0
        %v1742 = vadd.f32 %v1721, %v1741
        %v1743 = vpop.f32.mrf.mxu0
        %1744 = vdwg.mxu0
        %v1745 = vmax.f32 %v1742, 0.0
        %v1746 = vpack.c.bf16 %v1745, %v1745
        %v1748 = vperm.slane %v1295, 0
        %v1758 = vunpack.c.l.b16 %v1287
        %v1759 = vunpack.c.l.b16 %v1288
        %v1760 = vunpack.c.l.b16 %v1289
        %v1761 = vunpack.c.l.b16 %v1290
        %v1762 = vunpack.c.l.b16 %v1291
        %v1763 = vunpack.c.l.b16 %v1292
        %v1764 = vunpack.c.l.b16 %v1293
        %v1765 = vunpack.c.l.b16 %v1294
        %v1766 = vpack.c.b16 %v1759, %v1758
        %v1767 = vpack.c.b16 %v1761, %v1760
        %v1768 = vpack.c.b16 %v1763, %v1762
        %v1769 = vpack.c.b16 %v1765, %v1764
        %vm1774 = vcmask 523264
        %v1776 = vsel %vm1774, %v1746, 0
        %1778 = vmatpush.bf16.msra.mxu0 0
        %1779 = vmatpush.bf16.msra.mxu0 0
        %1780 = vmatpush.bf16.msra.mxu0 0
        %1781 = vmatpush.bf16.msra.mxu0 0
        %1782 = vmatpush.bf16.msra.mxu0 %v1769
        %1783 = vmatpush.bf16.msra.mxu0 %v1768
        %1784 = vmatpush.bf16.msra.mxu0 %v1767
        %1785 = vmatpush.bf16.msra.mxu0 %v1766
        %1786 = vmatmul.bf16.gmra.mxu0 %v1776
        %v1787 = vpop.f32.mrf.mxu0
        %v1788 = vadd.f32 %v1748, %v1787
        %v1789 = vpop.f32.mrf.mxu0
        %1790 = vdwg.mxu0
        %v1791 = vadd.f32 %v1718, %v1788
        %v1792 = vsel %vm1310, %v1791, 0.0
        %1793 = vadd.xlane.f32.xlu0 %v1792
        %v1794 = vpop.xlane.xlu0 %1793
        %v1795 = vmul.f32 %v1794, %v1691
        %v1796 = vsub.f32 %v1791, %v1795
        %v1797 = vmul.f32 %v1796, %v1796
        %v1798 = vsel %vm1310, %v1797, 0.0
        %1799 = vadd.xlane.f32.xlu0 %v1798
        %v1800 = vpop.xlane.xlu0 %1799
        %v1801 = vmul.f32 %v1800, %v1691
        %v1802 = vadd.f32 %v1801, 1e-05
        %v1803 = vrsqrt.pop %v1802
        %v1804 = vmul.f32 %v1803, %v1802
        %v1805 = vmul.f32 %v1804, %v1803
        %v1806 = vmul.f32 0.5, %v1805
        %v1807 = vsub.f32 1.5, %v1806
        %v1808 = vmul.f32 %v1803, %v1807
        %vm1809 = vweird.f32 %v1802
        %vm1810 = vweird.f32 %v1803
        %vm1811 = vmor %vm1809, %vm1810
        %v1812 = vsel %vm1811, %v1803, %v1808
        %v1813 = vmul.f32 %v1796, %v1812
        %v1815 = vperm.slane %v1298, 0
        %v1817 = vmul.f32 %v1813, %v1815
        %v1819 = vperm.slane %v1299, 0
        %v1821 = vadd.f32 %v1817, %v1819
        %v1822 = vld [vmem:[%s27] sm:$0xf]
        %v1823 = vld [vmem:[%s27 + $0x4] sm:$0xf]
        %v1824 = vld [vmem:[#allocation14] sm:$0x1]
        %v1825 = vld [vmem:[%s31] sm:$0xf]
        %v1826 = vld [vmem:[%s31 + $0x4] sm:$0xf]
        %v1827 = vld [vmem:[#allocation16] sm:$0x1]
        %v1828 = vld [vmem:[#allocation17] sm:$0xf]
        %v1829 = vld [vmem:[#allocation17 + $0x4] sm:$0xf]
        %v1830 = vld [vmem:[#allocation19] sm:$0x1]
        %v1831 = vld [vmem:[%s39] sm:$0xf]
        %v1832 = vld [vmem:[%s39 + $0x4] sm:$0xf]
        %v1833 = vld [vmem:[%s39 + $0x8] sm:$0xf]
        %v1834 = vld [vmem:[%s39 + $0xc] sm:$0xf]
        %v1835 = vld [vmem:[%s39 + $0x10] sm:$0xf]
        %v1836 = vld [vmem:[%s39 + $0x14] sm:$0xf]
        %v1837 = vld [vmem:[%s39 + $0x18] sm:$0xf]
        %v1838 = vld [vmem:[%s39 + $0x1c] sm:$0xf]
        %v1839 = vld [vmem:[#allocation20] sm:$0x1]
        %v1840 = vld [vmem:[%s43] sm:$0x1]
        %v1841 = vld [vmem:[#allocation22] sm:$0x1]
        %v1842 = vld [vmem:[%s47] sm:$0x1]
        %v1843 = vld [vmem:[#allocation23] sm:$0x1]
        %v1844 = vpack.c.bf16 %v1821, %v1821
        %v1846 = vperm.slane %v1824, 0
        %v1850 = vunpack.c.l.b16 %v1822
        %v1851 = vunpack.c.l.b16 %v1823
        %v1852 = vpack.c.b16 %v1851, %v1850
        %v1855 = vsel %vm1310, %v1844, 0
        %1857 = vmatpush.bf16.msra.mxu0 0
        %1858 = vmatpush.bf16.msra.mxu0 0
        %1859 = vmatpush.bf16.msra.mxu0 0
        %1860 = vmatpush.bf16.msra.mxu0 0
        %1861 = vmatpush.bf16.msra.mxu0 0
        %1862 = vmatpush.bf16.msra.mxu0 0
        %1863 = vmatpush.bf16.msra.mxu0 0
        %1864 = vmatpush.bf16.msra.mxu0 %v1852
        %1865 = vmatmul.bf16.gmra.mxu0 %v1855
        %v1866 = vpop.f32.mrf.mxu0
        %v1867 = vadd.f32 %v1846, %v1866
        %v1868 = vpop.f32.mrf.mxu0
        %1869 = vdwg.mxu0
        %v1870 = vmul.f32 %v1867, 0.5
        %1872 = vrot.lane.b32.xlu0 %v1870, 124
        %v1873 = vpop.permute.xlu0 %1872
        %1875 = vrot.lane.b32.xlu0 %v1870, 120
        %v1876 = vpop.permute.xlu0 %1875
        %1878 = vrot.lane.b32.xlu0 %v1870, 116
        %v1879 = vpop.permute.xlu0 %1878
        %1882 = vrot.lane.b32.xlu0 %v1867, 124
        %v1883 = vpop.permute.xlu0 %1882
        %1885 = vrot.lane.b32.xlu0 %v1867, 120
        %v1886 = vpop.permute.xlu0 %1885
        %1888 = vrot.lane.b32.xlu0 %v1867, 116
        %v1889 = vpop.permute.xlu0 %1888
        %v1891 = vpack.c.bf16 %v1870, %v1870
        %v1892 = vpack.c.bf16 %v1873, %v1873
        %v1893 = vpack.c.bf16 %v1876, %v1876
        %v1894 = vpack.c.bf16 %v1879, %v1879
        %v1895 = vpack.c.bf16 %v1867, %v1867
        %v1896 = vpack.c.bf16 %v1883, %v1883
        %v1897 = vpack.c.bf16 %v1886, %v1886
        %v1898 = vpack.c.bf16 %v1889, %v1889
        %v1900 = vunpack.c.l.b16 %v1895
        %v1901 = vpack.c.b16 %v1900, %v1900
        %1902 = vrot.lane.b32.xlu0 %v1901, 112
        %v1903 = vpop.permute.xlu0 %1902
        %v1905 = vsel %vm1361, %v1891, 0
        %v1908 = vsel %vm1361, %v1903, 0
        %1910 = vmatpush.bf16.xpose.msra.mxu0 0
        %1911 = vmatpush.bf16.xpose.msra.mxu0 0
        %1912 = vmatpush.bf16.xpose.msra.mxu0 0
        %1913 = vmatpush.bf16.xpose.msra.mxu0 0
        %1914 = vmatpush.bf16.xpose.msra.mxu0 0
        %1915 = vmatpush.bf16.xpose.msra.mxu0 0
        %1916 = vmatpush.bf16.xpose.msra.mxu0 0
        %1917 = vmatpush.bf16.xpose.msra.mxu0 %v1908
        %1918 = vmatmul.bf16.gmra.mxu0 %v1905
        %v1919 = vpop.f32.mrf.mxu0
        %v1920 = vadd.f32 0.0, %v1919
        %v1921 = vpop.f32.mrf.mxu0
        %1922 = vdwg.mxu0
        %v1924 = vunpack.c.l.b16 %v1896
        %v1925 = vpack.c.b16 %v1924, %v1924
        %1926 = vrot.lane.b32.xlu0 %v1925, 112
        %v1927 = vpop.permute.xlu0 %1926
        %v1929 = vsel %vm1361, %v1892, 0
        %v1932 = vsel %vm1361, %v1927, 0
        %1934 = vmatpush.bf16.xpose.msra.mxu0 0
        %1935 = vmatpush.bf16.xpose.msra.mxu0 0
        %1936 = vmatpush.bf16.xpose.msra.mxu0 0
        %1937 = vmatpush.bf16.xpose.msra.mxu0 0
        %1938 = vmatpush.bf16.xpose.msra.mxu0 0
        %1939 = vmatpush.bf16.xpose.msra.mxu0 0
        %1940 = vmatpush.bf16.xpose.msra.mxu0 0
        %1941 = vmatpush.bf16.xpose.msra.mxu0 %v1932
        %1942 = vmatmul.bf16.gmra.mxu0 %v1929
        %v1943 = vpop.f32.mrf.mxu0
        %v1944 = vadd.f32 0.0, %v1943
        %v1945 = vpop.f32.mrf.mxu0
        %1946 = vdwg.mxu0
        %v1948 = vunpack.c.l.b16 %v1897
        %v1949 = vpack.c.b16 %v1948, %v1948
        %1950 = vrot.lane.b32.xlu0 %v1949, 112
        %v1951 = vpop.permute.xlu0 %1950
        %v1953 = vsel %vm1361, %v1893, 0
        %v1956 = vsel %vm1361, %v1951, 0
        %1958 = vmatpush.bf16.xpose.msra.mxu0 0
        %1959 = vmatpush.bf16.xpose.msra.mxu0 0
        %1960 = vmatpush.bf16.xpose.msra.mxu0 0
        %1961 = vmatpush.bf16.xpose.msra.mxu0 0
        %1962 = vmatpush.bf16.xpose.msra.mxu0 0
        %1963 = vmatpush.bf16.xpose.msra.mxu0 0
        %1964 = vmatpush.bf16.xpose.msra.mxu0 0
        %1965 = vmatpush.bf16.xpose.msra.mxu0 %v1956
        %1966 = vmatmul.bf16.gmra.mxu0 %v1953
        %v1967 = vpop.f32.mrf.mxu0
        %v1968 = vadd.f32 0.0, %v1967
        %v1969 = vpop.f32.mrf.mxu0
        %1970 = vdwg.mxu0
        %v1972 = vunpack.c.l.b16 %v1898
        %v1973 = vpack.c.b16 %v1972, %v1972
        %1974 = vrot.lane.b32.xlu0 %v1973, 112
        %v1975 = vpop.permute.xlu0 %1974
        %v1977 = vsel %vm1361, %v1894, 0
        %v1980 = vsel %vm1361, %v1975, 0
        %1982 = vmatpush.bf16.xpose.msra.mxu0 0
        %1983 = vmatpush.bf16.xpose.msra.mxu0 0
        %1984 = vmatpush.bf16.xpose.msra.mxu0 0
        %1985 = vmatpush.bf16.xpose.msra.mxu0 0
        %1986 = vmatpush.bf16.xpose.msra.mxu0 0
        %1987 = vmatpush.bf16.xpose.msra.mxu0 0
        %1988 = vmatpush.bf16.xpose.msra.mxu0 0
        %1989 = vmatpush.bf16.xpose.msra.mxu0 %v1980
        %1990 = vmatmul.bf16.gmra.mxu0 %v1977
        %v1991 = vpop.f32.mrf.mxu0
        %v1992 = vadd.f32 0.0, %v1991
        %v1993 = vpop.f32.mrf.mxu0
        %1994 = vdwg.mxu0
        %v1995 = vsel %vm1453, %v1920, -inf
        %1996 = vmax.xlane.f32.xlu0 %v1995
        %v1997 = vpop.xlane.xlu0 %1996
        %v1998 = vsel %vm1453, %v1944, -inf
        %1999 = vmax.xlane.f32.xlu0 %v1998
        %v2000 = vpop.xlane.xlu0 %1999
        %v2001 = vsel %vm1453, %v1968, -inf
        %2002 = vmax.xlane.f32.xlu0 %v2001
        %v2003 = vpop.xlane.xlu0 %2002
        %v2004 = vsel %vm1453, %v1992, -inf
        %2005 = vmax.xlane.f32.xlu0 %v2004
        %v2006 = vpop.xlane.xlu0 %2005
        %v2007 = vsub.f32 %v1920, %v1997
        %v2008 = vsub.f32 %v1944, %v2000
        %v2009 = vsub.f32 %v1968, %v2003
        %v2010 = vsub.f32 %v1992, %v2006
        %v2011 = vmul.f32 %v2007, 1.442695
        %v2012 = vpow.pop %v2011
        %v2013 = vmul.f32 %v2008, 1.442695
        %v2014 = vpow.pop %v2013
        %v2015 = vmul.f32 %v2009, 1.442695
        %v2016 = vpow.pop %v2015
        %v2017 = vmul.f32 %v2010, 1.442695
        %v2018 = vpow.pop %v2017
        %v2019 = vsel %vm1453, %v2012, 0.0
        %2020 = vadd.xlane.f32.xlu0 %v2019
        %v2021 = vpop.xlane.xlu0 %2020
        %v2022 = vsel %vm1453, %v2014, 0.0
        %2023 = vadd.xlane.f32.xlu0 %v2022
        %v2024 = vpop.xlane.xlu0 %2023
        %v2025 = vsel %vm1453, %v2016, 0.0
        %2026 = vadd.xlane.f32.xlu0 %v2025
        %v2027 = vpop.xlane.xlu0 %2026
        %v2028 = vsel %vm1453, %v2018, 0.0
        %2029 = vadd.xlane.f32.xlu0 %v2028
        %v2030 = vpop.xlane.xlu0 %2029
        %v2031 = vrcp.pop %v2021
        %v2032 = vmul.f32 %v2021, %v2031
        %v2033 = vsub.f32 1.0, %v2032
        %v2034 = vmul.f32 %v2031, %v2033
        %v2035 = vadd.f32 %v2031, %v2034
        %vm2036 = vweird.f32 %v2021
        %vm2037 = vweird.f32 %v2031
        %vm2038 = vmor %vm2036, %vm2037
        %v2039 = vsel %vm2038, %v2031, %v2035
        %v2040 = vand.u32 2147483647, %v2021
        %vm2041 = vcmp.eq.f32.partialorder %v2040, 8.507059e+37
        %v2042 = vand.u32 %v2021, 2147483648
        %v2043 = vor.u32 1.1754944e-38, %v2042
        %v2044 = vsel %vm2041, %v2043, %v2039
        %v2045 = vmul.f32 %v2012, %v2044
        %v2046 = vrcp.pop %v2024
        %v2047 = vmul.f32 %v2024, %v2046
        %v2048 = vsub.f32 1.0, %v2047
        %v2049 = vmul.f32 %v2046, %v2048
        %v2050 = vadd.f32 %v2046, %v2049
        %vm2051 = vweird.f32 %v2024
        %vm2052 = vweird.f32 %v2046
        %vm2053 = vmor %vm2051, %vm2052
        %v2054 = vsel %vm2053, %v2046, %v2050
        %v2055 = vand.u32 2147483647, %v2024
        %vm2056 = vcmp.eq.f32.partialorder %v2055, 8.507059e+37
        %v2057 = vand.u32 %v2024, 2147483648
        %v2058 = vor.u32 1.1754944e-38, %v2057
        %v2059 = vsel %vm2056, %v2058, %v2054
        %v2060 = vmul.f32 %v2014, %v2059
        %v2061 = vrcp.pop %v2027
        %v2062 = vmul.f32 %v2027, %v2061
        %v2063 = vsub.f32 1.0, %v2062
        %v2064 = vmul.f32 %v2061, %v2063
        %v2065 = vadd.f32 %v2061, %v2064
        %vm2066 = vweird.f32 %v2027
        %vm2067 = vweird.f32 %v2061
        %vm2068 = vmor %vm2066, %vm2067
        %v2069 = vsel %vm2068, %v2061, %v2065
        %v2070 = vand.u32 2147483647, %v2027
        %vm2071 = vcmp.eq.f32.partialorder %v2070, 8.507059e+37
        %v2072 = vand.u32 %v2027, 2147483648
        %v2073 = vor.u32 1.1754944e-38, %v2072
        %v2074 = vsel %vm2071, %v2073, %v2069
        %v2075 = vmul.f32 %v2016, %v2074
        %v2076 = vrcp.pop %v2030
        %v2077 = vmul.f32 %v2030, %v2076
        %v2078 = vsub.f32 1.0, %v2077
        %v2079 = vmul.f32 %v2076, %v2078
        %v2080 = vadd.f32 %v2076, %v2079
        %vm2081 = vweird.f32 %v2030
        %vm2082 = vweird.f32 %v2076
        %vm2083 = vmor %vm2081, %vm2082
        %v2084 = vsel %vm2083, %v2076, %v2080
        %v2085 = vand.u32 2147483647, %v2030
        %vm2086 = vcmp.eq.f32.partialorder %v2085, 8.507059e+37
        %v2087 = vand.u32 %v2030, 2147483648
        %v2088 = vor.u32 1.1754944e-38, %v2087
        %v2089 = vsel %vm2086, %v2088, %v2084
        %v2090 = vmul.f32 %v2018, %v2089
        %v2091 = vpack.c.bf16 %v2045, %v2045
        %v2092 = vpack.c.bf16 %v2060, %v2060
        %v2093 = vpack.c.bf16 %v2075, %v2075
        %v2094 = vpack.c.bf16 %v2090, %v2090
        %2095 = vrot.lane.b32.xlu0 %v1901, 96
        %v2096 = vpop.permute.xlu0 %2095
        %v2098 = vsel %vm1453, %v2091, 0
        %v2101 = vsel %vm1559, %v2096, 0
        %2103 = vmatpush.bf16.msra.mxu0 0
        %2104 = vmatpush.bf16.msra.mxu0 0
        %2105 = vmatpush.bf16.msra.mxu0 0
        %2106 = vmatpush.bf16.msra.mxu0 0
        %2107 = vmatpush.bf16.msra.mxu0 0
        %2108 = vmatpush.bf16.msra.mxu0 0
        %2109 = vmatpush.bf16.msra.mxu0 0
        %2110 = vmatpush.bf16.msra.mxu0 %v2101
        %2111 = vmatmul.bf16.gmra.mxu0 %v2098
        %v2112 = vpop.f32.mrf.mxu0
        %v2113 = vadd.f32 0.0, %v2112
        %v2114 = vpop.f32.mrf.mxu0
        %2115 = vdwg.mxu0
        %2116 = vrot.lane.b32.xlu0 %v1925, 96
        %v2117 = vpop.permute.xlu0 %2116
        %v2119 = vsel %vm1453, %v2092, 0
        %v2122 = vsel %vm1559, %v2117, 0
        %2124 = vmatpush.bf16.msra.mxu0 0
        %2125 = vmatpush.bf16.msra.mxu0 0
        %2126 = vmatpush.bf16.msra.mxu0 0
        %2127 = vmatpush.bf16.msra.mxu0 0
        %2128 = vmatpush.bf16.msra.mxu0 0
        %2129 = vmatpush.bf16.msra.mxu0 0
        %2130 = vmatpush.bf16.msra.mxu0 0
        %2131 = vmatpush.bf16.msra.mxu0 %v2122
        %2132 = vmatmul.bf16.gmra.mxu0 %v2119
        %v2133 = vpop.f32.mrf.mxu0
        %v2134 = vadd.f32 0.0, %v2133
        %v2135 = vpop.f32.mrf.mxu0
        %2136 = vdwg.mxu0
        %2137 = vrot.lane.b32.xlu0 %v1949, 96
        %v2138 = vpop.permute.xlu0 %2137
        %v2140 = vsel %vm1453, %v2093, 0
        %v2143 = vsel %vm1559, %v2138, 0
        %2145 = vmatpush.bf16.msra.mxu0 0
        %2146 = vmatpush.bf16.msra.mxu0 0
        %2147 = vmatpush.bf16.msra.mxu0 0
        %2148 = vmatpush.bf16.msra.mxu0 0
        %2149 = vmatpush.bf16.msra.mxu0 0
        %2150 = vmatpush.bf16.msra.mxu0 0
        %2151 = vmatpush.bf16.msra.mxu0 0
        %2152 = vmatpush.bf16.msra.mxu0 %v2143
        %2153 = vmatmul.bf16.gmra.mxu0 %v2140
        %v2154 = vpop.f32.mrf.mxu0
        %v2155 = vadd.f32 0.0, %v2154
        %v2156 = vpop.f32.mrf.mxu0
        %2157 = vdwg.mxu0
        %2158 = vrot.lane.b32.xlu0 %v1973, 96
        %v2159 = vpop.permute.xlu0 %2158
        %v2161 = vsel %vm1453, %v2094, 0
        %v2164 = vsel %vm1559, %v2159, 0
        %2166 = vmatpush.bf16.msra.mxu0 0
        %2167 = vmatpush.bf16.msra.mxu0 0
        %2168 = vmatpush.bf16.msra.mxu0 0
        %2169 = vmatpush.bf16.msra.mxu0 0
        %2170 = vmatpush.bf16.msra.mxu0 0
        %2171 = vmatpush.bf16.msra.mxu0 0
        %2172 = vmatpush.bf16.msra.mxu0 0
        %2173 = vmatpush.bf16.msra.mxu0 %v2164
        %2174 = vmatmul.bf16.gmra.mxu0 %v2161
        %v2175 = vpop.f32.mrf.mxu0
        %v2176 = vadd.f32 0.0, %v2175
        %v2177 = vpop.f32.mrf.mxu0
        %2178 = vdwg.mxu0
        %2180 = vrot.lane.b32.xlu0 %v2134, 4
        %v2181 = vpop.permute.xlu0 %2180
        %2184 = vrot.lane.b32.xlu0 %v2155, 8
        %v2185 = vpop.permute.xlu0 %2184
        %2188 = vrot.lane.b32.xlu0 %v2176, 12
        %v2189 = vpop.permute.xlu0 %2188
        %v2191 = vsel %vm1361, %v2113, %v2181
        %v2192 = vsel %vm1453, %v2191, %v2185
        %v2193 = vsel %vm1653, %v2192, %v2189
        %v2194 = vpack.c.bf16 %v2193, %v2193
        %v2196 = vperm.slane %v1827, 0
        %v2200 = vunpack.c.l.b16 %v1825
        %v2201 = vunpack.c.l.b16 %v1826
        %v2202 = vpack.c.b16 %v2201, %v2200
        %v2205 = vsel %vm1310, %v2194, 0
        %2207 = vmatpush.bf16.msra.mxu0 0
        %2208 = vmatpush.bf16.msra.mxu0 0
        %2209 = vmatpush.bf16.msra.mxu0 0
        %2210 = vmatpush.bf16.msra.mxu0 0
        %2211 = vmatpush.bf16.msra.mxu0 0
        %2212 = vmatpush.bf16.msra.mxu0 0
        %2213 = vmatpush.bf16.msra.mxu0 0
        %2214 = vmatpush.bf16.msra.mxu0 %v2202
        %2215 = vmatmul.bf16.gmra.mxu0 %v2205
        %v2216 = vpop.f32.mrf.mxu0
        %v2217 = vadd.f32 %v2196, %v2216
        %v2218 = vpop.f32.mrf.mxu0
        %2219 = vdwg.mxu0
        %v2220 = vadd.f32 %v1821, %v2217
        %v2221 = vsel %vm1310, %v2220, 0.0
        %2222 = vadd.xlane.f32.xlu0 %v2221
        %v2223 = vpop.xlane.xlu0 %2222
        %v2224 = vmul.f32 %v2223, %v1691
        %v2225 = vsub.f32 %v2220, %v2224
        %v2226 = vmul.f32 %v2225, %v2225
        %v2227 = vsel %vm1310, %v2226, 0.0
        %2228 = vadd.xlane.f32.xlu0 %v2227
        %v2229 = vpop.xlane.xlu0 %2228
        %v2230 = vmul.f32 %v2229, %v1691
        %v2231 = vadd.f32 %v2230, 1e-05
        %v2232 = vrsqrt.pop %v2231
        %v2233 = vmul.f32 %v2232, %v2231
        %v2234 = vmul.f32 %v2233, %v2232
        %v2235 = vmul.f32 0.5, %v2234
        %v2236 = vsub.f32 1.5, %v2235
        %v2237 = vmul.f32 %v2232, %v2236
        %vm2238 = vweird.f32 %v2231
        %vm2239 = vweird.f32 %v2232
        %vm2240 = vmor %vm2238, %vm2239
        %v2241 = vsel %vm2240, %v2232, %v2237
        %v2242 = vmul.f32 %v2225, %v2241
        %v2244 = vperm.slane %v1840, 0
        %v2246 = vmul.f32 %v2242, %v2244
        %v2248 = vperm.slane %v1841, 0
        %v2250 = vadd.f32 %v2246, %v2248
        %v2251 = vpack.c.bf16 %v2250, %v2250
        %v2253 = vperm.slane %v1830, 0
        %v2257 = vunpack.c.l.b16 %v1828
        %v2258 = vunpack.c.l.b16 %v1829
        %v2259 = vpack.c.b16 %v2258, %v2257
        %v2262 = vsel %vm1310, %v2251, 0
        %2264 = vmatpush.bf16.msra.mxu0 0
        %2265 = vmatpush.bf16.msra.mxu0 0
        %2266 = vmatpush.bf16.msra.mxu0 0
        %2267 = vmatpush.bf16.msra.mxu0 0
        %2268 = vmatpush.bf16.msra.mxu0 0
        %2269 = vmatpush.bf16.msra.mxu0 0
        %2270 = vmatpush.bf16.msra.mxu0 0
        %2271 = vmatpush.bf16.msra.mxu0 %v2259
        %2272 = vmatmul.bf16.gmra.mxu0 %v2262
        %v2273 = vpop.f32.mrf.mxu0
        %v2274 = vadd.f32 %v2253, %v2273
        %v2275 = vpop.f32.mrf.mxu0
        %2276 = vdwg.mxu0
        %v2277 = vmax.f32 %v2274, 0.0
        %v2278 = vpack.c.bf16 %v2277, %v2277
        %v2280 = vperm.slane %v1839, 0
        %v2290 = vunpack.c.l.b16 %v1831
        %v2291 = vunpack.c.l.b16 %v1832
        %v2292 = vunpack.c.l.b16 %v1833
        %v2293 = vunpack.c.l.b16 %v1834
        %v2294 = vunpack.c.l.b16 %v1835
        %v2295 = vunpack.c.l.b16 %v1836
        %v2296 = vunpack.c.l.b16 %v1837
        %v2297 = vunpack.c.l.b16 %v1838
        %v2298 = vpack.c.b16 %v2291, %v2290
        %v2299 = vpack.c.b16 %v2293, %v2292
        %v2300 = vpack.c.b16 %v2295, %v2294
        %v2301 = vpack.c.b16 %v2297, %v2296
        %v2307 = vsel %vm1774, %v2278, 0
        %2309 = vmatpush.bf16.msra.mxu0 0
        %2310 = vmatpush.bf16.msra.mxu0 0
        %2311 = vmatpush.bf16.msra.mxu0 0
        %2312 = vmatpush.bf16.msra.mxu0 0
        %2313 = vmatpush.bf16.msra.mxu0 %v2301
        %2314 = vmatpush.bf16.msra.mxu0 %v2300
        %2315 = vmatpush.bf16.msra.mxu0 %v2299
        %2316 = vmatpush.bf16.msra.mxu0 %v2298
        %2317 = vmatmul.bf16.gmra.mxu0 %v2307
        %v2318 = vpop.f32.mrf.mxu0
        %v2319 = vadd.f32 %v2280, %v2318
        %v2320 = vpop.f32.mrf.mxu0
        %2321 = vdwg.mxu0
        %v2322 = vadd.f32 %v2250, %v2319
        %v2323 = vsel %vm1310, %v2322, 0.0
        %2324 = vadd.xlane.f32.xlu0 %v2323
        %v2325 = vpop.xlane.xlu0 %2324
        %v2326 = vmul.f32 %v2325, %v1691
        %v2327 = vsub.f32 %v2322, %v2326
        %v2328 = vmul.f32 %v2327, %v2327
        %v2329 = vsel %vm1310, %v2328, 0.0
        %2330 = vadd.xlane.f32.xlu0 %v2329
        %v2331 = vpop.xlane.xlu0 %2330
        %v2332 = vmul.f32 %v2331, %v1691
        %v2333 = vadd.f32 %v2332, 1e-05
        %v2334 = vrsqrt.pop %v2333
        %v2335 = vmul.f32 %v2334, %v2333
        %v2336 = vmul.f32 %v2335, %v2334
        %v2337 = vmul.f32 0.5, %v2336
        %v2338 = vsub.f32 1.5, %v2337
        %v2339 = vmul.f32 %v2334, %v2338
        %vm2340 = vweird.f32 %v2333
        %vm2341 = vweird.f32 %v2334
        %vm2342 = vmor %vm2340, %vm2341
        %v2343 = vsel %vm2342, %v2334, %v2339
        %v2344 = vmul.f32 %v2327, %v2343
        %v2346 = vperm.slane %v1842, 0
        %v2348 = vmul.f32 %v2344, %v2346
        %v2350 = vperm.slane %v1843, 0
        %v2352 = vadd.f32 %v2348, %v2350
        %v2353 = vld [vmem:[#allocation25] sm:$0xf]
        %v2354 = vld [vmem:[#allocation25 + $0x4] sm:$0xf]
        %v2355 = vld [vmem:[%s53] sm:$0xf]
        %v2356 = vld [vmem:[%s53 + $0x4] sm:$0xf]
        %v2357 = vld [vmem:[%s53 + $0x8] sm:$0xf]
        %v2358 = vld [vmem:[%s53 + $0xc] sm:$0xf]
        %v2359 = vld [vmem:[#allocation26] sm:$0x1]
        %v2360 = vpack.c.bf16 %v2352, %v2352
        %v2362 = vperm.slane %v2359, 0
        %v2366 = vunpack.c.l.b16 %v2353
        %v2367 = vunpack.c.l.b16 %v2354
        %v2368 = vpack.c.b16 %v2367, %v2366
        %v2371 = vsel %vm1310, %v2360, 0
        %2373 = vmatpush.bf16.msra.mxu0 0
        %2374 = vmatpush.bf16.msra.mxu0 0
        %2375 = vmatpush.bf16.msra.mxu0 0
        %2376 = vmatpush.bf16.msra.mxu0 0
        %2377 = vmatpush.bf16.msra.mxu0 0
        %2378 = vmatpush.bf16.msra.mxu0 0
        %2379 = vmatpush.bf16.msra.mxu0 0
        %2380 = vmatpush.bf16.msra.mxu0 %v2368
        %2381 = vmatmul.bf16.gmra.mxu0 %v2371
        %v2382 = vpop.f32.mrf.mxu0
        %v2383 = vadd.f32 %v2362, %v2382
        %v2384 = vpop.f32.mrf.mxu0
        %2385 = vdwg.mxu0
        %v2390 = vunpack.c.l.b16 %v2355
        %v2391 = vunpack.c.l.b16 %v2356
        %v2392 = vunpack.c.l.b16 %v2357
        %v2393 = vunpack.c.l.b16 %v2358
        %v2394 = vpack.c.b16 %v2391, %v2390
        %v2395 = vpack.c.b16 %v2393, %v2392
        %vm2398 = vcmask 261120
        %v2400 = vsel %vm2398, 0, 0
        %2402 = vmatpush.bf16.msra.mxu0 0
        %2403 = vmatpush.bf16.msra.mxu0 0
        %2404 = vmatpush.bf16.msra.mxu0 0
        %2405 = vmatpush.bf16.msra.mxu0 0
        %2406 = vmatpush.bf16.msra.mxu0 0
        %2407 = vmatpush.bf16.msra.mxu0 0
        %2408 = vmatpush.bf16.msra.mxu0 %v2395
        %2409 = vmatpush.bf16.msra.mxu0 %v2394
        %2410 = vmatmul.bf16.gmra.mxu0 %v2400
        %v2411 = vpop.f32.mrf.mxu0
        %v2412 = vadd.f32 0.0, %v2411
        %v2413 = vpop.f32.mrf.mxu0
        %2414 = vdwg.mxu0
        %v2415 = vadd.f32 %v2383, %v2412
        %v2416 = vxor.u32 %v2415, 2147483648
        %v2417 = vmul.f32 %v2416, 1.442695
        %v2418 = vpow.pop %v2417
        %v2419 = vadd.f32 %v2418, 1.0
        %v2420 = vrcp.pop %v2419
        %v2421 = vmul.f32 %v2419, %v2420
        %v2422 = vsub.f32 1.0, %v2421
        %v2423 = vmul.f32 %v2420, %v2422
        %v2424 = vadd.f32 %v2420, %v2423
        %vm2425 = vweird.f32 %v2419
        %vm2426 = vweird.f32 %v2420
        %vm2427 = vmor %vm2425, %vm2426
        %v2428 = vsel %vm2427, %v2420, %v2424
        %v2429 = vand.u32 2147483647, %v2419
        %vm2430 = vcmp.eq.f32.partialorder %v2429, 8.507059e+37
        %v2431 = vand.u32 %v2419, 2147483648
        %v2432 = vor.u32 1.1754944e-38, %v2431
        %v2433 = vsel %vm2430, %v2432, %v2428
        %v2434 = vmul.f32 1.0, %v2433
        %v2435 = vtanh.pop %v2415
        %v2436 = vmul.f32 %v2434, 0.0
        %2438 = vrot.lane.b32.xlu0 %v2435, 32
        %v2439 = vpop.permute.xlu0 %2438
        %v2441 = vmul.f32 %v2434, %v2439
        %2443 = vrot.lane.b32.xlu0 %v2441, 32
        %v2444 = vpop.permute.xlu0 %2443
        %v2446 = vadd.f32 %v2436, %v2444
        %v2447 = vtanh.pop %v2446
        %2449 = vrot.lane.b32.xlu0 %v2447, 32
        %v2450 = vpop.permute.xlu0 %2449
        %v2452 = vmul.f32 %v2434, %v2450
        %2454 = vrot.lane.b32.xlu0 %v2452, 64
        %v2455 = vpop.permute.xlu0 %2454
        %vm2457 = vcmask 253952
        %2458 = vst.msk [vmem:[#allocation2] sm:$0x1] %vm2457, %v2455
        %v2459 = vpack.c.bf16 %v2452, %v2452
        %2461 = vrot.lane.b32.xlu0 %v2459, 64
        %v2462 = vpop.permute.xlu0 %2461
        %v2464 = vsel %vm2398, %v2462, 0
        %2466 = vmatpush.bf16.msra.mxu0 0
        %2467 = vmatpush.bf16.msra.mxu0 0
        %2468 = vmatpush.bf16.msra.mxu0 0
        %2469 = vmatpush.bf16.msra.mxu0 0
        %2470 = vmatpush.bf16.msra.mxu0 0
        %2471 = vmatpush.bf16.msra.mxu0 0
        %2472 = vmatpush.bf16.msra.mxu0 %v2395
        %2473 = vmatpush.bf16.msra.mxu0 %v2394
        %2474 = vmatmul.bf16.gmra.mxu0 %v2464
        %v2475 = vpop.f32.mrf.mxu0
        %v2476 = vadd.f32 0.0, %v2475
        %v2477 = vpop.f32.mrf.mxu0
        %2478 = vdwg.mxu0
        %v2480 = vrot.slane %v2476, 7
        %v2482 = vadd.f32 %v2383, %v2480
        %v2483 = vxor.u32 %v2482, 2147483648
        %v2484 = vmul.f32 %v2483, 1.442695
        %v2485 = vpow.pop %v2484
        %v2486 = vadd.f32 %v2485, 1.0
        %v2487 = vrcp.pop %v2486
        %v2488 = vmul.f32 %v2486, %v2487
        %v2489 = vsub.f32 1.0, %v2488
        %v2490 = vmul.f32 %v2487, %v2489
        %v2491 = vadd.f32 %v2487, %v2490
        %vm2492 = vweird.f32 %v2486
        %vm2493 = vweird.f32 %v2487
        %vm2494 = vmor %vm2492, %vm2493
        %v2495 = vsel %vm2494, %v2487, %v2491
        %v2496 = vand.u32 2147483647, %v2486
        %vm2497 = vcmp.eq.f32.partialorder %v2496, 8.507059e+37
        %v2498 = vand.u32 %v2486, 2147483648
        %v2499 = vor.u32 1.1754944e-38, %v2498
        %v2500 = vsel %vm2497, %v2499, %v2495
        %v2501 = vmul.f32 1.0, %v2500
        %v2502 = vtanh.pop %v2482
        %v2504 = vrot.slane %v2446, 7
        %v2506 = vmul.f32 %v2501, %v2504
        %2508 = vrot.lane.b32.xlu0 %v2502, 32
        %v2509 = vpop.permute.xlu0 %2508
        %v2511 = vmul.f32 %v2501, %v2509
        %2513 = vrot.lane.b32.xlu0 %v2511, 32
        %v2514 = vpop.permute.xlu0 %2513
        %v2516 = vadd.f32 %v2506, %v2514
        %v2517 = vtanh.pop %v2516
        %2519 = vrot.lane.b32.xlu0 %v2517, 32
        %v2520 = vpop.permute.xlu0 %2519
        %v2522 = vmul.f32 %v2501, %v2520
        %2524 = vrot.lane.b32.xlu0 %v2522, 64
        %v2525 = vpop.permute.xlu0 %2524
        %vm2527 = vcmask 254977
        %2528 = vst.msk [vmem:[#allocation2] sm:$0x2] %vm2527, %v2525
        %v2529 = vpack.c.bf16 %v2522, %v2522
        %v2531 = vshrl.u32 %v2529, 16
        %2533 = vrot.lane.b32.xlu0 %v2531, 64
        %v2534 = vpop.permute.xlu0 %2533
        %v2536 = vsel %vm2398, %v2534, 0
        %2538 = vmatpush.bf16.msra.mxu0 0
        %2539 = vmatpush.bf16.msra.mxu0 0
        %2540 = vmatpush.bf16.msra.mxu0 0
        %2541 = vmatpush.bf16.msra.mxu0 0
        %2542 = vmatpush.bf16.msra.mxu0 0
        %2543 = vmatpush.bf16.msra.mxu0 0
        %2544 = vmatpush.bf16.msra.mxu0 %v2395
        %2545 = vmatpush.bf16.msra.mxu0 %v2394
        %2546 = vmatmul.bf16.gmra.mxu0 %v2536
        %v2547 = vpop.f32.mrf.mxu0
        %v2548 = vadd.f32 0.0, %v2547
        %v2549 = vpop.f32.mrf.mxu0
        %2550 = vdwg.mxu0
        %v2552 = vrot.slane %v2548, 6
        %v2554 = vadd.f32 %v2383, %v2552
        %v2555 = vxor.u32 %v2554, 2147483648
        %v2556 = vmul.f32 %v2555, 1.442695
        %v2557 = vpow.pop %v2556
        %v2558 = vadd.f32 %v2557, 1.0
        %v2559 = vrcp.pop %v2558
        %v2560 = vmul.f32 %v2558, %v2559
        %v2561 = vsub.f32 1.0, %v2560
        %v2562 = vmul.f32 %v2559, %v2561
        %v2563 = vadd.f32 %v2559, %v2562
        %vm2564 = vweird.f32 %v2558
        %vm2565 = vweird.f32 %v2559
        %vm2566 = vmor %vm2564, %vm2565
        %v2567 = vsel %vm2566, %v2559, %v2563
        %v2568 = vand.u32 2147483647, %v2558
        %vm2569 = vcmp.eq.f32.partialorder %v2568, 8.507059e+37
        %v2570 = vand.u32 %v2558, 2147483648
        %v2571 = vor.u32 1.1754944e-38, %v2570
        %v2572 = vsel %vm2569, %v2571, %v2567
        %v2573 = vmul.f32 1.0, %v2572
        %v2574 = vtanh.pop %v2554
        %v2576 = vrot.slane %v2516, 7
        %v2578 = vmul.f32 %v2573, %v2576
        %2580 = vrot.lane.b32.xlu0 %v2574, 32
        %v2581 = vpop.permute.xlu0 %2580
        %v2583 = vmul.f32 %v2573, %v2581
        %2585 = vrot.lane.b32.xlu0 %v2583, 32
        %v2586 = vpop.permute.xlu0 %2585
        %v2588 = vadd.f32 %v2578, %v2586
        %v2589 = vtanh.pop %v2588
        %2591 = vrot.lane.b32.xlu0 %v2589, 32
        %v2592 = vpop.permute.xlu0 %2591
        %v2594 = vmul.f32 %v2573, %v2592
        %2596 = vrot.lane.b32.xlu0 %v2594, 64
        %v2597 = vpop.permute.xlu0 %2596
        %vm2599 = vcmask 256002
        %2600 = vst.msk [vmem:[#allocation2] sm:$0x4] %vm2599, %v2597
        %v2601 = vpack.c.bf16 %v2594, %v2594
        %v2603 = vrot.slane %v2601, 1
        %2604 = vrot.lane.b32.xlu0 %v2603, 64
        %v2605 = vpop.permute.xlu0 %2604
        %v2607 = vsel %vm2398, %v2605, 0
        %2609 = vmatpush.bf16.msra.mxu0 0
        %2610 = vmatpush.bf16.msra.mxu0 0
        %2611 = vmatpush.bf16.msra.mxu0 0
        %2612 = vmatpush.bf16.msra.mxu0 0
        %2613 = vmatpush.bf16.msra.mxu0 0
        %2614 = vmatpush.bf16.msra.mxu0 0
        %2615 = vmatpush.bf16.msra.mxu0 %v2395
        %2616 = vmatpush.bf16.msra.mxu0 %v2394
        %2617 = vmatmul.bf16.gmra.mxu0 %v2607
        %v2618 = vpop.f32.mrf.mxu0
        %v2619 = vadd.f32 0.0, %v2618
        %v2620 = vpop.f32.mrf.mxu0
        %2621 = vdwg.mxu0
        %v2623 = vrot.slane %v2619, 5
        %v2625 = vadd.f32 %v2383, %v2623
        %v2626 = vxor.u32 %v2625, 2147483648
        %v2627 = vmul.f32 %v2626, 1.442695
        %v2628 = vpow.pop %v2627
        %v2629 = vadd.f32 %v2628, 1.0
        %v2630 = vrcp.pop %v2629
        %v2631 = vmul.f32 %v2629, %v2630
        %v2632 = vsub.f32 1.0, %v2631
        %v2633 = vmul.f32 %v2630, %v2632
        %v2634 = vadd.f32 %v2630, %v2633
        %vm2635 = vweird.f32 %v2629
        %vm2636 = vweird.f32 %v2630
        %vm2637 = vmor %vm2635, %vm2636
        %v2638 = vsel %vm2637, %v2630, %v2634
        %v2639 = vand.u32 2147483647, %v2629
        %vm2640 = vcmp.eq.f32.partialorder %v2639, 8.507059e+37
        %v2641 = vand.u32 %v2629, 2147483648
        %v2642 = vor.u32 1.1754944e-38, %v2641
        %v2643 = vsel %vm2640, %v2642, %v2638
        %v2644 = vmul.f32 1.0, %v2643
        %v2645 = vtanh.pop %v2625
        %v2647 = vrot.slane %v2588, 7
        %v2649 = vmul.f32 %v2644, %v2647
        %2651 = vrot.lane.b32.xlu0 %v2645, 32
        %v2652 = vpop.permute.xlu0 %2651
        %v2654 = vmul.f32 %v2644, %v2652
        %2656 = vrot.lane.b32.xlu0 %v2654, 32
        %v2657 = vpop.permute.xlu0 %2656
        %v2659 = vadd.f32 %v2649, %v2657
        %v2660 = vtanh.pop %v2659
        %2662 = vrot.lane.b32.xlu0 %v2660, 32
        %v2663 = vpop.permute.xlu0 %2662
        %v2665 = vmul.f32 %v2644, %v2663
        %2667 = vrot.lane.b32.xlu0 %v2665, 64
        %v2668 = vpop.permute.xlu0 %2667
        %vm2670 = vcmask 257027
        %2671 = vst.msk [vmem:[#allocation2] sm:$0x8] %vm2670, %v2668
        %v2672 = vpack.c.bf16 %v2665, %v2665
        %v2674 = vshrl.u32 %v2672, 16
        %v2676 = vrot.slane %v2674, 1
        %2677 = vrot.lane.b32.xlu0 %v2676, 64
        %v2678 = vpop.permute.xlu0 %2677
        %v2680 = vsel %vm2398, %v2678, 0
        %2682 = vmatpush.bf16.msra.mxu0 0
        %2683 = vmatpush.bf16.msra.mxu0 0
        %2684 = vmatpush.bf16.msra.mxu0 0
        %2685 = vmatpush.bf16.msra.mxu0 0
        %2686 = vmatpush.bf16.msra.mxu0 0
        %2687 = vmatpush.bf16.msra.mxu0 0
        %2688 = vmatpush.bf16.msra.mxu0 %v2395
        %2689 = vmatpush.bf16.msra.mxu0 %v2394
        %2690 = vmatmul.bf16.gmra.mxu0 %v2680
        %v2691 = vpop.f32.mrf.mxu0
        %v2692 = vadd.f32 0.0, %v2691
        %v2693 = vpop.f32.mrf.mxu0
        %2694 = vdwg.mxu0
        %v2696 = vrot.slane %v2692, 4
        %v2698 = vadd.f32 %v2383, %v2696
        %v2699 = vxor.u32 %v2698, 2147483648
        %v2700 = vmul.f32 %v2699, 1.442695
        %v2701 = vpow.pop %v2700
        %v2702 = vadd.f32 %v2701, 1.0
        %v2703 = vrcp.pop %v2702
        %v2704 = vmul.f32 %v2702, %v2703
        %v2705 = vsub.f32 1.0, %v2704
        %v2706 = vmul.f32 %v2703, %v2705
        %v2707 = vadd.f32 %v2703, %v2706
        %vm2708 = vweird.f32 %v2702
        %vm2709 = vweird.f32 %v2703
        %vm2710 = vmor %vm2708, %vm2709
        %v2711 = vsel %vm2710, %v2703, %v2707
        %v2712 = vand.u32 2147483647, %v2702
        %vm2713 = vcmp.eq.f32.partialorder %v2712, 8.507059e+37
        %v2714 = vand.u32 %v2702, 2147483648
        %v2715 = vor.u32 1.1754944e-38, %v2714
        %v2716 = vsel %vm2713, %v2715, %v2711
        %v2717 = vmul.f32 1.0, %v2716
        %v2718 = vtanh.pop %v2698
        %v2720 = vrot.slane %v2659, 7
        %v2722 = vmul.f32 %v2717, %v2720
        %2724 = vrot.lane.b32.xlu0 %v2718, 32
        %v2725 = vpop.permute.xlu0 %2724
        %v2727 = vmul.f32 %v2717, %v2725
        %2729 = vrot.lane.b32.xlu0 %v2727, 32
        %v2730 = vpop.permute.xlu0 %2729
        %v2732 = vadd.f32 %v2722, %v2730
        %v2733 = vtanh.pop %v2732
        %2735 = vrot.lane.b32.xlu0 %v2733, 32
        %v2736 = vpop.permute.xlu0 %2735
        %v2738 = vmul.f32 %v2717, %v2736
        %2740 = vrot.lane.b32.xlu0 %v2738, 64
        %v2741 = vpop.permute.xlu0 %2740
        %vm2743 = vcmask 258052
        %2744 = vst.msk [vmem:[#allocation2] sm:$0x10] %vm2743, %v2741
        %v2745 = vpack.c.bf16 %v2738, %v2738
        %v2747 = vrot.slane %v2745, 2
        %2748 = vrot.lane.b32.xlu0 %v2747, 64
        %v2749 = vpop.permute.xlu0 %2748
        %v2751 = vsel %vm2398, %v2749, 0
        %2753 = vmatpush.bf16.msra.mxu0 0
        %2754 = vmatpush.bf16.msra.mxu0 0
        %2755 = vmatpush.bf16.msra.mxu0 0
        %2756 = vmatpush.bf16.msra.mxu0 0
        %2757 = vmatpush.bf16.msra.mxu0 0
        %2758 = vmatpush.bf16.msra.mxu0 0
        %2759 = vmatpush.bf16.msra.mxu0 %v2395
        %2760 = vmatpush.bf16.msra.mxu0 %v2394
        %2761 = vmatmul.bf16.gmra.mxu0 %v2751
        %v2762 = vpop.f32.mrf.mxu0
        %v2763 = vadd.f32 0.0, %v2762
        %v2764 = vpop.f32.mrf.mxu0
        %2765 = vdwg.mxu0
        %v2767 = vrot.slane %v2763, 3
        %v2769 = vadd.f32 %v2383, %v2767
        %v2770 = vxor.u32 %v2769, 2147483648
        %v2771 = vmul.f32 %v2770, 1.442695
        %v2772 = vpow.pop %v2771
        %v2773 = vadd.f32 %v2772, 1.0
        %v2774 = vrcp.pop %v2773
        %v2775 = vmul.f32 %v2773, %v2774
        %v2776 = vsub.f32 1.0, %v2775
        %v2777 = vmul.f32 %v2774, %v2776
        %v2778 = vadd.f32 %v2774, %v2777
        %vm2779 = vweird.f32 %v2773
        %vm2780 = vweird.f32 %v2774
        %vm2781 = vmor %vm2779, %vm2780
        %v2782 = vsel %vm2781, %v2774, %v2778
        %v2783 = vand.u32 2147483647, %v2773
        %vm2784 = vcmp.eq.f32.partialorder %v2783, 8.507059e+37
        %v2785 = vand.u32 %v2773, 2147483648
        %v2786 = vor.u32 1.1754944e-38, %v2785
        %v2787 = vsel %vm2784, %v2786, %v2782
        %v2788 = vmul.f32 1.0, %v2787
        %v2789 = vtanh.pop %v2769
        %v2791 = vrot.slane %v2732, 7
        %v2793 = vmul.f32 %v2788, %v2791
        %2795 = vrot.lane.b32.xlu0 %v2789, 32
        %v2796 = vpop.permute.xlu0 %2795
        %v2798 = vmul.f32 %v2788, %v2796
        %2800 = vrot.lane.b32.xlu0 %v2798, 32
        %v2801 = vpop.permute.xlu0 %2800
        %v2803 = vadd.f32 %v2793, %v2801
        %v2804 = vtanh.pop %v2803
        %2806 = vrot.lane.b32.xlu0 %v2804, 32
        %v2807 = vpop.permute.xlu0 %2806
        %v2809 = vmul.f32 %v2788, %v2807
        %2811 = vrot.lane.b32.xlu0 %v2809, 64
        %v2812 = vpop.permute.xlu0 %2811
        %vm2814 = vcmask 259077
        %2815 = vst.msk [vmem:[#allocation2] sm:$0x20] %vm2814, %v2812
        %v2816 = vpack.c.bf16 %v2809, %v2809
        %v2818 = vshrl.u32 %v2816, 16
        %v2820 = vrot.slane %v2818, 2
        %2821 = vrot.lane.b32.xlu0 %v2820, 64
        %v2822 = vpop.permute.xlu0 %2821
        %v2824 = vsel %vm2398, %v2822, 0
        %2826 = vmatpush.bf16.msra.mxu0 0
        %2827 = vmatpush.bf16.msra.mxu0 0
        %2828 = vmatpush.bf16.msra.mxu0 0
        %2829 = vmatpush.bf16.msra.mxu0 0
        %2830 = vmatpush.bf16.msra.mxu0 0
        %2831 = vmatpush.bf16.msra.mxu0 0
        %2832 = vmatpush.bf16.msra.mxu0 %v2395
        %2833 = vmatpush.bf16.msra.mxu0 %v2394
        %2834 = vmatmul.bf16.gmra.mxu0 %v2824
        %v2835 = vpop.f32.mrf.mxu0
        %v2836 = vadd.f32 0.0, %v2835
        %v2837 = vpop.f32.mrf.mxu0
        %2838 = vdwg.mxu0
        %v2840 = vrot.slane %v2836, 2
        %v2842 = vadd.f32 %v2383, %v2840
        %v2843 = vxor.u32 %v2842, 2147483648
        %v2844 = vmul.f32 %v2843, 1.442695
        %v2845 = vpow.pop %v2844
        %v2846 = vadd.f32 %v2845, 1.0
        %v2847 = vrcp.pop %v2846
        %v2848 = vmul.f32 %v2846, %v2847
        %v2849 = vsub.f32 1.0, %v2848
        %v2850 = vmul.f32 %v2847, %v2849
        %v2851 = vadd.f32 %v2847, %v2850
        %vm2852 = vweird.f32 %v2846
        %vm2853 = vweird.f32 %v2847
        %vm2854 = vmor %vm2852, %vm2853
        %v2855 = vsel %vm2854, %v2847, %v2851
        %v2856 = vand.u32 2147483647, %v2846
        %vm2857 = vcmp.eq.f32.partialorder %v2856, 8.507059e+37
        %v2858 = vand.u32 %v2846, 2147483648
        %v2859 = vor.u32 1.1754944e-38, %v2858
        %v2860 = vsel %vm2857, %v2859, %v2855
        %v2861 = vmul.f32 1.0, %v2860
        %v2862 = vtanh.pop %v2842
        %v2864 = vrot.slane %v2803, 7
        %v2866 = vmul.f32 %v2861, %v2864
        %2868 = vrot.lane.b32.xlu0 %v2862, 32
        %v2869 = vpop.permute.xlu0 %2868
        %v2871 = vmul.f32 %v2861, %v2869
        %2873 = vrot.lane.b32.xlu0 %v2871, 32
        %v2874 = vpop.permute.xlu0 %2873
        %v2876 = vadd.f32 %v2866, %v2874
        %v2877 = vtanh.pop %v2876
        %2879 = vrot.lane.b32.xlu0 %v2877, 32
        %v2880 = vpop.permute.xlu0 %2879
        %v2882 = vmul.f32 %v2861, %v2880
        %2884 = vrot.lane.b32.xlu0 %v2882, 64
        %v2885 = vpop.permute.xlu0 %2884
        %vm2887 = vcmask 260102
        %2888 = vst.msk [vmem:[#allocation2] sm:$0x40] %vm2887, %v2885
        %v2889 = vpack.c.bf16 %v2882, %v2882
        %v2891 = vrot.slane %v2889, 3
        %2892 = vrot.lane.b32.xlu0 %v2891, 64
        %v2893 = vpop.permute.xlu0 %2892
        %v2895 = vsel %vm2398, %v2893, 0
        %2897 = vmatpush.bf16.msra.mxu0 0
        %2898 = vmatpush.bf16.msra.mxu0 0
        %2899 = vmatpush.bf16.msra.mxu0 0
        %2900 = vmatpush.bf16.msra.mxu0 0
        %2901 = vmatpush.bf16.msra.mxu0 0
        %2902 = vmatpush.bf16.msra.mxu0 0
        %2903 = vmatpush.bf16.msra.mxu0 %v2395
        %2904 = vmatpush.bf16.msra.mxu0 %v2394
        %2905 = vmatmul.bf16.gmra.mxu0 %v2895
        %v2906 = vpop.f32.mrf.mxu0
        %v2907 = vadd.f32 0.0, %v2906
        %v2908 = vpop.f32.mrf.mxu0
        %2909 = vdwg.mxu0
        %v2911 = vrot.slane %v2907, 1
        %v2913 = vadd.f32 %v2383, %v2911
        %v2914 = vxor.u32 %v2913, 2147483648
        %v2915 = vmul.f32 %v2914, 1.442695
        %v2916 = vpow.pop %v2915
        %v2917 = vadd.f32 %v2916, 1.0
        %v2918 = vrcp.pop %v2917
        %v2919 = vmul.f32 %v2917, %v2918
        %v2920 = vsub.f32 1.0, %v2919
        %v2921 = vmul.f32 %v2918, %v2920
        %v2922 = vadd.f32 %v2918, %v2921
        %vm2923 = vweird.f32 %v2917
        %vm2924 = vweird.f32 %v2918
        %vm2925 = vmor %vm2923, %vm2924
        %v2926 = vsel %vm2925, %v2918, %v2922
        %v2927 = vand.u32 2147483647, %v2917
        %vm2928 = vcmp.eq.f32.partialorder %v2927, 8.507059e+37
        %v2929 = vand.u32 %v2917, 2147483648
        %v2930 = vor.u32 1.1754944e-38, %v2929
        %v2931 = vsel %vm2928, %v2930, %v2926
        %v2932 = vmul.f32 1.0, %v2931
        %v2933 = vtanh.pop %v2913
        %v2935 = vrot.slane %v2876, 7
        %v2937 = vmul.f32 %v2932, %v2935
        %2939 = vrot.lane.b32.xlu0 %v2933, 32
        %v2940 = vpop.permute.xlu0 %2939
        %v2942 = vmul.f32 %v2932, %v2940
        %2944 = vrot.lane.b32.xlu0 %v2942, 32
        %v2945 = vpop.permute.xlu0 %2944
        %v2947 = vadd.f32 %v2937, %v2945
        %v2948 = vtanh.pop %v2947
        %2950 = vrot.lane.b32.xlu0 %v2948, 32
        %v2951 = vpop.permute.xlu0 %2950
        %v2953 = vmul.f32 %v2932, %v2951
        %2955 = vrot.lane.b32.xlu0 %v2953, 64
        %v2956 = vpop.permute.xlu0 %2955
        %vm2958 = vcmask 261127
        %2959 = vst.msk [vmem:[#allocation2] sm:$0x80] %vm2958, %v2956
        %v2960 = vld [vmem:[#allocation2] sm:$0xff]
        %v2961 = vld [vmem:[%s57] sm:$0xf]
        %v2962 = vld [vmem:[%s57 + $0x4] sm:$0xf]
        %v2963 = vld [vmem:[%s57 + $0x8] sm:$0xf]
        %v2964 = vld [vmem:[%s57 + $0xc] sm:$0xf]
        %v2965 = vld [vmem:[%s59] sm:$0xf]
        %v2966 = vld [vmem:[%s59 + $0x4] sm:$0xf]
        %v2967 = vld [vmem:[%s59 + $0x8] sm:$0xf]
        %v2968 = vld [vmem:[%s59 + $0xc] sm:$0xf]
        %v2969 = vld [vmem:[#allocation28] sm:$0x1]
        %v2970 = vpack.c.bf16 %v2960, %v2960
        %v2972 = vperm.slane %v2969, 0
        %v2978 = vunpack.c.l.b16 %v2961
        %v2979 = vunpack.c.l.b16 %v2962
        %v2980 = vunpack.c.l.b16 %v2963
        %v2981 = vunpack.c.l.b16 %v2964
        %v2982 = vpack.c.b16 %v2979, %v2978
        %v2983 = vpack.c.b16 %v2981, %v2980
        %v2987 = vsel %vm2398, %v2970, 0
        %2989 = vmatpush.bf16.msra.mxu0 0
        %2990 = vmatpush.bf16.msra.mxu0 0
        %2991 = vmatpush.bf16.msra.mxu0 0
        %2992 = vmatpush.bf16.msra.mxu0 0
        %2993 = vmatpush.bf16.msra.mxu0 0
        %2994 = vmatpush.bf16.msra.mxu0 0
        %2995 = vmatpush.bf16.msra.mxu0 %v2983
        %2996 = vmatpush.bf16.msra.mxu0 %v2982
        %2997 = vmatmul.bf16.gmra.mxu0 %v2987
        %v2998 = vpop.f32.mrf.mxu0
        %v2999 = vadd.f32 %v2972, %v2998
        %v3000 = vpop.f32.mrf.mxu0
        %3001 = vdwg.mxu0
        %v3006 = vunpack.c.l.b16 %v2965
        %v3007 = vunpack.c.l.b16 %v2966
        %v3008 = vunpack.c.l.b16 %v2967
        %v3009 = vunpack.c.l.b16 %v2968
        %v3010 = vpack.c.b16 %v3007, %v3006
        %v3011 = vpack.c.b16 %v3009, %v3008
        %3014 = vmatpush.bf16.msra.mxu0 0
        %3015 = vmatpush.bf16.msra.mxu0 0
        %3016 = vmatpush.bf16.msra.mxu0 0
        %3017 = vmatpush.bf16.msra.mxu0 0
        %3018 = vmatpush.bf16.msra.mxu0 0
        %3019 = vmatpush.bf16.msra.mxu0 0
        %3020 = vmatpush.bf16.msra.mxu0 %v3011
        %3021 = vmatpush.bf16.msra.mxu0 %v3010
        %3022 = vmatmul.bf16.gmra.mxu0 %v2400
        %v3023 = vpop.f32.mrf.mxu0
        %v3024 = vadd.f32 0.0, %v3023
        %v3025 = vpop.f32.mrf.mxu0
        %3026 = vdwg.mxu0
        %v3027 = vadd.f32 %v2999, %v3024
        %v3028 = vxor.u32 %v3027, 2147483648
        %v3029 = vmul.f32 %v3028, 1.442695
        %v3030 = vpow.pop %v3029
        %v3031 = vadd.f32 %v3030, 1.0
        %v3032 = vrcp.pop %v3031
        %v3033 = vmul.f32 %v3031, %v3032
        %v3034 = vsub.f32 1.0, %v3033
        %v3035 = vmul.f32 %v3032, %v3034
        %v3036 = vadd.f32 %v3032, %v3035
        %vm3037 = vweird.f32 %v3031
        %vm3038 = vweird.f32 %v3032
        %vm3039 = vmor %vm3037, %vm3038
        %v3040 = vsel %vm3039, %v3032, %v3036
        %v3041 = vand.u32 2147483647, %v3031
        %vm3042 = vcmp.eq.f32.partialorder %v3041, 8.507059e+37
        %v3043 = vand.u32 %v3031, 2147483648
        %v3044 = vor.u32 1.1754944e-38, %v3043
        %v3045 = vsel %vm3042, %v3044, %v3040
        %v3046 = vmul.f32 1.0, %v3045
        %v3047 = vtanh.pop %v3027
        %v3048 = vmul.f32 %v3046, 0.0
        %3050 = vrot.lane.b32.xlu0 %v3047, 32
        %v3051 = vpop.permute.xlu0 %3050
        %v3053 = vmul.f32 %v3046, %v3051
        %3055 = vrot.lane.b32.xlu0 %v3053, 32
        %v3056 = vpop.permute.xlu0 %3055
        %v3058 = vadd.f32 %v3048, %v3056
        %v3059 = vtanh.pop %v3058
        %3061 = vrot.lane.b32.xlu0 %v3059, 32
        %v3062 = vpop.permute.xlu0 %3061
        %v3064 = vmul.f32 %v3046, %v3062
        %3066 = vrot.lane.b32.xlu0 %v3064, 64
        %v3067 = vpop.permute.xlu0 %3066
        %3069 = vst.msk [vmem:[#allocation2] sm:$0x1] %vm2457, %v3067
        %v3070 = vpack.c.bf16 %v3064, %v3064
        %3072 = vrot.lane.b32.xlu0 %v3070, 64
        %v3073 = vpop.permute.xlu0 %3072
        %v3075 = vsel %vm2398, %v3073, 0
        %3077 = vmatpush.bf16.msra.mxu0 0
        %3078 = vmatpush.bf16.msra.mxu0 0
        %3079 = vmatpush.bf16.msra.mxu0 0
        %3080 = vmatpush.bf16.msra.mxu0 0
        %3081 = vmatpush.bf16.msra.mxu0 0
        %3082 = vmatpush.bf16.msra.mxu0 0
        %3083 = vmatpush.bf16.msra.mxu0 %v3011
        %3084 = vmatpush.bf16.msra.mxu0 %v3010
        %3085 = vmatmul.bf16.gmra.mxu0 %v3075
        %v3086 = vpop.f32.mrf.mxu0
        %v3087 = vadd.f32 0.0, %v3086
        %v3088 = vpop.f32.mrf.mxu0
        %3089 = vdwg.mxu0
        %v3091 = vrot.slane %v3087, 7
        %v3093 = vadd.f32 %v2999, %v3091
        %v3094 = vxor.u32 %v3093, 2147483648
        %v3095 = vmul.f32 %v3094, 1.442695
        %v3096 = vpow.pop %v3095
        %v3097 = vadd.f32 %v3096, 1.0
        %v3098 = vrcp.pop %v3097
        %v3099 = vmul.f32 %v3097, %v3098
        %v3100 = vsub.f32 1.0, %v3099
        %v3101 = vmul.f32 %v3098, %v3100
        %v3102 = vadd.f32 %v3098, %v3101
        %vm3103 = vweird.f32 %v3097
        %vm3104 = vweird.f32 %v3098
        %vm3105 = vmor %vm3103, %vm3104
        %v3106 = vsel %vm3105, %v3098, %v3102
        %v3107 = vand.u32 2147483647, %v3097
        %vm3108 = vcmp.eq.f32.partialorder %v3107, 8.507059e+37
        %v3109 = vand.u32 %v3097, 2147483648
        %v3110 = vor.u32 1.1754944e-38, %v3109
        %v3111 = vsel %vm3108, %v3110, %v3106
        %v3112 = vmul.f32 1.0, %v3111
        %v3113 = vtanh.pop %v3093
        %v3115 = vrot.slane %v3058, 7
        %v3117 = vmul.f32 %v3112, %v3115
        %3119 = vrot.lane.b32.xlu0 %v3113, 32
        %v3120 = vpop.permute.xlu0 %3119
        %v3122 = vmul.f32 %v3112, %v3120
        %3124 = vrot.lane.b32.xlu0 %v3122, 32
        %v3125 = vpop.permute.xlu0 %3124
        %v3127 = vadd.f32 %v3117, %v3125
        %v3128 = vtanh.pop %v3127
        %3130 = vrot.lane.b32.xlu0 %v3128, 32
        %v3131 = vpop.permute.xlu0 %3130
        %v3133 = vmul.f32 %v3112, %v3131
        %3135 = vrot.lane.b32.xlu0 %v3133, 64
        %v3136 = vpop.permute.xlu0 %3135
        %3138 = vst.msk [vmem:[#allocation2] sm:$0x2] %vm2527, %v3136
        %v3139 = vpack.c.bf16 %v3133, %v3133
        %v3141 = vshrl.u32 %v3139, 16
        %3143 = vrot.lane.b32.xlu0 %v3141, 64
        %v3144 = vpop.permute.xlu0 %3143
        %v3146 = vsel %vm2398, %v3144, 0
        %3148 = vmatpush.bf16.msra.mxu0 0
        %3149 = vmatpush.bf16.msra.mxu0 0
        %3150 = vmatpush.bf16.msra.mxu0 0
        %3151 = vmatpush.bf16.msra.mxu0 0
        %3152 = vmatpush.bf16.msra.mxu0 0
        %3153 = vmatpush.bf16.msra.mxu0 0
        %3154 = vmatpush.bf16.msra.mxu0 %v3011
        %3155 = vmatpush.bf16.msra.mxu0 %v3010
        %3156 = vmatmul.bf16.gmra.mxu0 %v3146
        %v3157 = vpop.f32.mrf.mxu0
        %v3158 = vadd.f32 0.0, %v3157
        %v3159 = vpop.f32.mrf.mxu0
        %3160 = vdwg.mxu0
        %v3162 = vrot.slane %v3158, 6
        %v3164 = vadd.f32 %v2999, %v3162
        %v3165 = vxor.u32 %v3164, 2147483648
        %v3166 = vmul.f32 %v3165, 1.442695
        %v3167 = vpow.pop %v3166
        %v3168 = vadd.f32 %v3167, 1.0
        %v3169 = vrcp.pop %v3168
        %v3170 = vmul.f32 %v3168, %v3169
        %v3171 = vsub.f32 1.0, %v3170
        %v3172 = vmul.f32 %v3169, %v3171
        %v3173 = vadd.f32 %v3169, %v3172
        %vm3174 = vweird.f32 %v3168
        %vm3175 = vweird.f32 %v3169
        %vm3176 = vmor %vm3174, %vm3175
        %v3177 = vsel %vm3176, %v3169, %v3173
        %v3178 = vand.u32 2147483647, %v3168
        %vm3179 = vcmp.eq.f32.partialorder %v3178, 8.507059e+37
        %v3180 = vand.u32 %v3168, 2147483648
        %v3181 = vor.u32 1.1754944e-38, %v3180
        %v3182 = vsel %vm3179, %v3181, %v3177
        %v3183 = vmul.f32 1.0, %v3182
        %v3184 = vtanh.pop %v3164
        %v3186 = vrot.slane %v3127, 7
        %v3188 = vmul.f32 %v3183, %v3186
        %3190 = vrot.lane.b32.xlu0 %v3184, 32
        %v3191 = vpop.permute.xlu0 %3190
        %v3193 = vmul.f32 %v3183, %v3191
        %3195 = vrot.lane.b32.xlu0 %v3193, 32
        %v3196 = vpop.permute.xlu0 %3195
        %v3198 = vadd.f32 %v3188, %v3196
        %v3199 = vtanh.pop %v3198
        %3201 = vrot.lane.b32.xlu0 %v3199, 32
        %v3202 = vpop.permute.xlu0 %3201
        %v3204 = vmul.f32 %v3183, %v3202
        %3206 = vrot.lane.b32.xlu0 %v3204, 64
        %v3207 = vpop.permute.xlu0 %3206
        %3209 = vst.msk [vmem:[#allocation2] sm:$0x4] %vm2599, %v3207
        %v3210 = vpack.c.bf16 %v3204, %v3204
        %v3212 = vrot.slane %v3210, 1
        %3213 = vrot.lane.b32.xlu0 %v3212, 64
        %v3214 = vpop.permute.xlu0 %3213
        %v3216 = vsel %vm2398, %v3214, 0
        %3218 = vmatpush.bf16.msra.mxu0 0
        %3219 = vmatpush.bf16.msra.mxu0 0
        %3220 = vmatpush.bf16.msra.mxu0 0
        %3221 = vmatpush.bf16.msra.mxu0 0
        %3222 = vmatpush.bf16.msra.mxu0 0
        %3223 = vmatpush.bf16.msra.mxu0 0
        %3224 = vmatpush.bf16.msra.mxu0 %v3011
        %3225 = vmatpush.bf16.msra.mxu0 %v3010
        %3226 = vmatmul.bf16.gmra.mxu0 %v3216
        %v3227 = vpop.f32.mrf.mxu0
        %v3228 = vadd.f32 0.0, %v3227
        %v3229 = vpop.f32.mrf.mxu0
        %3230 = vdwg.mxu0
        %v3232 = vrot.slane %v3228, 5
        %v3234 = vadd.f32 %v2999, %v3232
        %v3235 = vxor.u32 %v3234, 2147483648
        %v3236 = vmul.f32 %v3235, 1.442695
        %v3237 = vpow.pop %v3236
        %v3238 = vadd.f32 %v3237, 1.0
        %v3239 = vrcp.pop %v3238
        %v3240 = vmul.f32 %v3238, %v3239
        %v3241 = vsub.f32 1.0, %v3240
        %v3242 = vmul.f32 %v3239, %v3241
        %v3243 = vadd.f32 %v3239, %v3242
        %vm3244 = vweird.f32 %v3238
        %vm3245 = vweird.f32 %v3239
        %vm3246 = vmor %vm3244, %vm3245
        %v3247 = vsel %vm3246, %v3239, %v3243
        %v3248 = vand.u32 2147483647, %v3238
        %vm3249 = vcmp.eq.f32.partialorder %v3248, 8.507059e+37
        %v3250 = vand.u32 %v3238, 2147483648
        %v3251 = vor.u32 1.1754944e-38, %v3250
        %v3252 = vsel %vm3249, %v3251, %v3247
        %v3253 = vmul.f32 1.0, %v3252
        %v3254 = vtanh.pop %v3234
        %v3256 = vrot.slane %v3198, 7
        %v3258 = vmul.f32 %v3253, %v3256
        %3260 = vrot.lane.b32.xlu0 %v3254, 32
        %v3261 = vpop.permute.xlu0 %3260
        %v3263 = vmul.f32 %v3253, %v3261
        %3265 = vrot.lane.b32.xlu0 %v3263, 32
        %v3266 = vpop.permute.xlu0 %3265
        %v3268 = vadd.f32 %v3258, %v3266
        %v3269 = vtanh.pop %v3268
        %3271 = vrot.lane.b32.xlu0 %v3269, 32
        %v3272 = vpop.permute.xlu0 %3271
        %v3274 = vmul.f32 %v3253, %v3272
        %3276 = vrot.lane.b32.xlu0 %v3274, 64
        %v3277 = vpop.permute.xlu0 %3276
        %3279 = vst.msk [vmem:[#allocation2] sm:$0x8] %vm2670, %v3277
        %v3280 = vpack.c.bf16 %v3274, %v3274
        %v3282 = vshrl.u32 %v3280, 16
        %v3284 = vrot.slane %v3282, 1
        %3285 = vrot.lane.b32.xlu0 %v3284, 64
        %v3286 = vpop.permute.xlu0 %3285
        %v3288 = vsel %vm2398, %v3286, 0
        %3290 = vmatpush.bf16.msra.mxu0 0
        %3291 = vmatpush.bf16.msra.mxu0 0
        %3292 = vmatpush.bf16.msra.mxu0 0
        %3293 = vmatpush.bf16.msra.mxu0 0
        %3294 = vmatpush.bf16.msra.mxu0 0
        %3295 = vmatpush.bf16.msra.mxu0 0
        %3296 = vmatpush.bf16.msra.mxu0 %v3011
        %3297 = vmatpush.bf16.msra.mxu0 %v3010
        %3298 = vmatmul.bf16.gmra.mxu0 %v3288
        %v3299 = vpop.f32.mrf.mxu0
        %v3300 = vadd.f32 0.0, %v3299
        %v3301 = vpop.f32.mrf.mxu0
        %3302 = vdwg.mxu0
        %v3304 = vrot.slane %v3300, 4
        %v3306 = vadd.f32 %v2999, %v3304
        %v3307 = vxor.u32 %v3306, 2147483648
        %v3308 = vmul.f32 %v3307, 1.442695
        %v3309 = vpow.pop %v3308
        %v3310 = vadd.f32 %v3309, 1.0
        %v3311 = vrcp.pop %v3310
        %v3312 = vmul.f32 %v3310, %v3311
        %v3313 = vsub.f32 1.0, %v3312
        %v3314 = vmul.f32 %v3311, %v3313
        %v3315 = vadd.f32 %v3311, %v3314
        %vm3316 = vweird.f32 %v3310
        %vm3317 = vweird.f32 %v3311
        %vm3318 = vmor %vm3316, %vm3317
        %v3319 = vsel %vm3318, %v3311, %v3315
        %v3320 = vand.u32 2147483647, %v3310
        %vm3321 = vcmp.eq.f32.partialorder %v3320, 8.507059e+37
        %v3322 = vand.u32 %v3310, 2147483648
        %v3323 = vor.u32 1.1754944e-38, %v3322
        %v3324 = vsel %vm3321, %v3323, %v3319
        %v3325 = vmul.f32 1.0, %v3324
        %v3326 = vtanh.pop %v3306
        %v3328 = vrot.slane %v3268, 7
        %v3330 = vmul.f32 %v3325, %v3328
        %3332 = vrot.lane.b32.xlu0 %v3326, 32
        %v3333 = vpop.permute.xlu0 %3332
        %v3335 = vmul.f32 %v3325, %v3333
        %3337 = vrot.lane.b32.xlu0 %v3335, 32
        %v3338 = vpop.permute.xlu0 %3337
        %v3340 = vadd.f32 %v3330, %v3338
        %v3341 = vtanh.pop %v3340
        %3343 = vrot.lane.b32.xlu0 %v3341, 32
        %v3344 = vpop.permute.xlu0 %3343
        %v3346 = vmul.f32 %v3325, %v3344
        %3348 = vrot.lane.b32.xlu0 %v3346, 64
        %v3349 = vpop.permute.xlu0 %3348
        %3351 = vst.msk [vmem:[#allocation2] sm:$0x10] %vm2743, %v3349
        %v3352 = vpack.c.bf16 %v3346, %v3346
        %v3354 = vrot.slane %v3352, 2
        %3355 = vrot.lane.b32.xlu0 %v3354, 64
        %v3356 = vpop.permute.xlu0 %3355
        %v3358 = vsel %vm2398, %v3356, 0
        %3360 = vmatpush.bf16.msra.mxu0 0
        %3361 = vmatpush.bf16.msra.mxu0 0
        %3362 = vmatpush.bf16.msra.mxu0 0
        %3363 = vmatpush.bf16.msra.mxu0 0
        %3364 = vmatpush.bf16.msra.mxu0 0
        %3365 = vmatpush.bf16.msra.mxu0 0
        %3366 = vmatpush.bf16.msra.mxu0 %v3011
        %3367 = vmatpush.bf16.msra.mxu0 %v3010
        %3368 = vmatmul.bf16.gmra.mxu0 %v3358
        %v3369 = vpop.f32.mrf.mxu0
        %v3370 = vadd.f32 0.0, %v3369
        %v3371 = vpop.f32.mrf.mxu0
        %3372 = vdwg.mxu0
        %v3374 = vrot.slane %v3370, 3
        %v3376 = vadd.f32 %v2999, %v3374
        %v3377 = vxor.u32 %v3376, 2147483648
        %v3378 = vmul.f32 %v3377, 1.442695
        %v3379 = vpow.pop %v3378
        %v3380 = vadd.f32 %v3379, 1.0
        %v3381 = vrcp.pop %v3380
        %v3382 = vmul.f32 %v3380, %v3381
        %v3383 = vsub.f32 1.0, %v3382
        %v3384 = vmul.f32 %v3381, %v3383
        %v3385 = vadd.f32 %v3381, %v3384
        %vm3386 = vweird.f32 %v3380
        %vm3387 = vweird.f32 %v3381
        %vm3388 = vmor %vm3386, %vm3387
        %v3389 = vsel %vm3388, %v3381, %v3385
        %v3390 = vand.u32 2147483647, %v3380
        %vm3391 = vcmp.eq.f32.partialorder %v3390, 8.507059e+37
        %v3392 = vand.u32 %v3380, 2147483648
        %v3393 = vor.u32 1.1754944e-38, %v3392
        %v3394 = vsel %vm3391, %v3393, %v3389
        %v3395 = vmul.f32 1.0, %v3394
        %v3396 = vtanh.pop %v3376
        %v3398 = vrot.slane %v3340, 7
        %v3400 = vmul.f32 %v3395, %v3398
        %3402 = vrot.lane.b32.xlu0 %v3396, 32
        %v3403 = vpop.permute.xlu0 %3402
        %v3405 = vmul.f32 %v3395, %v3403
        %3407 = vrot.lane.b32.xlu0 %v3405, 32
        %v3408 = vpop.permute.xlu0 %3407
        %v3410 = vadd.f32 %v3400, %v3408
        %v3411 = vtanh.pop %v3410
        %3413 = vrot.lane.b32.xlu0 %v3411, 32
        %v3414 = vpop.permute.xlu0 %3413
        %v3416 = vmul.f32 %v3395, %v3414
        %3418 = vrot.lane.b32.xlu0 %v3416, 64
        %v3419 = vpop.permute.xlu0 %3418
        %3421 = vst.msk [vmem:[#allocation2] sm:$0x20] %vm2814, %v3419
        %v3422 = vpack.c.bf16 %v3416, %v3416
        %v3424 = vshrl.u32 %v3422, 16
        %v3426 = vrot.slane %v3424, 2
        %3427 = vrot.lane.b32.xlu0 %v3426, 64
        %v3428 = vpop.permute.xlu0 %3427
        %v3430 = vsel %vm2398, %v3428, 0
        %3432 = vmatpush.bf16.msra.mxu0 0
        %3433 = vmatpush.bf16.msra.mxu0 0
        %3434 = vmatpush.bf16.msra.mxu0 0
        %3435 = vmatpush.bf16.msra.mxu0 0
        %3436 = vmatpush.bf16.msra.mxu0 0
        %3437 = vmatpush.bf16.msra.mxu0 0
        %3438 = vmatpush.bf16.msra.mxu0 %v3011
        %3439 = vmatpush.bf16.msra.mxu0 %v3010
        %3440 = vmatmul.bf16.gmra.mxu0 %v3430
        %v3441 = vpop.f32.mrf.mxu0
        %v3442 = vadd.f32 0.0, %v3441
        %v3443 = vpop.f32.mrf.mxu0
        %3444 = vdwg.mxu0
        %v3446 = vrot.slane %v3442, 2
        %v3448 = vadd.f32 %v2999, %v3446
        %v3449 = vxor.u32 %v3448, 2147483648
        %v3450 = vmul.f32 %v3449, 1.442695
        %v3451 = vpow.pop %v3450
        %v3452 = vadd.f32 %v3451, 1.0
        %v3453 = vrcp.pop %v3452
        %v3454 = vmul.f32 %v3452, %v3453
        %v3455 = vsub.f32 1.0, %v3454
        %v3456 = vmul.f32 %v3453, %v3455
        %v3457 = vadd.f32 %v3453, %v3456
        %vm3458 = vweird.f32 %v3452
        %vm3459 = vweird.f32 %v3453
        %vm3460 = vmor %vm3458, %vm3459
        %v3461 = vsel %vm3460, %v3453, %v3457
        %v3462 = vand.u32 2147483647, %v3452
        %vm3463 = vcmp.eq.f32.partialorder %v3462, 8.507059e+37
        %v3464 = vand.u32 %v3452, 2147483648
        %v3465 = vor.u32 1.1754944e-38, %v3464
        %v3466 = vsel %vm3463, %v3465, %v3461
        %v3467 = vmul.f32 1.0, %v3466
        %v3468 = vtanh.pop %v3448
        %v3470 = vrot.slane %v3410, 7
        %v3472 = vmul.f32 %v3467, %v3470
        %3474 = vrot.lane.b32.xlu0 %v3468, 32
        %v3475 = vpop.permute.xlu0 %3474
        %v3477 = vmul.f32 %v3467, %v3475
        %3479 = vrot.lane.b32.xlu0 %v3477, 32
        %v3480 = vpop.permute.xlu0 %3479
        %v3482 = vadd.f32 %v3472, %v3480
        %v3483 = vtanh.pop %v3482
        %3485 = vrot.lane.b32.xlu0 %v3483, 32
        %v3486 = vpop.permute.xlu0 %3485
        %v3488 = vmul.f32 %v3467, %v3486
        %3490 = vrot.lane.b32.xlu0 %v3488, 64
        %v3491 = vpop.permute.xlu0 %3490
        %3493 = vst.msk [vmem:[#allocation2] sm:$0x40] %vm2887, %v3491
        %v3494 = vpack.c.bf16 %v3488, %v3488
        %v3496 = vrot.slane %v3494, 3
        %3497 = vrot.lane.b32.xlu0 %v3496, 64
        %v3498 = vpop.permute.xlu0 %3497
        %v3500 = vsel %vm2398, %v3498, 0
        %3502 = vmatpush.bf16.msra.mxu0 0
        %3503 = vmatpush.bf16.msra.mxu0 0
        %3504 = vmatpush.bf16.msra.mxu0 0
        %3505 = vmatpush.bf16.msra.mxu0 0
        %3506 = vmatpush.bf16.msra.mxu0 0
        %3507 = vmatpush.bf16.msra.mxu0 0
        %3508 = vmatpush.bf16.msra.mxu0 %v3011
        %3509 = vmatpush.bf16.msra.mxu0 %v3010
        %3510 = vmatmul.bf16.gmra.mxu0 %v3500
        %v3511 = vpop.f32.mrf.mxu0
        %v3512 = vadd.f32 0.0, %v3511
        %v3513 = vpop.f32.mrf.mxu0
        %3514 = vdwg.mxu0
        %v3516 = vrot.slane %v3512, 1
        %v3518 = vadd.f32 %v2999, %v3516
        %v3519 = vxor.u32 %v3518, 2147483648
        %v3520 = vmul.f32 %v3519, 1.442695
        %v3521 = vpow.pop %v3520
        %v3522 = vadd.f32 %v3521, 1.0
        %v3523 = vrcp.pop %v3522
        %v3524 = vmul.f32 %v3522, %v3523
        %v3525 = vsub.f32 1.0, %v3524
        %v3526 = vmul.f32 %v3523, %v3525
        %v3527 = vadd.f32 %v3523, %v3526
        %vm3528 = vweird.f32 %v3522
        %vm3529 = vweird.f32 %v3523
        %vm3530 = vmor %vm3528, %vm3529
        %v3531 = vsel %vm3530, %v3523, %v3527
        %v3532 = vand.u32 2147483647, %v3522
        %vm3533 = vcmp.eq.f32.partialorder %v3532, 8.507059e+37
        %v3534 = vand.u32 %v3522, 2147483648
        %v3535 = vor.u32 1.1754944e-38, %v3534
        %v3536 = vsel %vm3533, %v3535, %v3531
        %v3537 = vmul.f32 1.0, %v3536
        %v3538 = vtanh.pop %v3518
        %v3540 = vrot.slane %v3482, 7
        %v3542 = vmul.f32 %v3537, %v3540
        %3544 = vrot.lane.b32.xlu0 %v3538, 32
        %v3545 = vpop.permute.xlu0 %3544
        %v3547 = vmul.f32 %v3537, %v3545
        %3549 = vrot.lane.b32.xlu0 %v3547, 32
        %v3550 = vpop.permute.xlu0 %3549
        %v3552 = vadd.f32 %v3542, %v3550
        %v3553 = vtanh.pop %v3552
        %3555 = vrot.lane.b32.xlu0 %v3553, 32
        %v3556 = vpop.permute.xlu0 %3555
        %v3558 = vmul.f32 %v3537, %v3556
        %3560 = vrot.lane.b32.xlu0 %v3558, 64
        %v3561 = vpop.permute.xlu0 %3560
        %3563 = vst.msk [vmem:[#allocation2] sm:$0x80] %vm2958, %v3561
        %v3564 = vld [vmem:[#allocation2] sm:$0xff]
        %v3565 = vld [vmem:[%s63] sm:$0xf]
        %v3566 = vld [vmem:[%s63 + $0x4] sm:$0xf]
        %v3567 = vld [vmem:[%s63 + $0x8] sm:$0xf]
        %v3568 = vld [vmem:[%s63 + $0xc] sm:$0xf]
        %v3569 = vld [vmem:[#allocation29] sm:$0x1]
        %v3570 = vpack.c.bf16 %v3564, %v3564
        %v3572 = vperm.slane %v3569, 0
        %v3578 = vunpack.c.l.b16 %v3565
        %v3579 = vunpack.c.l.b16 %v3566
        %v3580 = vunpack.c.l.b16 %v3567
        %v3581 = vunpack.c.l.b16 %v3568
        %v3582 = vpack.c.b16 %v3579, %v3578
        %v3583 = vpack.c.b16 %v3581, %v3580
        %v3587 = vsel %vm2398, %v3570, 0
        %3589 = vmatpush.bf16.msra.mxu0 0
        %3590 = vmatpush.bf16.msra.mxu0 0
        %3591 = vmatpush.bf16.msra.mxu0 0
        %3592 = vmatpush.bf16.msra.mxu0 0
        %3593 = vmatpush.bf16.msra.mxu0 0
        %3594 = vmatpush.bf16.msra.mxu0 0
        %3595 = vmatpush.bf16.msra.mxu0 %v3583
        %3596 = vmatpush.bf16.msra.mxu0 %v3582
        %3597 = vmatmul.bf16.gmra.mxu0 %v3587
        %v3598 = vpop.f32.mrf.mxu0
        %v3599 = vadd.f32 %v3572, %v3598
        %v3600 = vpop.f32.mrf.mxu0
        %3601 = vdwg.mxu0
        %3602 = vst.msk [vmem:[%s1275] sm:$0xff] %vm1361, %v3599
        %p3603 = scmp.lt.s32.totalorder %s88, 1
        %s3604 = scalar_select %p3603, %s88, 1
        %s3605 = smul.addr %s3604, 8
        %s3606 = scalar_lea.vmem %s67, %s3605
        // Predicated region
        $region225: #{transformer_lstm_forward.1} parent=151 // pred_check
          %p3607 = pneg %p804
        $region226: #{transformer_lstm_forward.1} parent=151 // pred_check_branch
          %3609 = sbr.rel (%p3607) target = $region228
        $region227: #{transformer_lstm_forward.1} parent=151 // pred_region
          _
        $region228: #{transformer_lstm_forward.1} parent=151 // pred_fallthru
          _
      $region152: #{transformer_lstm_forward.1} parent=5 // pred_fallthru
        _
      %p3610 = scmp.le.s32.totalorder 2, %s83
      // Predicated region
      $region229: #{transformer_lstm_forward.1} parent=5 // pred_check
        %p3611 = pneg %p3610
      $region230: #{transformer_lstm_forward.1} parent=5 // pred_check_branch
        %3613 = sbr.rel (%p3611) target = $region232
      $region231: #{transformer_lstm_forward.1} parent=5 // pred_region
        %s3614 = ssub.s32 %s83, 2
        // Predicated region
        $region233: #{transformer_lstm_forward.1} parent=231 // pred_check
          %p3615 = pneg %p810
        $region234: #{transformer_lstm_forward.1} parent=231 // pred_check_branch
          %3617 = sbr.rel (%p3615) target = $region236
        $region235: #{transformer_lstm_forward.1} parent=231 // pred_region
          %p3618 = scmp.lt.s32.totalorder %s89, 1
          %s3619 = scalar_select %p3618, %s89, 1
          %s3620 = smul.addr %s3619, 8
          %s3621 = scalar_lea.vmem %s67, %s3620
        $region236: #{transformer_lstm_forward.1} parent=231 // pred_fallthru
          _
      $region232: #{transformer_lstm_forward.1} parent=5 // pred_fallthru
        _
    $region6: #{transformer_lstm_forward.1} parent=1 // loop_footer
      %s87 = sadd.s32 1, %s83
    $region7: #{transformer_lstm_forward.1} parent=1 // loop_footer_branch
      %82 = sbr.rel target = $region3
    $region8: #{transformer_lstm_forward.1} parent=1 // loop_exit
      _
    %3622 = vsyncpa [#allocation4], 1
    %s3623 = scalar_lea.sflag [#allocation4], 1
    %3624 = vsyncpa %s3623, 1
    %3625 = vsyncpa [#allocation6], 1
    %3626 = vsyncpa [#allocation9], 1
    %3627 = vsyncpa [#allocation12], 1
    %3628 = vsyncpa [#allocation15], 1
    %3629 = vsyncpa [#allocation18], 1
    %3630 = vsyncpa [#allocation21], 1
    %3631 = vsyncpa [#allocation24], 1
    %3632 = vsyncpa [#allocation27], 1
    %3633 = vsyncpa [#allocation30], 1

</llo_original>
